<compile_context>
chip_gen: v7x
topology: tpu7x:2x2x1
jax: 0.10.0
libtpu: 0.0.40
codegen_flags: <defaults>
</compile_context>

<pallas_src>
import functools

import jax
import jax.numpy as jnp
from jax import lax
from jax.experimental import pallas as pl
from jax.experimental.pallas import tpu as pltpu


# ---------------------------------------------------------------------------
# Helpers
# ---------------------------------------------------------------------------

def _round_up(v, m):
    return ((v + m - 1) // m) * m


def _full_spec(shape):
    """Whole-array block (single grid step)."""
    return pl.BlockSpec(shape, lambda i: (0,) * len(shape))


# ---------------------------------------------------------------------------
# Fused Pallas kernel: GCN stack + post-MP edge MLP
# ---------------------------------------------------------------------------

def gnn_fused_kernel(a_ref, x_ref, wts_ref, bs_ref, gammas_ref, betas_ref,
                     gsrc_ref, gdst_ref, w1a_ref, w1b_ref, b1_ref, w2t_ref,
                     b2_ref, o_ref, *, num_layers, h_real):
    dp = wts_ref.shape[1]                 # padded feature/hidden width (lane-dense)
    a = a_ref[...]                        # [Np, Np]  bf16 normalized adjacency
    h = x_ref[...]                        # [Np, Dp]  f32 node features (padded)

    col = lax.broadcasted_iota(jnp.int32, (1, dp), 1)
    ln_mask = (col < h_real).astype(jnp.float32)      # real hidden columns
    inv_h = 1.0 / float(h_real)

    for i in range(num_layers):
        # GCNConv: A_hat @ (X @ W^T) + b   (bf16 MXU inputs, f32 accumulate)
        xw = jnp.dot(h, wts_ref[i], preferred_element_type=jnp.float32)
        h = jnp.dot(a, xw.astype(jnp.bfloat16),
                    preferred_element_type=jnp.float32) + bs_ref[i]
        h = jnp.maximum(h, 0.0)                       # F.relu
        # TODO(synk): F.dropout(p=0.25) is stochastic; identity here (eval mode).
        if i < num_layers - 1:                        # LayerNorm over the real H cols
            mean = jnp.sum(h, axis=-1, keepdims=True) * inv_h
            c = (h - mean) * ln_mask
            var = jnp.sum(c * c, axis=-1, keepdims=True) * inv_h
            h = c * lax.rsqrt(var + 1e-5) * gammas_ref[i] + betas_ref[i]

    # post_mp fused with the edge gather:  W1 split into halves, gather as one-hot
    # matmuls  =>  hidden = x[src] @ W1a^T + x[dst] @ W1b^T + b1   (no [E,2H] concat)
    a1 = jnp.dot(h, w1a_ref[...], preferred_element_type=jnp.float32)   # [Np, Dp]
    a2 = jnp.dot(h, w1b_ref[...], preferred_element_type=jnp.float32)   # [Np, Dp]
    eh = (jnp.dot(gsrc_ref[...], a1, preferred_element_type=jnp.float32)
          + jnp.dot(gdst_ref[...], a2, preferred_element_type=jnp.float32)
          + b1_ref[...])
    eh = jnp.maximum(eh, 0.0)
    # TODO(synk): nn.Dropout(0.25) inside post_mp is identity (eval mode).
    logits = jnp.dot(eh, w2t_ref[...], preferred_element_type=jnp.float32) + b2_ref[...]

    # Numerically stable sigmoid; lane-dense [E_pad, 128] store (col 0 is the logit).
    z = jnp.exp(-jnp.abs(logits))
    o_ref[...] = jnp.where(logits >= 0.0, 1.0 / (1.0 + z), z / (1.0 + z))


def fused_forward(a_hat, x_pad, packed, g_src, g_dst, *, num_layers, hidden_dim):
    e_pad = g_src.shape[0]
    out_pad = packed["w2t"].shape[1]
    kernel = functools.partial(gnn_fused_kernel,
                               num_layers=num_layers, h_real=hidden_dim)
    operands = (a_hat, x_pad, packed["wts"], packed["bs"], packed["gammas"],
                packed["betas"], g_src, g_dst, packed["w1a"], packed["w1b"],
                packed["b1"], packed["w2t"], packed["b2"])
    return pl.pallas_call(
        kernel,
        out_shape=jax.ShapeDtypeStruct((e_pad, out_pad), jnp.float32),
        grid=(1,),
        in_specs=[_full_spec(op.shape) for op in operands],
        out_specs=_full_spec((e_pad, out_pad)),
        compiler_params=pltpu.CompilerParams(dimension_semantics=("arbitrary",)),
    )(*operands)


# ---------------------------------------------------------------------------
# Plain-JAX glue
# ---------------------------------------------------------------------------

def build_norm_adj(edge_index, num_nodes, n_pad):
    """Dense GCN-normalized adjacency A_hat = D^-1/2 (A+I) D^-1/2, bf16, zero-padded.

    Mirrors torch_geometric gcn_norm (add_remaining_self_loops with unit weights):
    every node gets exactly one unit self-loop; existing self-loop edges are not
    double counted.
    """
    src, dst = edge_index[0], edge_index[1]
    e = src.shape[0]
    w_edges = jnp.where(src != dst, 1.0, 0.0).astype(jnp.float32)
    loop = jnp.arange(num_nodes, dtype=src.dtype)
    all_src = jnp.concatenate([src, loop])
    all_dst = jnp.concatenate([dst, loop])
    all_w = jnp.concatenate([w_edges, jnp.ones((num_nodes,), jnp.float32)])
    deg = jnp.zeros((num_nodes,), jnp.float32).at[all_dst].add(all_w)
    dinv = jnp.where(deg > 0, 1.0 / jnp.sqrt(deg), 0.0)
    norm = dinv[all_src] * all_w * dinv[all_dst]
    a = jnp.zeros((n_pad, n_pad), jnp.float32).at[all_dst, all_src].add(norm)
    return a.astype(jnp.bfloat16)


def init_params(key, input_dim, hidden_dim, num_layers=3):
    """Raw (PyTorch-layout) parameters: conv W [out,in], linear W [out,in]."""
    params = {}
    keys = jax.random.split(key, 2 * num_layers + 4)
    dims = [input_dim] + [hidden_dim] * num_layers
    convs = []
    for i in range(num_layers):
        w = 0.1 * jax.random.normal(keys[2 * i], (dims[i + 1], dims[i]), jnp.float32)
        b = 0.01 * jax.random.normal(keys[2 * i + 1], (dims[i + 1],), jnp.float32)
        convs.append((w, b))
    params["convs"] = convs
    params["lns"] = [
        (jnp.ones((hidden_dim,), jnp.float32), jnp.zeros((hidden_dim,), jnp.float32))
        for _ in range(num_layers - 1)
    ]
    k = 2 * num_layers
    params["mp_w1"] = 0.1 * jax.random.normal(keys[k], (hidden_dim, 2 * hidden_dim), jnp.float32)
    params["mp_b1"] = 0.01 * jax.random.normal(keys[k + 1], (hidden_dim,), jnp.float32)
    params["mp_w2"] = 0.1 * jax.random.normal(keys[k + 2], (1, hidden_dim), jnp.float32)
    params["mp_b2"] = 0.01 * jax.random.normal(keys[k + 3], (1,), jnp.float32)
    return params


def pack_params(params, input_dim, hidden_dim, num_layers):
    """One-time transpose + zero-pad to lane-dense (128-multiple) shapes + stack."""
    dp = _round_up(max(input_dim, hidden_dim), 128)   # padded feature/hidden width
    out_pad = 128                                     # lane-dense final projection

    wts, bs, gammas, betas = [], [], [], []
    for i in range(num_layers):
        w, b = params["convs"][i]                     # [out, in], [out]
        wt = jnp.zeros((dp, dp), jnp.float32).at[:w.shape[1], :w.shape[0]].set(w.T)
        wts.append(wt)
        bs.append(jnp.zeros((1, dp), jnp.float32).at[0, :b.shape[0]].set(b))
        if i < num_layers - 1:
            g, bt = params["lns"][i]
        else:                                         # last layer has no LN (unused)
            g = jnp.ones((hidden_dim,), jnp.float32)
            bt = jnp.zeros((hidden_dim,), jnp.float32)
        gammas.append(jnp.zeros((1, dp), jnp.float32).at[0, :hidden_dim].set(g))
        betas.append(jnp.zeros((1, dp), jnp.float32).at[0, :hidden_dim].set(bt))

    h = hidden_dim
    w1, b1 = params["mp_w1"], params["mp_b1"]         # [H, 2H], [H]
    w2, b2 = params["mp_w2"], params["mp_b2"]         # [1, H], [1]
    w1a = jnp.zeros((dp, dp), jnp.float32).at[:h, :h].set(w1[:, :h].T)
    w1b = jnp.zeros((dp, dp), jnp.float32).at[:h, :h].set(w1[:, h:].T)
    b1p = jnp.zeros((1, dp), jnp.float32).at[0, :h].set(b1)
    w2t = jnp.zeros((dp, out_pad), jnp.float32).at[:h, :1].set(w2.T)
    b2p = jnp.zeros((1, out_pad), jnp.float32).at[0, :1].set(b2)

    return {"wts": jnp.stack(wts), "bs": jnp.stack(bs),
            "gammas": jnp.stack(gammas), "betas": jnp.stack(betas),
            "w1a": w1a, "w1b": w1b, "b1": b1p, "w2t": w2t, "b2": b2p}


def gnn_stack_forward(packed, x, edge_index, *, num_layers, hidden_dim):
    n, f = x.shape
    e = edge_index.shape[1]
    dp = packed["wts"].shape[1]
    n_pad = _round_up(max(n, 8), 128)
    e_pad = _round_up(max(e, 8), 128)

    a_hat = build_norm_adj(edge_index, n, n_pad)                     # bf16 [Np, Np]
    x_pad = jnp.zeros((n_pad, dp), jnp.float32).at[:n, :f].set(x)    # f32  [Np, Dp]

    # One-hot gather matrices for the edge endpoints (gather-as-matmul in kernel).
    src, dst = edge_index[0], edge_index[1]
    rows = jnp.arange(e)
    g_src = jnp.zeros((e_pad, n_pad), jnp.float32).at[rows, src].set(1.0)
    g_dst = jnp.zeros((e_pad, n_pad), jnp.float32).at[rows, dst].set(1.0)

    out = fused_forward(a_hat, x_pad, packed, g_src, g_dst,
                        num_layers=num_layers, hidden_dim=hidden_dim)
    return out[:e, :1]                                               # [E, 1] probs


# ---------------------------------------------------------------------------
# Main
# ---------------------------------------------------------------------------

if __name__ == "__main__":
    key = jax.random.PRNGKey(0)
    k_feat, k_edge, k_param = jax.random.split(key, 3)

    num_nodes = 32
    input_dim = 16
    hidden_dim = 32
    num_edges = 64
    num_layers = 3

    x = jax.random.normal(k_feat, (num_nodes, input_dim), jnp.float32)
    edge_index = jax.random.randint(k_edge, (2, num_edges), 0, num_nodes, dtype=jnp.int32)

    raw_params = init_params(k_param, input_dim, hidden_dim, num_layers=num_layers)
    packed = pack_params(raw_params, input_dim, hidden_dim, num_layers=num_layers)

    edge_probs = gnn_stack_forward(packed, x, edge_index,
                                   num_layers=num_layers, hidden_dim=hidden_dim)
    edge_probs = jax.block_until_ready(edge_probs)

    assert edge_probs.shape == (num_edges, 1)
    assert bool(jnp.all(jnp.isfinite(edge_probs)))
    assert bool(jnp.all((edge_probs >= 0.0) & (edge_probs <= 1.0)))
    print("KERNEL_OK")
</pallas_src>

<mosaic_0001>
module attributes {stable_mosaic.version = 11 : i64} {
  func.func @gnn_fused_kernel(%arg0: i32, %arg1: memref<128x128xbf16, #tpu.memory_space<vmem>>, %arg2: memref<128x128xf32, #tpu.memory_space<vmem>>, %arg3: memref<3x128x128xf32, #tpu.memory_space<vmem>>, %arg4: memref<3x1x128xf32, #tpu.memory_space<vmem>>, %arg5: memref<3x1x128xf32, #tpu.memory_space<vmem>>, %arg6: memref<3x1x128xf32, #tpu.memory_space<vmem>>, %arg7: memref<128x128xf32, #tpu.memory_space<vmem>>, %arg8: memref<128x128xf32, #tpu.memory_space<vmem>>, %arg9: memref<128x128xf32, #tpu.memory_space<vmem>>, %arg10: memref<128x128xf32, #tpu.memory_space<vmem>>, %arg11: memref<1x128xf32, #tpu.memory_space<vmem>>, %arg12: memref<128x128xf32, #tpu.memory_space<vmem>>, %arg13: memref<1x128xf32, #tpu.memory_space<vmem>>, %arg14: memref<128x128xf32, #tpu.memory_space<vmem>>) attributes {dimension_semantics = [#tpu.dimension_semantics<arbitrary>], iteration_bounds = array<i64: 1>, scalar_prefetch = 0 : i64, scratch_operands = 0 : i64, tpu.core_type = #tpu.core_type<tc>, window_params = [{pipeline_mode = #tpu.pipeline_mode<synchronous>, transform_indices = @transform_0, window_bounds = array<i64: 128, 128>}, {pipeline_mode = #tpu.pipeline_mode<synchronous>, transform_indices = @transform_1, window_bounds = array<i64: 128, 128>}, {pipeline_mode = #tpu.pipeline_mode<synchronous>, transform_indices = @transform_2, window_bounds = array<i64: 3, 128, 128>}, {pipeline_mode = #tpu.pipeline_mode<synchronous>, transform_indices = @transform_3, window_bounds = array<i64: 3, 1, 128>}, {pipeline_mode = #tpu.pipeline_mode<synchronous>, transform_indices = @transform_4, window_bounds = array<i64: 3, 1, 128>}, {pipeline_mode = #tpu.pipeline_mode<synchronous>, transform_indices = @transform_5, window_bounds = array<i64: 3, 1, 128>}, {pipeline_mode = #tpu.pipeline_mode<synchronous>, transform_indices = @transform_6, window_bounds = array<i64: 128, 128>}, {pipeline_mode = #tpu.pipeline_mode<synchronous>, transform_indices = @transform_7, window_bounds = array<i64: 128, 128>}, {pipeline_mode = #tpu.pipeline_mode<synchronous>, transform_indices = @transform_8, window_bounds = array<i64: 128, 128>}, {pipeline_mode = #tpu.pipeline_mode<synchronous>, transform_indices = @transform_9, window_bounds = array<i64: 128, 128>}, {pipeline_mode = #tpu.pipeline_mode<synchronous>, transform_indices = @transform_10, window_bounds = array<i64: 1, 128>}, {pipeline_mode = #tpu.pipeline_mode<synchronous>, transform_indices = @transform_11, window_bounds = array<i64: 128, 128>}, {pipeline_mode = #tpu.pipeline_mode<synchronous>, transform_indices = @transform_12, window_bounds = array<i64: 1, 128>}, {pipeline_mode = #tpu.pipeline_mode<synchronous>, transform_indices = @transform_13, window_bounds = array<i64: 128, 128>}]} {
    %c0 = arith.constant 0 : index
    %c0_0 = arith.constant 0 : index
    %0 = vector.load %arg1[%c0, %c0_0] : memref<128x128xbf16, #tpu.memory_space<vmem>>, vector<128x128xbf16>
    %c0_1 = arith.constant 0 : index
    %c0_2 = arith.constant 0 : index
    %1 = vector.load %arg2[%c0_1, %c0_2] : memref<128x128xf32, #tpu.memory_space<vmem>>, vector<128x128xf32>
    %2 = tpu.iota {dimensions = array<i32: 1>} : vector<1x128xi32>
    %c32_i32 = arith.constant 32 : i32
    %3 = vector.broadcast %c32_i32 : i32 to vector<1x128xi32>
    %4 = arith.cmpi slt, %2, %3 : vector<1x128xi32>
    %5 = arith.extui %4 : vector<1x128xi1> to vector<1x128xi32>
    %6 = arith.sitofp %5 : vector<1x128xi32> to vector<1x128xf32>
    %c0_3 = arith.constant 0 : index
    %c0_4 = arith.constant 0 : index
    %c0_5 = arith.constant 0 : index
    %7 = vector.load %arg3[%c0_3, %c0_4, %c0_5] : memref<3x128x128xf32, #tpu.memory_space<vmem>>, vector<1x128x128xf32>
    %8 = vector.shape_cast %7 : vector<1x128x128xf32> to vector<128x128xf32>
    %cst = arith.constant dense<0.000000e+00> : vector<128x128xf32>
    %9 = tpu.matmul %1, %8, %cst {dimension_numbers = #tpu.dot_dimension_numbers<[1], [0], [0], [1], [0, 0, 1, 1], [], []>} : vector<128x128xf32>, vector<128x128xf32>, vector<128x128xf32> -> vector<128x128xf32>
    %10 = arith.truncf %9 : vector<128x128xf32> to vector<128x128xbf16>
    %cst_6 = arith.constant dense<0.000000e+00> : vector<128x128xf32>
    %11 = tpu.matmul %0, %10, %cst_6 {dimension_numbers = #tpu.dot_dimension_numbers<[1], [0], [0], [1], [0, 0, 1, 1], [], []>} : vector<128x128xbf16>, vector<128x128xbf16>, vector<128x128xf32> -> vector<128x128xf32>
    %c0_7 = arith.constant 0 : index
    %c0_8 = arith.constant 0 : index
    %c0_9 = arith.constant 0 : index
    %12 = vector.load %arg4[%c0_7, %c0_8, %c0_9] : memref<3x1x128xf32, #tpu.memory_space<vmem>>, vector<1x1x128xf32>
    %13 = vector.shape_cast %12 : vector<1x1x128xf32> to vector<1x128xf32>
    %14 = vector.broadcast %13 : vector<1x128xf32> to vector<128x128xf32>
    %15 = arith.addf %11, %14 : vector<128x128xf32>
    %cst_10 = arith.constant 0.000000e+00 : f32
    %16 = vector.broadcast %cst_10 : f32 to vector<128x128xf32>
    %17 = arith.maximumf %15, %16 : vector<128x128xf32>
    %cst_11 = arith.constant dense<0.000000e+00> : vector<128xf32>
    %18 = vector.multi_reduction <add>, %17, %cst_11 [1] : vector<128x128xf32> to vector<128xf32>
    %19 = vector.shape_cast %18 : vector<128xf32> to vector<128x1xf32>
    %cst_12 = arith.constant 3.125000e-02 : f32
    %20 = vector.broadcast %cst_12 : f32 to vector<128x1xf32>
    %21 = arith.mulf %19, %20 : vector<128x1xf32>
    %22 = vector.broadcast %21 : vector<128x1xf32> to vector<128x128xf32>
    %23 = arith.subf %17, %22 : vector<128x128xf32>
    %24 = vector.broadcast %6 : vector<1x128xf32> to vector<128x128xf32>
    %25 = arith.mulf %23, %24 : vector<128x128xf32>
    %26 = arith.mulf %25, %25 : vector<128x128xf32>
    %cst_13 = arith.constant dense<0.000000e+00> : vector<128xf32>
    %27 = vector.multi_reduction <add>, %26, %cst_13 [1] : vector<128x128xf32> to vector<128xf32>
    %28 = vector.shape_cast %27 : vector<128xf32> to vector<128x1xf32>
    %cst_14 = arith.constant 3.125000e-02 : f32
    %29 = vector.broadcast %cst_14 : f32 to vector<128x1xf32>
    %30 = arith.mulf %28, %29 : vector<128x1xf32>
    %cst_15 = arith.constant 9.99999974E-6 : f32
    %31 = vector.broadcast %cst_15 : f32 to vector<128x1xf32>
    %32 = arith.addf %30, %31 : vector<128x1xf32>
    %33 = math.rsqrt %32 : vector<128x1xf32>
    %34 = vector.broadcast %33 : vector<128x1xf32> to vector<128x128xf32>
    %35 = arith.mulf %25, %34 : vector<128x128xf32>
    %c0_16 = arith.constant 0 : index
    %c0_17 = arith.constant 0 : index
    %c0_18 = arith.constant 0 : index
    %36 = vector.load %arg5[%c0_16, %c0_17, %c0_18] : memref<3x1x128xf32, #tpu.memory_space<vmem>>, vector<1x1x128xf32>
    %37 = vector.shape_cast %36 : vector<1x1x128xf32> to vector<1x128xf32>
    %38 = vector.broadcast %37 : vector<1x128xf32> to vector<128x128xf32>
    %39 = arith.mulf %35, %38 : vector<128x128xf32>
    %c0_19 = arith.constant 0 : index
    %c0_20 = arith.constant 0 : index
    %c0_21 = arith.constant 0 : index
    %40 = vector.load %arg6[%c0_19, %c0_20, %c0_21] : memref<3x1x128xf32, #tpu.memory_space<vmem>>, vector<1x1x128xf32>
    %41 = vector.shape_cast %40 : vector<1x1x128xf32> to vector<1x128xf32>
    %42 = vector.broadcast %41 : vector<1x128xf32> to vector<128x128xf32>
    %43 = arith.addf %39, %42 : vector<128x128xf32>
    %c1 = arith.constant 1 : index
    %c0_22 = arith.constant 0 : index
    %c0_23 = arith.constant 0 : index
    %44 = vector.load %arg3[%c1, %c0_22, %c0_23] : memref<3x128x128xf32, #tpu.memory_space<vmem>>, vector<1x128x128xf32>
    %45 = vector.shape_cast %44 : vector<1x128x128xf32> to vector<128x128xf32>
    %cst_24 = arith.constant dense<0.000000e+00> : vector<128x128xf32>
    %46 = tpu.matmul %43, %45, %cst_24 {dimension_numbers = #tpu.dot_dimension_numbers<[1], [0], [0], [1], [0, 0, 1, 1], [], []>} : vector<128x128xf32>, vector<128x128xf32>, vector<128x128xf32> -> vector<128x128xf32>
    %47 = arith.truncf %46 : vector<128x128xf32> to vector<128x128xbf16>
    %cst_25 = arith.constant dense<0.000000e+00> : vector<128x128xf32>
    %48 = tpu.matmul %0, %47, %cst_25 {dimension_numbers = #tpu.dot_dimension_numbers<[1], [0], [0], [1], [0, 0, 1, 1], [], []>} : vector<128x128xbf16>, vector<128x128xbf16>, vector<128x128xf32> -> vector<128x128xf32>
    %c1_26 = arith.constant 1 : index
    %c0_27 = arith.constant 0 : index
    %c0_28 = arith.constant 0 : index
    %49 = vector.load %arg4[%c1_26, %c0_27, %c0_28] : memref<3x1x128xf32, #tpu.memory_space<vmem>>, vector<1x1x128xf32>
    %50 = vector.shape_cast %49 : vector<1x1x128xf32> to vector<1x128xf32>
    %51 = vector.broadcast %50 : vector<1x128xf32> to vector<128x128xf32>
    %52 = arith.addf %48, %51 : vector<128x128xf32>
    %cst_29 = arith.constant 0.000000e+00 : f32
    %53 = vector.broadcast %cst_29 : f32 to vector<128x128xf32>
    %54 = arith.maximumf %52, %53 : vector<128x128xf32>
    %cst_30 = arith.constant dense<0.000000e+00> : vector<128xf32>
    %55 = vector.multi_reduction <add>, %54, %cst_30 [1] : vector<128x128xf32> to vector<128xf32>
    %56 = vector.shape_cast %55 : vector<128xf32> to vector<128x1xf32>
    %cst_31 = arith.constant 3.125000e-02 : f32
    %57 = vector.broadcast %cst_31 : f32 to vector<128x1xf32>
    %58 = arith.mulf %56, %57 : vector<128x1xf32>
    %59 = vector.broadcast %58 : vector<128x1xf32> to vector<128x128xf32>
    %60 = arith.subf %54, %59 : vector<128x128xf32>
    %61 = vector.broadcast %6 : vector<1x128xf32> to vector<128x128xf32>
    %62 = arith.mulf %60, %61 : vector<128x128xf32>
    %63 = arith.mulf %62, %62 : vector<128x128xf32>
    %cst_32 = arith.constant dense<0.000000e+00> : vector<128xf32>
    %64 = vector.multi_reduction <add>, %63, %cst_32 [1] : vector<128x128xf32> to vector<128xf32>
    %65 = vector.shape_cast %64 : vector<128xf32> to vector<128x1xf32>
    %cst_33 = arith.constant 3.125000e-02 : f32
    %66 = vector.broadcast %cst_33 : f32 to vector<128x1xf32>
    %67 = arith.mulf %65, %66 : vector<128x1xf32>
    %cst_34 = arith.constant 9.99999974E-6 : f32
    %68 = vector.broadcast %cst_34 : f32 to vector<128x1xf32>
    %69 = arith.addf %67, %68 : vector<128x1xf32>
    %70 = math.rsqrt %69 : vector<128x1xf32>
    %71 = vector.broadcast %70 : vector<128x1xf32> to vector<128x128xf32>
    %72 = arith.mulf %62, %71 : vector<128x128xf32>
    %c1_35 = arith.constant 1 : index
    %c0_36 = arith.constant 0 : index
    %c0_37 = arith.constant 0 : index
    %73 = vector.load %arg5[%c1_35, %c0_36, %c0_37] : memref<3x1x128xf32, #tpu.memory_space<vmem>>, vector<1x1x128xf32>
    %74 = vector.shape_cast %73 : vector<1x1x128xf32> to vector<1x128xf32>
    %75 = vector.broadcast %74 : vector<1x128xf32> to vector<128x128xf32>
    %76 = arith.mulf %72, %75 : vector<128x128xf32>
    %c1_38 = arith.constant 1 : index
    %c0_39 = arith.constant 0 : index
    %c0_40 = arith.constant 0 : index
    %77 = vector.load %arg6[%c1_38, %c0_39, %c0_40] : memref<3x1x128xf32, #tpu.memory_space<vmem>>, vector<1x1x128xf32>
    %78 = vector.shape_cast %77 : vector<1x1x128xf32> to vector<1x128xf32>
    %79 = vector.broadcast %78 : vector<1x128xf32> to vector<128x128xf32>
    %80 = arith.addf %76, %79 : vector<128x128xf32>
    %c2 = arith.constant 2 : index
    %c0_41 = arith.constant 0 : index
    %c0_42 = arith.constant 0 : index
    %81 = vector.load %arg3[%c2, %c0_41, %c0_42] : memref<3x128x128xf32, #tpu.memory_space<vmem>>, vector<1x128x128xf32>
    %82 = vector.shape_cast %81 : vector<1x128x128xf32> to vector<128x128xf32>
    %cst_43 = arith.constant dense<0.000000e+00> : vector<128x128xf32>
    %83 = tpu.matmul %80, %82, %cst_43 {dimension_numbers = #tpu.dot_dimension_numbers<[1], [0], [0], [1], [0, 0, 1, 1], [], []>} : vector<128x128xf32>, vector<128x128xf32>, vector<128x128xf32> -> vector<128x128xf32>
    %84 = arith.truncf %83 : vector<128x128xf32> to vector<128x128xbf16>
    %cst_44 = arith.constant dense<0.000000e+00> : vector<128x128xf32>
    %85 = tpu.matmul %0, %84, %cst_44 {dimension_numbers = #tpu.dot_dimension_numbers<[1], [0], [0], [1], [0, 0, 1, 1], [], []>} : vector<128x128xbf16>, vector<128x128xbf16>, vector<128x128xf32> -> vector<128x128xf32>
    %c2_45 = arith.constant 2 : index
    %c0_46 = arith.constant 0 : index
    %c0_47 = arith.constant 0 : index
    %86 = vector.load %arg4[%c2_45, %c0_46, %c0_47] : memref<3x1x128xf32, #tpu.memory_space<vmem>>, vector<1x1x128xf32>
    %87 = vector.shape_cast %86 : vector<1x1x128xf32> to vector<1x128xf32>
    %88 = vector.broadcast %87 : vector<1x128xf32> to vector<128x128xf32>
    %89 = arith.addf %85, %88 : vector<128x128xf32>
    %cst_48 = arith.constant 0.000000e+00 : f32
    %90 = vector.broadcast %cst_48 : f32 to vector<128x128xf32>
    %91 = arith.maximumf %89, %90 : vector<128x128xf32>
    %c0_49 = arith.constant 0 : index
    %c0_50 = arith.constant 0 : index
    %92 = vector.load %arg9[%c0_49, %c0_50] : memref<128x128xf32, #tpu.memory_space<vmem>>, vector<128x128xf32>
    %cst_51 = arith.constant dense<0.000000e+00> : vector<128x128xf32>
    %93 = tpu.matmul %91, %92, %cst_51 {dimension_numbers = #tpu.dot_dimension_numbers<[1], [0], [0], [1], [0, 0, 1, 1], [], []>} : vector<128x128xf32>, vector<128x128xf32>, vector<128x128xf32> -> vector<128x128xf32>
    %c0_52 = arith.constant 0 : index
    %c0_53 = arith.constant 0 : index
    %94 = vector.load %arg10[%c0_52, %c0_53] : memref<128x128xf32, #tpu.memory_space<vmem>>, vector<128x128xf32>
    %cst_54 = arith.constant dense<0.000000e+00> : vector<128x128xf32>
    %95 = tpu.matmul %91, %94, %cst_54 {dimension_numbers = #tpu.dot_dimension_numbers<[1], [0], [0], [1], [0, 0, 1, 1], [], []>} : vector<128x128xf32>, vector<128x128xf32>, vector<128x128xf32> -> vector<128x128xf32>
    %c0_55 = arith.constant 0 : index
    %c0_56 = arith.constant 0 : index
    %96 = vector.load %arg7[%c0_55, %c0_56] : memref<128x128xf32, #tpu.memory_space<vmem>>, vector<128x128xf32>
    %cst_57 = arith.constant dense<0.000000e+00> : vector<128x128xf32>
    %97 = tpu.matmul %96, %93, %cst_57 {dimension_numbers = #tpu.dot_dimension_numbers<[1], [0], [0], [1], [0, 0, 1, 1], [], []>} : vector<128x128xf32>, vector<128x128xf32>, vector<128x128xf32> -> vector<128x128xf32>
    %c0_58 = arith.constant 0 : index
    %c0_59 = arith.constant 0 : index
    %98 = vector.load %arg8[%c0_58, %c0_59] : memref<128x128xf32, #tpu.memory_space<vmem>>, vector<128x128xf32>
    %cst_60 = arith.constant dense<0.000000e+00> : vector<128x128xf32>
    %99 = tpu.matmul %98, %95, %cst_60 {dimension_numbers = #tpu.dot_dimension_numbers<[1], [0], [0], [1], [0, 0, 1, 1], [], []>} : vector<128x128xf32>, vector<128x128xf32>, vector<128x128xf32> -> vector<128x128xf32>
    %100 = arith.addf %97, %99 : vector<128x128xf32>
    %c0_61 = arith.constant 0 : index
    %c0_62 = arith.constant 0 : index
    %101 = vector.load %arg11[%c0_61, %c0_62] : memref<1x128xf32, #tpu.memory_space<vmem>>, vector<1x128xf32>
    %102 = vector.broadcast %101 : vector<1x128xf32> to vector<128x128xf32>
    %103 = arith.addf %100, %102 : vector<128x128xf32>
    %cst_63 = arith.constant 0.000000e+00 : f32
    %104 = vector.broadcast %cst_63 : f32 to vector<128x128xf32>
    %105 = arith.maximumf %103, %104 : vector<128x128xf32>
    %c0_64 = arith.constant 0 : index
    %c0_65 = arith.constant 0 : index
    %106 = vector.load %arg12[%c0_64, %c0_65] : memref<128x128xf32, #tpu.memory_space<vmem>>, vector<128x128xf32>
    %cst_66 = arith.constant dense<0.000000e+00> : vector<128x128xf32>
    %107 = tpu.matmul %105, %106, %cst_66 {dimension_numbers = #tpu.dot_dimension_numbers<[1], [0], [0], [1], [0, 0, 1, 1], [], []>} : vector<128x128xf32>, vector<128x128xf32>, vector<128x128xf32> -> vector<128x128xf32>
    %c0_67 = arith.constant 0 : index
    %c0_68 = arith.constant 0 : index
    %108 = vector.load %arg13[%c0_67, %c0_68] : memref<1x128xf32, #tpu.memory_space<vmem>>, vector<1x128xf32>
    %109 = vector.broadcast %108 : vector<1x128xf32> to vector<128x128xf32>
    %110 = arith.addf %107, %109 : vector<128x128xf32>
    %111 = math.absf %110 : vector<128x128xf32>
    %cst_69 = arith.constant 0.000000e+00 : f32
    %112 = vector.broadcast %cst_69 : f32 to vector<128x128xf32>
    %113 = arith.subf %112, %111 : vector<128x128xf32>
    %114 = math.exp %113 : vector<128x128xf32>
    %cst_70 = arith.constant 0.000000e+00 : f32
    %115 = vector.broadcast %cst_70 : f32 to vector<128x128xf32>
    %116 = arith.cmpf oge, %110, %115 : vector<128x128xf32>
    %cst_71 = arith.constant 1.000000e+00 : f32
    %117 = vector.broadcast %cst_71 : f32 to vector<128x128xf32>
    %118 = arith.addf %117, %114 : vector<128x128xf32>
    %cst_72 = arith.constant 1.000000e+00 : f32
    %119 = vector.broadcast %cst_72 : f32 to vector<128x128xf32>
    %120 = arith.divf %119, %118 : vector<128x128xf32>
    %cst_73 = arith.constant 1.000000e+00 : f32
    %121 = vector.broadcast %cst_73 : f32 to vector<128x128xf32>
    %122 = arith.addf %121, %114 : vector<128x128xf32>
    %123 = arith.divf %114, %122 : vector<128x128xf32>
    %124 = arith.select %116, %120, %123 : vector<128x128xi1>, vector<128x128xf32>
    %c0_74 = arith.constant 0 : index
    %c0_75 = arith.constant 0 : index
    %125 = vector.load %arg14[%c0_74, %c0_75] : memref<128x128xf32, #tpu.memory_space<vmem>>, vector<128x128xf32>
    tpu.vector_store %arg14[%c0_74, %c0_75], %124 {strides = array<i32>} : memref<128x128xf32, #tpu.memory_space<vmem>>, vector<128x128xf32>,
    return
  }
  func.func @transform_0(%arg0: i32) -> (i32, i32) {
    %c0_i32 = arith.constant 0 : i32
    %c0_i32_0 = arith.constant 0 : i32
    %c0_i32_1 = arith.constant 0 : i32
    return %c0_i32, %c0_i32_0 : i32, i32
  }
  func.func @transform_1(%arg0: i32) -> (i32, i32) {
    %c0_i32 = arith.constant 0 : i32
    %c0_i32_0 = arith.constant 0 : i32
    %c0_i32_1 = arith.constant 0 : i32
    return %c0_i32, %c0_i32_0 : i32, i32
  }
  func.func @transform_2(%arg0: i32) -> (i32, i32, i32) {
    %c0_i32 = arith.constant 0 : i32
    %c0_i32_0 = arith.constant 0 : i32
    %c0_i32_1 = arith.constant 0 : i32
    %c0_i32_2 = arith.constant 0 : i32
    return %c0_i32, %c0_i32_0, %c0_i32_1 : i32, i32, i32
  }
  func.func @transform_3(%arg0: i32) -> (i32, i32, i32) {
    %c0_i32 = arith.constant 0 : i32
    %c0_i32_0 = arith.constant 0 : i32
    %c0_i32_1 = arith.constant 0 : i32
    %c0_i32_2 = arith.constant 0 : i32
    return %c0_i32, %c0_i32_0, %c0_i32_1 : i32, i32, i32
  }
  func.func @transform_4(%arg0: i32) -> (i32, i32, i32) {
    %c0_i32 = arith.constant 0 : i32
    %c0_i32_0 = arith.constant 0 : i32
    %c0_i32_1 = arith.constant 0 : i32
    %c0_i32_2 = arith.constant 0 : i32
    return %c0_i32, %c0_i32_0, %c0_i32_1 : i32, i32, i32
  }
  func.func @transform_5(%arg0: i32) -> (i32, i32, i32) {
    %c0_i32 = arith.constant 0 : i32
    %c0_i32_0 = arith.constant 0 : i32
    %c0_i32_1 = arith.constant 0 : i32
    %c0_i32_2 = arith.constant 0 : i32
    return %c0_i32, %c0_i32_0, %c0_i32_1 : i32, i32, i32
  }
  func.func @transform_6(%arg0: i32) -> (i32, i32) {
    %c0_i32 = arith.constant 0 : i32
    %c0_i32_0 = arith.constant 0 : i32
    %c0_i32_1 = arith.constant 0 : i32
    return %c0_i32, %c0_i32_0 : i32, i32
  }
  func.func @transform_7(%arg0: i32) -> (i32, i32) {
    %c0_i32 = arith.constant 0 : i32
    %c0_i32_0 = arith.constant 0 : i32
    %c0_i32_1 = arith.constant 0 : i32
    return %c0_i32, %c0_i32_0 : i32, i32
  }
  func.func @transform_8(%arg0: i32) -> (i32, i32) {
    %c0_i32 = arith.constant 0 : i32
    %c0_i32_0 = arith.constant 0 : i32
    %c0_i32_1 = arith.constant 0 : i32
    return %c0_i32, %c0_i32_0 : i32, i32
  }
  func.func @transform_9(%arg0: i32) -> (i32, i32) {
    %c0_i32 = arith.constant 0 : i32
    %c0_i32_0 = arith.constant 0 : i32
    %c0_i32_1 = arith.constant 0 : i32
    return %c0_i32, %c0_i32_0 : i32, i32
  }
  func.func @transform_10(%arg0: i32) -> (i32, i32) {
    %c0_i32 = arith.constant 0 : i32
    %c0_i32_0 = arith.constant 0 : i32
    %c0_i32_1 = arith.constant 0 : i32
    return %c0_i32, %c0_i32_0 : i32, i32
  }
  func.func @transform_11(%arg0: i32) -> (i32, i32) {
    %c0_i32 = arith.constant 0 : i32
    %c0_i32_0 = arith.constant 0 : i32
    %c0_i32_1 = arith.constant 0 : i32
    return %c0_i32, %c0_i32_0 : i32, i32
  }
  func.func @transform_12(%arg0: i32) -> (i32, i32) {
    %c0_i32 = arith.constant 0 : i32
    %c0_i32_0 = arith.constant 0 : i32
    %c0_i32_1 = arith.constant 0 : i32
    return %c0_i32, %c0_i32_0 : i32, i32
  }
  func.func @transform_13(%arg0: i32) -> (i32, i32) {
    %c0_i32 = arith.constant 0 : i32
    %c0_i32_0 = arith.constant 0 : i32
    %c0_i32_1 = arith.constant 0 : i32
    return %c0_i32, %c0_i32_0 : i32, i32
  }
}

</mosaic_0001>

<llo_original>
// kernel: tpu_custom_call.1
$region0: #{tpu_custom_call.1}
  #allocation0 [shape = 'u32[]', space=smem, size = 0x4, offset = 0x4, fixed_abs, tag = 'smem constant byte address 0x4 - core index']
  #allocation1 [shape = 'u32[144,128]{1,0:T(1,128)}', space=vmem, size = 0x12000, scoped, tag = 'internal scratch']
  %s0 = inlined_call_operand.hbm [shape: bf16[128,128], index: 0, kind: input, shape index: {}]
  %s1 = inlined_call_operand.hbm [shape: f32[128,128], index: 1, kind: input, shape index: {}]
  %s2 = inlined_call_operand.hbm [shape: f32[3,128,128], index: 2, kind: input, shape index: {}]
  %s3 = inlined_call_operand.vmem [shape: f32[3,1,128], index: 3, kind: input, shape index: {}]
  %s4 = inlined_call_operand.vmem [shape: f32[3,1,128], index: 4, kind: input, shape index: {}]
  %s5 = inlined_call_operand.vmem [shape: f32[3,1,128], index: 5, kind: input, shape index: {}]
  %s6 = inlined_call_operand.hbm [shape: f32[128,128], index: 6, kind: input, shape index: {}]
  %s7 = inlined_call_operand.hbm [shape: f32[128,128], index: 7, kind: input, shape index: {}]
  %s8 = inlined_call_operand.hbm [shape: f32[128,128], index: 8, kind: input, shape index: {}]
  %s9 = inlined_call_operand.hbm [shape: f32[128,128], index: 9, kind: input, shape index: {}]
  %s10 = inlined_call_operand.vmem [shape: f32[1,128], index: 10, kind: input, shape index: {}]
  %s11 = inlined_call_operand.hbm [shape: f32[128,128], index: 11, kind: input, shape index: {}]
  %s12 = inlined_call_operand.vmem [shape: f32[1,128], index: 12, kind: input, shape index: {}]
  %s13 = inlined_call_operand.hbm [shape: f32[128,128], index: 13, kind: output, shape index: {}]
  %s14 = sld [smem:[#allocation0]]
  $region94: #{tpu_custom_call.1} parent=0
    _
  %s16 = ssub.s32 1, %s14
  %s17 = scalar_select 0, %s16, %s14
  $region1: #{tpu_custom_call.1} parent=0
    #allocation2 [shape = 'u8[32768]{0}', space=vmem, size = 0x8000, scoped, tag = 'input window, operand 0, single buffered']
    #allocation3 [shape = 's32[1]{0}', space=sflag, size = 0x4, scoped, tag = 'scoped memory for tpu_custom_call.1']
    #allocation4 [shape = 's32[1]{0}', space=sflag, size = 0x4, scoped, tag = 'scoped memory for tpu_custom_call.1']
    #allocation5 [shape = 'u8[65536]{0}', space=vmem, size = 0x10000, scoped, tag = 'input window, operand 1, single buffered']
    #allocation6 [shape = 's32[1]{0}', space=sflag, size = 0x4, scoped, tag = 'scoped memory for tpu_custom_call.1']
    #allocation7 [shape = 'u8[196608]{0}', space=vmem, size = 0x30000, scoped, tag = 'input window, operand 2, single buffered']
    #allocation8 [shape = 'u8[65536]{0}', space=vmem, size = 0x10000, scoped, tag = 'input window, operand 6, single buffered']
    #allocation9 [shape = 's32[1]{0}', space=sflag, size = 0x4, scoped, tag = 'scoped memory for tpu_custom_call.1']
    #allocation10 [shape = 'u8[65536]{0}', space=vmem, size = 0x10000, scoped, tag = 'input window, operand 7, single buffered']
    #allocation11 [shape = 'u8[65536]{0}', space=vmem, size = 0x10000, scoped, tag = 'input window, operand 8, single buffered']
    #allocation12 [shape = 's32[1]{0}', space=sflag, size = 0x4, scoped, tag = 'scoped memory for tpu_custom_call.1']
    #allocation13 [shape = 'u8[65536]{0}', space=vmem, size = 0x10000, scoped, tag = 'input window, operand 9, single buffered']
    #allocation14 [shape = 'u8[65536]{0}', space=vmem, size = 0x10000, scoped, tag = 'input window, operand 11, single buffered']
    #allocation15 [shape = 's32[1]{0}', space=sflag, size = 0x4, scoped, tag = 'scoped memory for tpu_custom_call.1']
    #allocation16 [shape = 'u8[65536]{0}', space=vmem, size = 0x10000, scoped, tag = 'output window, operand 0, single buffered']
    %18 = vsyncpa [#allocation3], 0
    %19 = vsyncpa [#allocation6], 0
    %20 = vsyncpa [#allocation9], 0
    %21 = vsyncpa [#allocation12], 0
    %22 = vsyncpa [#allocation15], 0
    %23 = vsyncpa [#allocation4], 0
    // Predicated region
    $region2: #{tpu_custom_call.1} parent=1 // pred_check
      _
    $region3: #{tpu_custom_call.1} parent=1 // pred_check_branch
      %25 = sbr.rel (0) target = $region5
    $region4: #{tpu_custom_call.1} parent=1 // pred_region
      %s27 = ssub.s32 1024, 1024
      %28 = vsyncadd [#allocation3], %s27
      %s29 = sshll.u32 [#allocation2], 4
      %s30 = int_to_ptr.vmem [resolvable:$true] %s29
      %35 = dma.hbm_to_vmem [thread:$0]  %s0, 1024, %s30, [#allocation3], 64, 64, 4
    $region5: #{tpu_custom_call.1} parent=1 // pred_fallthru
      _
    // Predicated region
    $region6: #{tpu_custom_call.1} parent=1 // pred_check
      _
    $region7: #{tpu_custom_call.1} parent=1 // pred_check_branch
      %37 = sbr.rel (0) target = $region9
    $region8: #{tpu_custom_call.1} parent=1 // pred_region
      %s39 = ssub.s32 2048, 2048
      %40 = vsyncadd [#allocation6], %s39
      %s41 = sshll.u32 [#allocation5], 4
      %s42 = int_to_ptr.vmem [resolvable:$true] %s41
      %47 = dma.hbm_to_vmem [thread:$0]  %s1, 2048, %s42, [#allocation6], 128, 128, 8
    $region9: #{tpu_custom_call.1} parent=1 // pred_fallthru
      _
    // Predicated region
    $region10: #{tpu_custom_call.1} parent=1 // pred_check
      _
    $region11: #{tpu_custom_call.1} parent=1 // pred_check_branch
      %49 = sbr.rel (0) target = $region13
    $region12: #{tpu_custom_call.1} parent=1 // pred_region
      %s51 = ssub.s32 6144, 6144
      %52 = vsyncadd [#allocation6], %s51
      %s53 = sshll.u32 [#allocation7], 4
      %s54 = int_to_ptr.vmem [resolvable:$true] %s53
      %59 = dma.hbm_to_vmem [thread:$0]  %s2, 6144, %s54, [#allocation6], 128, 128, 8
    $region13: #{tpu_custom_call.1} parent=1 // pred_fallthru
      _
    // Predicated region
    $region14: #{tpu_custom_call.1} parent=1 // pred_check
      _
    $region15: #{tpu_custom_call.1} parent=1 // pred_check_branch
      %61 = sbr.rel (0) target = $region17
    $region16: #{tpu_custom_call.1} parent=1 // pred_region
      _
    $region17: #{tpu_custom_call.1} parent=1 // pred_fallthru
      _
    // Predicated region
    $region18: #{tpu_custom_call.1} parent=1 // pred_check
      _
    $region19: #{tpu_custom_call.1} parent=1 // pred_check_branch
      %63 = sbr.rel (0) target = $region21
    $region20: #{tpu_custom_call.1} parent=1 // pred_region
      _
    $region21: #{tpu_custom_call.1} parent=1 // pred_fallthru
      _
    // Predicated region
    $region22: #{tpu_custom_call.1} parent=1 // pred_check
      _
    $region23: #{tpu_custom_call.1} parent=1 // pred_check_branch
      %65 = sbr.rel (0) target = $region25
    $region24: #{tpu_custom_call.1} parent=1 // pred_region
      _
    $region25: #{tpu_custom_call.1} parent=1 // pred_fallthru
      _
    // Predicated region
    $region26: #{tpu_custom_call.1} parent=1 // pred_check
      _
    $region27: #{tpu_custom_call.1} parent=1 // pred_check_branch
      %67 = sbr.rel (0) target = $region29
    $region28: #{tpu_custom_call.1} parent=1 // pred_region
      %s69 = ssub.s32 2048, 2048
      %70 = vsyncadd [#allocation9], %s69
      %s71 = sshll.u32 [#allocation8], 4
      %s72 = int_to_ptr.vmem [resolvable:$true] %s71
      %77 = dma.hbm_to_vmem [thread:$0]  %s6, 2048, %s72, [#allocation9], 128, 128, 8
    $region29: #{tpu_custom_call.1} parent=1 // pred_fallthru
      _
    // Predicated region
    $region30: #{tpu_custom_call.1} parent=1 // pred_check
      _
    $region31: #{tpu_custom_call.1} parent=1 // pred_check_branch
      %79 = sbr.rel (0) target = $region33
    $region32: #{tpu_custom_call.1} parent=1 // pred_region
      %s81 = ssub.s32 2048, 2048
      %82 = vsyncadd [#allocation9], %s81
      %s83 = sshll.u32 [#allocation10], 4
      %s84 = int_to_ptr.vmem [resolvable:$true] %s83
      %89 = dma.hbm_to_vmem [thread:$0]  %s7, 2048, %s84, [#allocation9], 128, 128, 8
    $region33: #{tpu_custom_call.1} parent=1 // pred_fallthru
      _
    // Predicated region
    $region34: #{tpu_custom_call.1} parent=1 // pred_check
      _
    $region35: #{tpu_custom_call.1} parent=1 // pred_check_branch
      %91 = sbr.rel (0) target = $region37
    $region36: #{tpu_custom_call.1} parent=1 // pred_region
      %s93 = ssub.s32 2048, 2048
      %94 = vsyncadd [#allocation12], %s93
      %s95 = sshll.u32 [#allocation11], 4
      %s96 = int_to_ptr.vmem [resolvable:$true] %s95
      %101 = dma.hbm_to_vmem [thread:$0]  %s8, 2048, %s96, [#allocation12], 128, 128, 8
    $region37: #{tpu_custom_call.1} parent=1 // pred_fallthru
      _
    // Predicated region
    $region38: #{tpu_custom_call.1} parent=1 // pred_check
      _
    $region39: #{tpu_custom_call.1} parent=1 // pred_check_branch
      %103 = sbr.rel (0) target = $region41
    $region40: #{tpu_custom_call.1} parent=1 // pred_region
      %s105 = ssub.s32 2048, 2048
      %106 = vsyncadd [#allocation12], %s105
      %s107 = sshll.u32 [#allocation13], 4
      %s108 = int_to_ptr.vmem [resolvable:$true] %s107
      %113 = dma.hbm_to_vmem [thread:$0]  %s9, 2048, %s108, [#allocation12], 128, 128, 8
    $region41: #{tpu_custom_call.1} parent=1 // pred_fallthru
      _
    // Predicated region
    $region42: #{tpu_custom_call.1} parent=1 // pred_check
      _
    $region43: #{tpu_custom_call.1} parent=1 // pred_check_branch
      %115 = sbr.rel (0) target = $region45
    $region44: #{tpu_custom_call.1} parent=1 // pred_region
      _
    $region45: #{tpu_custom_call.1} parent=1 // pred_fallthru
      _
    // Predicated region
    $region46: #{tpu_custom_call.1} parent=1 // pred_check
      _
    $region47: #{tpu_custom_call.1} parent=1 // pred_check_branch
      %117 = sbr.rel (0) target = $region49
    $region48: #{tpu_custom_call.1} parent=1 // pred_region
      %s119 = ssub.s32 2048, 2048
      %120 = vsyncadd [#allocation15], %s119
      %s121 = sshll.u32 [#allocation14], 4
      %s122 = int_to_ptr.vmem [resolvable:$true] %s121
      %127 = dma.hbm_to_vmem [thread:$0]  %s11, 2048, %s122, [#allocation15], 128, 128, 8
    $region49: #{tpu_custom_call.1} parent=1 // pred_fallthru
      _
    // Predicated region
    $region50: #{tpu_custom_call.1} parent=1 // pred_check
      _
    $region51: #{tpu_custom_call.1} parent=1 // pred_check_branch
      %129 = sbr.rel (0) target = $region53
    $region52: #{tpu_custom_call.1} parent=1 // pred_region
      _
    $region53: #{tpu_custom_call.1} parent=1 // pred_fallthru
      _
    // Predicated region
    $region54: #{tpu_custom_call.1} parent=1 // pred_check
      _
    $region55: #{tpu_custom_call.1} parent=1 // pred_check_branch
      %131 = sbr.rel (0) target = $region57
    $region56: #{tpu_custom_call.1} parent=1 // pred_region
      %132 = dma.done [#allocation3], 1024
    $region57: #{tpu_custom_call.1} parent=1 // pred_fallthru
      _
    // Predicated region
    $region58: #{tpu_custom_call.1} parent=1 // pred_check
      _
    $region59: #{tpu_custom_call.1} parent=1 // pred_check_branch
      %134 = sbr.rel (0) target = $region61
    $region60: #{tpu_custom_call.1} parent=1 // pred_region
      %135 = dma.done [#allocation6], 2048
    $region61: #{tpu_custom_call.1} parent=1 // pred_fallthru
      _
    // Predicated region
    $region62: #{tpu_custom_call.1} parent=1 // pred_check
      _
    $region63: #{tpu_custom_call.1} parent=1 // pred_check_branch
      %137 = sbr.rel (0) target = $region65
    $region64: #{tpu_custom_call.1} parent=1 // pred_region
      %138 = dma.done [#allocation6], 6144
    $region65: #{tpu_custom_call.1} parent=1 // pred_fallthru
      _
    // Predicated region
    $region66: #{tpu_custom_call.1} parent=1 // pred_check
      _
    $region67: #{tpu_custom_call.1} parent=1 // pred_check_branch
      %140 = sbr.rel (0) target = $region69
    $region68: #{tpu_custom_call.1} parent=1 // pred_region
      %141 = dma.done [#allocation9], 2048
    $region69: #{tpu_custom_call.1} parent=1 // pred_fallthru
      _
    // Predicated region
    $region70: #{tpu_custom_call.1} parent=1 // pred_check
      _
    $region71: #{tpu_custom_call.1} parent=1 // pred_check_branch
      %143 = sbr.rel (0) target = $region73
    $region72: #{tpu_custom_call.1} parent=1 // pred_region
      %144 = dma.done [#allocation9], 2048
    $region73: #{tpu_custom_call.1} parent=1 // pred_fallthru
      _
    // Predicated region
    $region74: #{tpu_custom_call.1} parent=1 // pred_check
      _
    $region75: #{tpu_custom_call.1} parent=1 // pred_check_branch
      %146 = sbr.rel (0) target = $region77
    $region76: #{tpu_custom_call.1} parent=1 // pred_region
      %147 = dma.done [#allocation12], 2048
    $region77: #{tpu_custom_call.1} parent=1 // pred_fallthru
      _
    // Predicated region
    $region78: #{tpu_custom_call.1} parent=1 // pred_check
      _
    $region79: #{tpu_custom_call.1} parent=1 // pred_check_branch
      %149 = sbr.rel (0) target = $region81
    $region80: #{tpu_custom_call.1} parent=1 // pred_region
      %150 = dma.done [#allocation12], 2048
    $region81: #{tpu_custom_call.1} parent=1 // pred_fallthru
      _
    // Predicated region
    $region82: #{tpu_custom_call.1} parent=1 // pred_check
      _
    $region83: #{tpu_custom_call.1} parent=1 // pred_check_branch
      %152 = sbr.rel (0) target = $region85
    $region84: #{tpu_custom_call.1} parent=1 // pred_region
      %153 = dma.done [#allocation15], 2048
    $region85: #{tpu_custom_call.1} parent=1 // pred_fallthru
      _
    %v155 = vld [vmem:[#allocation2] sm:$0xf]
    %v156 = vld [vmem:[#allocation2 + $0x4] sm:$0xf]
    %v157 = vld [vmem:[#allocation2 + $0x8] sm:$0xf]
    %v158 = vld [vmem:[#allocation2 + $0xc] sm:$0xf]
    %v159 = vld [vmem:[#allocation2 + $0x10] sm:$0xf]
    %v160 = vld [vmem:[#allocation2 + $0x14] sm:$0xf]
    %v161 = vld [vmem:[#allocation2 + $0x18] sm:$0xf]
    %v162 = vld [vmem:[#allocation2 + $0x1c] sm:$0xf]
    %v163 = vld [vmem:[#allocation2 + $0x20] sm:$0xf]
    %v164 = vld [vmem:[#allocation2 + $0x24] sm:$0xf]
    %v165 = vld [vmem:[#allocation2 + $0x28] sm:$0xf]
    %v166 = vld [vmem:[#allocation2 + $0x2c] sm:$0xf]
    %v167 = vld [vmem:[#allocation2 + $0x30] sm:$0xf]
    %v168 = vld [vmem:[#allocation2 + $0x34] sm:$0xf]
    %v169 = vld [vmem:[#allocation2 + $0x38] sm:$0xf]
    %v170 = vld [vmem:[#allocation2 + $0x3c] sm:$0xf]
    %v171 = vld [vmem:[#allocation5] sm:$0xff]
    %v172 = vld [vmem:[#allocation5 + $0x8] sm:$0xff]
    %v173 = vld [vmem:[#allocation5 + $0x10] sm:$0xff]
    %v174 = vld [vmem:[#allocation5 + $0x18] sm:$0xff]
    %v175 = vld [vmem:[#allocation5 + $0x20] sm:$0xff]
    %v176 = vld [vmem:[#allocation5 + $0x28] sm:$0xff]
    %v177 = vld [vmem:[#allocation5 + $0x30] sm:$0xff]
    %v178 = vld [vmem:[#allocation5 + $0x38] sm:$0xff]
    %v179 = vld [vmem:[#allocation5 + $0x40] sm:$0xff]
    %v180 = vld [vmem:[#allocation5 + $0x48] sm:$0xff]
    %v181 = vld [vmem:[#allocation5 + $0x50] sm:$0xff]
    %v182 = vld [vmem:[#allocation5 + $0x58] sm:$0xff]
    %v183 = vld [vmem:[#allocation5 + $0x60] sm:$0xff]
    %v184 = vld [vmem:[#allocation5 + $0x68] sm:$0xff]
    %v185 = vld [vmem:[#allocation5 + $0x70] sm:$0xff]
    %v186 = vld [vmem:[#allocation5 + $0x78] sm:$0xff]
    %v187 = vlaneseq
    %v188 = vand.u32 %v187, 127
    %vm189 = vcmp.lt.s32.totalorder %v188, 32
    %v190 = vsel %vm189, 1, 0
    %v191 = vcvt.s32.f32 %v190
    %v192 = vld [vmem:[#allocation7] sm:$0xff]
    %v193 = vld [vmem:[#allocation7 + $0x8] sm:$0xff]
    %v194 = vld [vmem:[#allocation7 + $0x10] sm:$0xff]
    %v195 = vld [vmem:[#allocation7 + $0x18] sm:$0xff]
    %v196 = vld [vmem:[#allocation7 + $0x20] sm:$0xff]
    %v197 = vld [vmem:[#allocation7 + $0x28] sm:$0xff]
    %v198 = vld [vmem:[#allocation7 + $0x30] sm:$0xff]
    %v199 = vld [vmem:[#allocation7 + $0x38] sm:$0xff]
    %v200 = vld [vmem:[#allocation7 + $0x40] sm:$0xff]
    %v201 = vld [vmem:[#allocation7 + $0x48] sm:$0xff]
    %v202 = vld [vmem:[#allocation7 + $0x50] sm:$0xff]
    %v203 = vld [vmem:[#allocation7 + $0x58] sm:$0xff]
    %v204 = vld [vmem:[#allocation7 + $0x60] sm:$0xff]
    %v205 = vld [vmem:[#allocation7 + $0x68] sm:$0xff]
    %v206 = vld [vmem:[#allocation7 + $0x70] sm:$0xff]
    %v207 = vld [vmem:[#allocation7 + $0x78] sm:$0xff]
    %208 = vmatprep.subr.mxu0 0.0
    %209 = vmatpush1.msra.mxu0 %v192
    %210 = vmatprep.subr.mxu0 0.0
    %211 = vmatpush1.msra.mxu0 %v193
    %212 = vmatprep.subr.mxu0 0.0
    %213 = vmatpush1.msra.mxu0 %v194
    %214 = vmatprep.subr.mxu0 0.0
    %215 = vmatpush1.msra.mxu0 %v195
    %216 = vmatprep.subr.mxu0 0.0
    %217 = vmatpush1.msra.mxu0 %v196
    %218 = vmatprep.subr.mxu0 0.0
    %219 = vmatpush1.msra.mxu0 %v197
    %220 = vmatprep.subr.mxu0 0.0
    %221 = vmatpush1.msra.mxu0 %v198
    %222 = vmatprep.subr.mxu0 0.0
    %223 = vmatpush1.msra.mxu0 %v199
    %224 = vmatprep.subr.mxu0 0.0
    %225 = vmatpush1.msra.mxu0 %v200
    %226 = vmatprep.subr.mxu0 0.0
    %227 = vmatpush1.msra.mxu0 %v201
    %228 = vmatprep.subr.mxu0 0.0
    %229 = vmatpush1.msra.mxu0 %v202
    %230 = vmatprep.subr.mxu0 0.0
    %231 = vmatpush1.msra.mxu0 %v203
    %232 = vmatprep.subr.mxu0 0.0
    %233 = vmatpush1.msra.mxu0 %v204
    %234 = vmatprep.subr.mxu0 0.0
    %235 = vmatpush1.msra.mxu0 %v205
    %236 = vmatprep.subr.mxu0 0.0
    %237 = vmatpush1.msra.mxu0 %v206
    %238 = vmatprep.subr.mxu0 0.0
    %239 = vmatpush1.msra.mxu0 %v207
    %240 = vmatprep.subr.mxu0 0.0
    %241 = vmatpush1.msra.mxu0 0.0
    %242 = vmatprep.subr.mxu0 0.0
    %243 = vmatpush1.msra.mxu0 0.0
    %244 = vmatprep.subr.mxu0 0.0
    %245 = vmatpush1.msra.mxu0 0.0
    %246 = vmatprep.subr.mxu0 0.0
    %247 = vmatpush1.msra.mxu0 0.0
    %248 = vmatprep.subr.mxu0 0.0
    %249 = vmatpush1.msra.mxu0 0.0
    %250 = vmatprep.subr.mxu0 0.0
    %251 = vmatpush1.msra.mxu0 0.0
    %252 = vmatprep.subr.mxu0 0.0
    %253 = vmatpush1.msra.mxu0 0.0
    %254 = vmatprep.subr.mxu0 0.0
    %255 = vmatpush1.msra.mxu0 0.0
    %256 = vmatprep.subr.mxu0 0.0
    %257 = vmatpush1.msra.mxu0 0.0
    %258 = vmatprep.subr.mxu0 0.0
    %259 = vmatpush1.msra.mxu0 0.0
    %260 = vmatprep.subr.mxu0 0.0
    %261 = vmatpush1.msra.mxu0 0.0
    %262 = vmatprep.subr.mxu0 0.0
    %263 = vmatpush1.msra.mxu0 0.0
    %264 = vmatprep.subr.mxu0 0.0
    %265 = vmatpush1.msra.mxu0 0.0
    %266 = vmatprep.subr.mxu0 0.0
    %267 = vmatpush1.msra.mxu0 0.0
    %268 = vmatprep.subr.mxu0 0.0
    %269 = vmatpush1.msra.mxu0 0.0
    %270 = vmatprep.subr.mxu0 0.0
    %271 = vmatpush1.msra.mxu0 0.0
    %272 = vmatprep.mubr.f32.mxu0 0.0
    %273 = vmatmul.mubr.f32.gmra.mrb[0].mxu0 %v171
    %v274 = vpop.f32.mrb[0].mxu0
    %v275 = vadd.f32 0.0, %v274
    %v276 = vpop.f32.mrb[0].mxu0
    %277 = vmatprep.mubr.f32.mxu0 0.0
    %278 = vmatmul.mubr.f32.gmra.mrb[0].mxu0 %v172
    %v279 = vpop.f32.mrb[0].mxu0
    %v280 = vadd.f32 0.0, %v279
    %v281 = vpop.f32.mrb[0].mxu0
    %282 = vmatprep.mubr.f32.mxu0 0.0
    %283 = vmatmul.mubr.f32.gmra.mrb[0].mxu0 %v173
    %v284 = vpop.f32.mrb[0].mxu0
    %v285 = vadd.f32 0.0, %v284
    %v286 = vpop.f32.mrb[0].mxu0
    %287 = vmatprep.mubr.f32.mxu0 0.0
    %288 = vmatmul.mubr.f32.gmra.mrb[0].mxu0 %v174
    %v289 = vpop.f32.mrb[0].mxu0
    %v290 = vadd.f32 0.0, %v289
    %v291 = vpop.f32.mrb[0].mxu0
    %292 = vmatprep.mubr.f32.mxu0 0.0
    %293 = vmatmul.mubr.f32.gmra.mrb[0].mxu0 %v175
    %v294 = vpop.f32.mrb[0].mxu0
    %v295 = vadd.f32 0.0, %v294
    %v296 = vpop.f32.mrb[0].mxu0
    %297 = vmatprep.mubr.f32.mxu0 0.0
    %298 = vmatmul.mubr.f32.gmra.mrb[0].mxu0 %v176
    %v299 = vpop.f32.mrb[0].mxu0
    %v300 = vadd.f32 0.0, %v299
    %v301 = vpop.f32.mrb[0].mxu0
    %302 = vmatprep.mubr.f32.mxu0 0.0
    %303 = vmatmul.mubr.f32.gmra.mrb[0].mxu0 %v177
    %v304 = vpop.f32.mrb[0].mxu0
    %v305 = vadd.f32 0.0, %v304
    %v306 = vpop.f32.mrb[0].mxu0
    %307 = vmatprep.mubr.f32.mxu0 0.0
    %308 = vmatmul.mubr.f32.gmra.mrb[0].mxu0 %v178
    %v309 = vpop.f32.mrb[0].mxu0
    %v310 = vadd.f32 0.0, %v309
    %v311 = vpop.f32.mrb[0].mxu0
    %312 = vmatprep.mubr.f32.mxu0 0.0
    %313 = vmatmul.mubr.f32.gmra.mrb[0].mxu0 %v179
    %v314 = vpop.f32.mrb[0].mxu0
    %v315 = vadd.f32 0.0, %v314
    %v316 = vpop.f32.mrb[0].mxu0
    %317 = vmatprep.mubr.f32.mxu0 0.0
    %318 = vmatmul.mubr.f32.gmra.mrb[0].mxu0 %v180
    %v319 = vpop.f32.mrb[0].mxu0
    %v320 = vadd.f32 0.0, %v319
    %v321 = vpop.f32.mrb[0].mxu0
    %322 = vmatprep.mubr.f32.mxu0 0.0
    %323 = vmatmul.mubr.f32.gmra.mrb[0].mxu0 %v181
    %v324 = vpop.f32.mrb[0].mxu0
    %v325 = vadd.f32 0.0, %v324
    %v326 = vpop.f32.mrb[0].mxu0
    %327 = vmatprep.mubr.f32.mxu0 0.0
    %328 = vmatmul.mubr.f32.gmra.mrb[0].mxu0 %v182
    %v329 = vpop.f32.mrb[0].mxu0
    %v330 = vadd.f32 0.0, %v329
    %v331 = vpop.f32.mrb[0].mxu0
    %332 = vmatprep.mubr.f32.mxu0 0.0
    %333 = vmatmul.mubr.f32.gmra.mrb[0].mxu0 %v183
    %v334 = vpop.f32.mrb[0].mxu0
    %v335 = vadd.f32 0.0, %v334
    %v336 = vpop.f32.mrb[0].mxu0
    %337 = vmatprep.mubr.f32.mxu0 0.0
    %338 = vmatmul.mubr.f32.gmra.mrb[0].mxu0 %v184
    %v339 = vpop.f32.mrb[0].mxu0
    %v340 = vadd.f32 0.0, %v339
    %v341 = vpop.f32.mrb[0].mxu0
    %342 = vmatprep.mubr.f32.mxu0 0.0
    %343 = vmatmul.mubr.f32.gmra.mrb[0].mxu0 %v185
    %v344 = vpop.f32.mrb[0].mxu0
    %v345 = vadd.f32 0.0, %v344
    %v346 = vpop.f32.mrb[0].mxu0
    %347 = vmatprep.mubr.f32.mxu0 0.0
    %348 = vmatmul.mubr.f32.gmra.mrb[0].mxu0 %v186
    %v349 = vpop.f32.mrb[0].mxu0
    %v350 = vadd.f32 0.0, %v349
    %v351 = vpop.f32.mrb[0].mxu0
    %352 = vdwg.mxu0
    %v353 = vpack.c.bf16 %v280, %v275
    %v354 = vpack.c.bf16 %v290, %v285
    %v355 = vpack.c.bf16 %v300, %v295
    %v356 = vpack.c.bf16 %v310, %v305
    %v357 = vpack.c.bf16 %v320, %v315
    %v358 = vpack.c.bf16 %v330, %v325
    %v359 = vpack.c.bf16 %v340, %v335
    %v360 = vpack.c.bf16 %v350, %v345
    %v361 = vld [vmem:[%s3] sm:$0x1]
    %v363 = vlaneseq
    %v364 = vshrl.u32 %v363, 7
    %v365 = vsub.s32 0, %v364
    %v366 = vrot.slane %v361, %v365
    %v384 = vunpack.c.l.b16 %v155
    %v385 = vunpack.c.l.b16 %v156
    %v386 = vunpack.c.l.b16 %v157
    %v387 = vunpack.c.l.b16 %v158
    %v388 = vunpack.c.l.b16 %v159
    %v389 = vunpack.c.l.b16 %v160
    %v390 = vunpack.c.l.b16 %v161
    %v391 = vunpack.c.l.b16 %v162
    %v392 = vunpack.c.l.b16 %v163
    %v393 = vunpack.c.l.b16 %v164
    %v394 = vunpack.c.l.b16 %v165
    %v395 = vunpack.c.l.b16 %v166
    %v396 = vunpack.c.l.b16 %v167
    %v397 = vunpack.c.l.b16 %v168
    %v398 = vunpack.c.l.b16 %v169
    %v399 = vunpack.c.l.b16 %v170
    %v400 = vpack.c.b16 %v385, %v384
    %v401 = vpack.c.b16 %v387, %v386
    %v402 = vpack.c.b16 %v389, %v388
    %v403 = vpack.c.b16 %v391, %v390
    %v404 = vpack.c.b16 %v393, %v392
    %v405 = vpack.c.b16 %v395, %v394
    %v406 = vpack.c.b16 %v397, %v396
    %v407 = vpack.c.b16 %v399, %v398
    %416 = vmatprep.subr.bf16.mxu0 0
    %417 = vmatpush1.bf16.msra.mxu0 %v353
    %418 = vmatprep.subr.bf16.mxu0 0
    %419 = vmatpush1.bf16.msra.mxu0 %v354
    %420 = vmatprep.subr.bf16.mxu0 0
    %421 = vmatpush1.bf16.msra.mxu0 %v355
    %422 = vmatprep.subr.bf16.mxu0 0
    %423 = vmatpush1.bf16.msra.mxu0 %v356
    %424 = vmatprep.subr.bf16.mxu0 0
    %425 = vmatpush1.bf16.msra.mxu0 %v357
    %426 = vmatprep.subr.bf16.mxu0 0
    %427 = vmatpush1.bf16.msra.mxu0 %v358
    %428 = vmatprep.subr.bf16.mxu0 0
    %429 = vmatpush1.bf16.msra.mxu0 %v359
    %430 = vmatprep.subr.bf16.mxu0 0
    %431 = vmatpush1.bf16.msra.mxu0 %v360
    %432 = vmatprep.subr.bf16.mxu0 0
    %433 = vmatpush1.bf16.msra.mxu0 0
    %434 = vmatprep.subr.bf16.mxu0 0
    %435 = vmatpush1.bf16.msra.mxu0 0
    %436 = vmatprep.subr.bf16.mxu0 0
    %437 = vmatpush1.bf16.msra.mxu0 0
    %438 = vmatprep.subr.bf16.mxu0 0
    %439 = vmatpush1.bf16.msra.mxu0 0
    %440 = vmatprep.subr.bf16.mxu0 0
    %441 = vmatpush1.bf16.msra.mxu0 0
    %442 = vmatprep.subr.bf16.mxu0 0
    %443 = vmatpush1.bf16.msra.mxu0 0
    %444 = vmatprep.subr.bf16.mxu0 0
    %445 = vmatpush1.bf16.msra.mxu0 0
    %446 = vmatprep.subr.bf16.mxu0 0
    %447 = vmatpush1.bf16.msra.mxu0 0
    %448 = vmatprep.mubr.bf16.mxu0 0
    %449 = vmatmul.mubr.bf16.gmra.mrb[0].mxu0 %v400
    %v450 = vpop.f32.mrb[0].mxu0
    %v451 = vadd.f32 %v366, %v450
    %v452 = vpop.f32.mrb[0].mxu0
    %v453 = vpop.f32.mrb[0].mxu0
    %v454 = vadd.f32 %v366, %v453
    %v455 = vpop.f32.mrb[0].mxu0
    %456 = vmatprep.mubr.bf16.mxu0 0
    %457 = vmatmul.mubr.bf16.gmra.mrb[0].mxu0 %v401
    %v458 = vpop.f32.mrb[0].mxu0
    %v459 = vadd.f32 %v366, %v458
    %v460 = vpop.f32.mrb[0].mxu0
    %v461 = vpop.f32.mrb[0].mxu0
    %v462 = vadd.f32 %v366, %v461
    %v463 = vpop.f32.mrb[0].mxu0
    %464 = vmatprep.mubr.bf16.mxu0 0
    %465 = vmatmul.mubr.bf16.gmra.mrb[0].mxu0 %v402
    %v466 = vpop.f32.mrb[0].mxu0
    %v467 = vadd.f32 %v366, %v466
    %v468 = vpop.f32.mrb[0].mxu0
    %v469 = vpop.f32.mrb[0].mxu0
    %v470 = vadd.f32 %v366, %v469
    %v471 = vpop.f32.mrb[0].mxu0
    %472 = vmatprep.mubr.bf16.mxu0 0
    %473 = vmatmul.mubr.bf16.gmra.mrb[0].mxu0 %v403
    %v474 = vpop.f32.mrb[0].mxu0
    %v475 = vadd.f32 %v366, %v474
    %v476 = vpop.f32.mrb[0].mxu0
    %v477 = vpop.f32.mrb[0].mxu0
    %v478 = vadd.f32 %v366, %v477
    %v479 = vpop.f32.mrb[0].mxu0
    %480 = vmatprep.mubr.bf16.mxu0 0
    %481 = vmatmul.mubr.bf16.gmra.mrb[0].mxu0 %v404
    %v482 = vpop.f32.mrb[0].mxu0
    %v483 = vadd.f32 %v366, %v482
    %v484 = vpop.f32.mrb[0].mxu0
    %v485 = vpop.f32.mrb[0].mxu0
    %v486 = vadd.f32 %v366, %v485
    %v487 = vpop.f32.mrb[0].mxu0
    %488 = vmatprep.mubr.bf16.mxu0 0
    %489 = vmatmul.mubr.bf16.gmra.mrb[0].mxu0 %v405
    %v490 = vpop.f32.mrb[0].mxu0
    %v491 = vadd.f32 %v366, %v490
    %v492 = vpop.f32.mrb[0].mxu0
    %v493 = vpop.f32.mrb[0].mxu0
    %v494 = vadd.f32 %v366, %v493
    %v495 = vpop.f32.mrb[0].mxu0
    %496 = vmatprep.mubr.bf16.mxu0 0
    %497 = vmatmul.mubr.bf16.gmra.mrb[0].mxu0 %v406
    %v498 = vpop.f32.mrb[0].mxu0
    %v499 = vadd.f32 %v366, %v498
    %v500 = vpop.f32.mrb[0].mxu0
    %v501 = vpop.f32.mrb[0].mxu0
    %v502 = vadd.f32 %v366, %v501
    %v503 = vpop.f32.mrb[0].mxu0
    %504 = vmatprep.mubr.bf16.mxu0 0
    %505 = vmatmul.mubr.bf16.gmra.mrb[0].mxu0 %v407
    %v506 = vpop.f32.mrb[0].mxu0
    %v507 = vadd.f32 %v366, %v506
    %v508 = vpop.f32.mrb[0].mxu0
    %v509 = vpop.f32.mrb[0].mxu0
    %v510 = vadd.f32 %v366, %v509
    %v511 = vpop.f32.mrb[0].mxu0
    %512 = vdwg.mxu0
    %v513 = vmax.f32 %v451, 0.0
    %v514 = vmax.f32 %v454, 0.0
    %v515 = vmax.f32 %v459, 0.0
    %v516 = vmax.f32 %v462, 0.0
    %v517 = vmax.f32 %v467, 0.0
    %v518 = vmax.f32 %v470, 0.0
    %v519 = vmax.f32 %v475, 0.0
    %v520 = vmax.f32 %v478, 0.0
    %v521 = vmax.f32 %v483, 0.0
    %v522 = vmax.f32 %v486, 0.0
    %v523 = vmax.f32 %v491, 0.0
    %v524 = vmax.f32 %v494, 0.0
    %v525 = vmax.f32 %v499, 0.0
    %v526 = vmax.f32 %v502, 0.0
    %v527 = vmax.f32 %v507, 0.0
    %v528 = vmax.f32 %v510, 0.0
    %529 = vadd.xlane.f32.xlu0 %v513
    %v530 = vpop.xlane.xlu0 %529
    %531 = vadd.xlane.f32.xlu0 %v514
    %v532 = vpop.xlane.xlu0 %531
    %533 = vadd.xlane.f32.xlu0 %v515
    %v534 = vpop.xlane.xlu0 %533
    %535 = vadd.xlane.f32.xlu0 %v516
    %v536 = vpop.xlane.xlu0 %535
    %537 = vadd.xlane.f32.xlu0 %v517
    %v538 = vpop.xlane.xlu0 %537
    %539 = vadd.xlane.f32.xlu0 %v518
    %v540 = vpop.xlane.xlu0 %539
    %541 = vadd.xlane.f32.xlu0 %v519
    %v542 = vpop.xlane.xlu0 %541
    %543 = vadd.xlane.f32.xlu0 %v520
    %v544 = vpop.xlane.xlu0 %543
    %545 = vadd.xlane.f32.xlu0 %v521
    %v546 = vpop.xlane.xlu0 %545
    %547 = vadd.xlane.f32.xlu0 %v522
    %v548 = vpop.xlane.xlu0 %547
    %549 = vadd.xlane.f32.xlu0 %v523
    %v550 = vpop.xlane.xlu0 %549
    %551 = vadd.xlane.f32.xlu0 %v524
    %v552 = vpop.xlane.xlu0 %551
    %553 = vadd.xlane.f32.xlu0 %v525
    %v554 = vpop.xlane.xlu0 %553
    %555 = vadd.xlane.f32.xlu0 %v526
    %v556 = vpop.xlane.xlu0 %555
    %557 = vadd.xlane.f32.xlu0 %v527
    %v558 = vpop.xlane.xlu0 %557
    %559 = vadd.xlane.f32.xlu0 %v528
    %v560 = vpop.xlane.xlu0 %559
    %v561 = vmul.f32 %v530, 0.03125
    %v562 = vmul.f32 %v532, 0.03125
    %v563 = vmul.f32 %v534, 0.03125
    %v564 = vmul.f32 %v536, 0.03125
    %v565 = vmul.f32 %v538, 0.03125
    %v566 = vmul.f32 %v540, 0.03125
    %v567 = vmul.f32 %v542, 0.03125
    %v568 = vmul.f32 %v544, 0.03125
    %v569 = vmul.f32 %v546, 0.03125
    %v570 = vmul.f32 %v548, 0.03125
    %v571 = vmul.f32 %v550, 0.03125
    %v572 = vmul.f32 %v552, 0.03125
    %v573 = vmul.f32 %v554, 0.03125
    %v574 = vmul.f32 %v556, 0.03125
    %v575 = vmul.f32 %v558, 0.03125
    %v576 = vmul.f32 %v560, 0.03125
    %v577 = vsub.f32 %v513, %v561
    %v578 = vsub.f32 %v514, %v562
    %v579 = vsub.f32 %v515, %v563
    %v580 = vsub.f32 %v516, %v564
    %v581 = vsub.f32 %v517, %v565
    %v582 = vsub.f32 %v518, %v566
    %v583 = vsub.f32 %v519, %v567
    %v584 = vsub.f32 %v520, %v568
    %v585 = vsub.f32 %v521, %v569
    %v586 = vsub.f32 %v522, %v570
    %v587 = vsub.f32 %v523, %v571
    %v588 = vsub.f32 %v524, %v572
    %v589 = vsub.f32 %v525, %v573
    %v590 = vsub.f32 %v526, %v574
    %v591 = vsub.f32 %v527, %v575
    %v592 = vsub.f32 %v528, %v576
    %v593 = vmul.f32 %v577, %v191
    %v594 = vmul.f32 %v578, %v191
    %v595 = vmul.f32 %v579, %v191
    %v596 = vmul.f32 %v580, %v191
    %v597 = vmul.f32 %v581, %v191
    %v598 = vmul.f32 %v582, %v191
    %v599 = vmul.f32 %v583, %v191
    %v600 = vmul.f32 %v584, %v191
    %v601 = vmul.f32 %v585, %v191
    %v602 = vmul.f32 %v586, %v191
    %v603 = vmul.f32 %v587, %v191
    %v604 = vmul.f32 %v588, %v191
    %v605 = vmul.f32 %v589, %v191
    %v606 = vmul.f32 %v590, %v191
    %v607 = vmul.f32 %v591, %v191
    %v608 = vmul.f32 %v592, %v191
    %v609 = vmul.f32 %v593, %v593
    %v610 = vmul.f32 %v594, %v594
    %v611 = vmul.f32 %v595, %v595
    %v612 = vmul.f32 %v596, %v596
    %v613 = vmul.f32 %v597, %v597
    %v614 = vmul.f32 %v598, %v598
    %v615 = vmul.f32 %v599, %v599
    %v616 = vmul.f32 %v600, %v600
    %v617 = vmul.f32 %v601, %v601
    %v618 = vmul.f32 %v602, %v602
    %v619 = vmul.f32 %v603, %v603
    %v620 = vmul.f32 %v604, %v604
    %v621 = vmul.f32 %v605, %v605
    %v622 = vmul.f32 %v606, %v606
    %v623 = vmul.f32 %v607, %v607
    %v624 = vmul.f32 %v608, %v608
    %625 = vadd.xlane.f32.xlu0 %v609
    %v626 = vpop.xlane.xlu0 %625
    %627 = vadd.xlane.f32.xlu0 %v610
    %v628 = vpop.xlane.xlu0 %627
    %629 = vadd.xlane.f32.xlu0 %v611
    %v630 = vpop.xlane.xlu0 %629
    %631 = vadd.xlane.f32.xlu0 %v612
    %v632 = vpop.xlane.xlu0 %631
    %633 = vadd.xlane.f32.xlu0 %v613
    %v634 = vpop.xlane.xlu0 %633
    %635 = vadd.xlane.f32.xlu0 %v614
    %v636 = vpop.xlane.xlu0 %635
    %637 = vadd.xlane.f32.xlu0 %v615
    %v638 = vpop.xlane.xlu0 %637
    %639 = vadd.xlane.f32.xlu0 %v616
    %v640 = vpop.xlane.xlu0 %639
    %641 = vadd.xlane.f32.xlu0 %v617
    %v642 = vpop.xlane.xlu0 %641
    %643 = vadd.xlane.f32.xlu0 %v618
    %v644 = vpop.xlane.xlu0 %643
    %645 = vadd.xlane.f32.xlu0 %v619
    %v646 = vpop.xlane.xlu0 %645
    %647 = vadd.xlane.f32.xlu0 %v620
    %v648 = vpop.xlane.xlu0 %647
    %649 = vadd.xlane.f32.xlu0 %v621
    %v650 = vpop.xlane.xlu0 %649
    %651 = vadd.xlane.f32.xlu0 %v622
    %v652 = vpop.xlane.xlu0 %651
    %653 = vadd.xlane.f32.xlu0 %v623
    %v654 = vpop.xlane.xlu0 %653
    %655 = vadd.xlane.f32.xlu0 %v624
    %v656 = vpop.xlane.xlu0 %655
    %v657 = vmul.f32 %v626, 0.03125
    %v658 = vmul.f32 %v628, 0.03125
    %v659 = vmul.f32 %v630, 0.03125
    %v660 = vmul.f32 %v632, 0.03125
    %v661 = vmul.f32 %v634, 0.03125
    %v662 = vmul.f32 %v636, 0.03125
    %v663 = vmul.f32 %v638, 0.03125
    %v664 = vmul.f32 %v640, 0.03125
    %v665 = vmul.f32 %v642, 0.03125
    %v666 = vmul.f32 %v644, 0.03125
    %v667 = vmul.f32 %v646, 0.03125
    %v668 = vmul.f32 %v648, 0.03125
    %v669 = vmul.f32 %v650, 0.03125
    %v670 = vmul.f32 %v652, 0.03125
    %v671 = vmul.f32 %v654, 0.03125
    %v672 = vmul.f32 %v656, 0.03125
    %v673 = vadd.f32 %v657, 1e-05
    %v674 = vadd.f32 %v658, 1e-05
    %v675 = vadd.f32 %v659, 1e-05
    %v676 = vadd.f32 %v660, 1e-05
    %v677 = vadd.f32 %v661, 1e-05
    %v678 = vadd.f32 %v662, 1e-05
    %v679 = vadd.f32 %v663, 1e-05
    %v680 = vadd.f32 %v664, 1e-05
    %v681 = vadd.f32 %v665, 1e-05
    %v682 = vadd.f32 %v666, 1e-05
    %v683 = vadd.f32 %v667, 1e-05
    %v684 = vadd.f32 %v668, 1e-05
    %v685 = vadd.f32 %v669, 1e-05
    %v686 = vadd.f32 %v670, 1e-05
    %v687 = vadd.f32 %v671, 1e-05
    %v688 = vadd.f32 %v672, 1e-05
    %v689 = vrsqrt.pop %v673
    %v690 = vrsqrt.pop %v674
    %v691 = vrsqrt.pop %v675
    %v692 = vrsqrt.pop %v676
    %v693 = vrsqrt.pop %v677
    %v694 = vrsqrt.pop %v678
    %v695 = vrsqrt.pop %v679
    %v696 = vrsqrt.pop %v680
    %v697 = vrsqrt.pop %v681
    %v698 = vrsqrt.pop %v682
    %v699 = vrsqrt.pop %v683
    %v700 = vrsqrt.pop %v684
    %v701 = vrsqrt.pop %v685
    %v702 = vrsqrt.pop %v686
    %v703 = vrsqrt.pop %v687
    %v704 = vrsqrt.pop %v688
    %v705 = vmul.f32 %v593, %v689
    %v706 = vmul.f32 %v594, %v690
    %v707 = vmul.f32 %v595, %v691
    %v708 = vmul.f32 %v596, %v692
    %v709 = vmul.f32 %v597, %v693
    %v710 = vmul.f32 %v598, %v694
    %v711 = vmul.f32 %v599, %v695
    %v712 = vmul.f32 %v600, %v696
    %v713 = vmul.f32 %v601, %v697
    %v714 = vmul.f32 %v602, %v698
    %v715 = vmul.f32 %v603, %v699
    %v716 = vmul.f32 %v604, %v700
    %v717 = vmul.f32 %v605, %v701
    %v718 = vmul.f32 %v606, %v702
    %v719 = vmul.f32 %v607, %v703
    %v720 = vmul.f32 %v608, %v704
    %v721 = vld [vmem:[%s4] sm:$0x1]
    %v723 = vlaneseq
    %v724 = vshrl.u32 %v723, 7
    %v725 = vsub.s32 0, %v724
    %v726 = vrot.slane %v721, %v725
    %v728 = vmul.f32 %v705, %v726
    %v729 = vmul.f32 %v706, %v726
    %v730 = vmul.f32 %v707, %v726
    %v731 = vmul.f32 %v708, %v726
    %v732 = vmul.f32 %v709, %v726
    %v733 = vmul.f32 %v710, %v726
    %v734 = vmul.f32 %v711, %v726
    %v735 = vmul.f32 %v712, %v726
    %v736 = vmul.f32 %v713, %v726
    %v737 = vmul.f32 %v714, %v726
    %v738 = vmul.f32 %v715, %v726
    %v739 = vmul.f32 %v716, %v726
    %v740 = vmul.f32 %v717, %v726
    %v741 = vmul.f32 %v718, %v726
    %v742 = vmul.f32 %v719, %v726
    %v743 = vmul.f32 %v720, %v726
    %v744 = vld [vmem:[%s5] sm:$0x1]
    %v746 = vlaneseq
    %v747 = vshrl.u32 %v746, 7
    %v748 = vsub.s32 0, %v747
    %v749 = vrot.slane %v744, %v748
    %v751 = vadd.f32 %v728, %v749
    %v752 = vadd.f32 %v729, %v749
    %v753 = vadd.f32 %v730, %v749
    %v754 = vadd.f32 %v731, %v749
    %v755 = vadd.f32 %v732, %v749
    %v756 = vadd.f32 %v733, %v749
    %v757 = vadd.f32 %v734, %v749
    %v758 = vadd.f32 %v735, %v749
    %v759 = vadd.f32 %v736, %v749
    %v760 = vadd.f32 %v737, %v749
    %v761 = vadd.f32 %v738, %v749
    %v762 = vadd.f32 %v739, %v749
    %v763 = vadd.f32 %v740, %v749
    %v764 = vadd.f32 %v741, %v749
    %v765 = vadd.f32 %v742, %v749
    %v766 = vadd.f32 %v743, %v749
    %s767 = scalar_lea.vmem [#allocation7], 128
    %v768 = vld [vmem:[%s767] sm:$0xff]
    %v769 = vld [vmem:[%s767 + $0x8] sm:$0xff]
    %v770 = vld [vmem:[%s767 + $0x10] sm:$0xff]
    %v771 = vld [vmem:[%s767 + $0x18] sm:$0xff]
    %v772 = vld [vmem:[%s767 + $0x20] sm:$0xff]
    %v773 = vld [vmem:[%s767 + $0x28] sm:$0xff]
    %v774 = vld [vmem:[%s767 + $0x30] sm:$0xff]
    %v775 = vld [vmem:[%s767 + $0x38] sm:$0xff]
    %v776 = vld [vmem:[%s767 + $0x40] sm:$0xff]
    %v777 = vld [vmem:[%s767 + $0x48] sm:$0xff]
    %v778 = vld [vmem:[%s767 + $0x50] sm:$0xff]
    %v779 = vld [vmem:[%s767 + $0x58] sm:$0xff]
    %v780 = vld [vmem:[%s767 + $0x60] sm:$0xff]
    %v781 = vld [vmem:[%s767 + $0x68] sm:$0xff]
    %v782 = vld [vmem:[%s767 + $0x70] sm:$0xff]
    %v783 = vld [vmem:[%s767 + $0x78] sm:$0xff]
    %784 = vmatprep.subr.mxu0 0.0
    %785 = vmatpush1.msra.mxu0 %v768
    %786 = vmatprep.subr.mxu0 0.0
    %787 = vmatpush1.msra.mxu0 %v769
    %788 = vmatprep.subr.mxu0 0.0
    %789 = vmatpush1.msra.mxu0 %v770
    %790 = vmatprep.subr.mxu0 0.0
    %791 = vmatpush1.msra.mxu0 %v771
    %792 = vmatprep.subr.mxu0 0.0
    %793 = vmatpush1.msra.mxu0 %v772
    %794 = vmatprep.subr.mxu0 0.0
    %795 = vmatpush1.msra.mxu0 %v773
    %796 = vmatprep.subr.mxu0 0.0
    %797 = vmatpush1.msra.mxu0 %v774
    %798 = vmatprep.subr.mxu0 0.0
    %799 = vmatpush1.msra.mxu0 %v775
    %800 = vmatprep.subr.mxu0 0.0
    %801 = vmatpush1.msra.mxu0 %v776
    %802 = vmatprep.subr.mxu0 0.0
    %803 = vmatpush1.msra.mxu0 %v777
    %804 = vmatprep.subr.mxu0 0.0
    %805 = vmatpush1.msra.mxu0 %v778
    %806 = vmatprep.subr.mxu0 0.0
    %807 = vmatpush1.msra.mxu0 %v779
    %808 = vmatprep.subr.mxu0 0.0
    %809 = vmatpush1.msra.mxu0 %v780
    %810 = vmatprep.subr.mxu0 0.0
    %811 = vmatpush1.msra.mxu0 %v781
    %812 = vmatprep.subr.mxu0 0.0
    %813 = vmatpush1.msra.mxu0 %v782
    %814 = vmatprep.subr.mxu0 0.0
    %815 = vmatpush1.msra.mxu0 %v783
    %816 = vmatprep.subr.mxu0 0.0
    %817 = vmatpush1.msra.mxu0 0.0
    %818 = vmatprep.subr.mxu0 0.0
    %819 = vmatpush1.msra.mxu0 0.0
    %820 = vmatprep.subr.mxu0 0.0
    %821 = vmatpush1.msra.mxu0 0.0
    %822 = vmatprep.subr.mxu0 0.0
    %823 = vmatpush1.msra.mxu0 0.0
    %824 = vmatprep.subr.mxu0 0.0
    %825 = vmatpush1.msra.mxu0 0.0
    %826 = vmatprep.subr.mxu0 0.0
    %827 = vmatpush1.msra.mxu0 0.0
    %828 = vmatprep.subr.mxu0 0.0
    %829 = vmatpush1.msra.mxu0 0.0
    %830 = vmatprep.subr.mxu0 0.0
    %831 = vmatpush1.msra.mxu0 0.0
    %832 = vmatprep.subr.mxu0 0.0
    %833 = vmatpush1.msra.mxu0 0.0
    %834 = vmatprep.subr.mxu0 0.0
    %835 = vmatpush1.msra.mxu0 0.0
    %836 = vmatprep.subr.mxu0 0.0
    %837 = vmatpush1.msra.mxu0 0.0
    %838 = vmatprep.subr.mxu0 0.0
    %839 = vmatpush1.msra.mxu0 0.0
    %840 = vmatprep.subr.mxu0 0.0
    %841 = vmatpush1.msra.mxu0 0.0
    %842 = vmatprep.subr.mxu0 0.0
    %843 = vmatpush1.msra.mxu0 0.0
    %844 = vmatprep.subr.mxu0 0.0
    %845 = vmatpush1.msra.mxu0 0.0
    %846 = vmatprep.subr.mxu0 0.0
    %847 = vmatpush1.msra.mxu0 0.0
    %848 = vmatprep.mubr.f32.mxu0 0.0
    %849 = vmatmul.mubr.f32.gmra.mrb[0].mxu0 %v751
    %v850 = vpop.f32.mrb[0].mxu0
    %v851 = vadd.f32 0.0, %v850
    %v852 = vpop.f32.mrb[0].mxu0
    %853 = vmatprep.mubr.f32.mxu0 0.0
    %854 = vmatmul.mubr.f32.gmra.mrb[0].mxu0 %v752
    %v855 = vpop.f32.mrb[0].mxu0
    %v856 = vadd.f32 0.0, %v855
    %v857 = vpop.f32.mrb[0].mxu0
    %858 = vmatprep.mubr.f32.mxu0 0.0
    %859 = vmatmul.mubr.f32.gmra.mrb[0].mxu0 %v753
    %v860 = vpop.f32.mrb[0].mxu0
    %v861 = vadd.f32 0.0, %v860
    %v862 = vpop.f32.mrb[0].mxu0
    %863 = vmatprep.mubr.f32.mxu0 0.0
    %864 = vmatmul.mubr.f32.gmra.mrb[0].mxu0 %v754
    %v865 = vpop.f32.mrb[0].mxu0
    %v866 = vadd.f32 0.0, %v865
    %v867 = vpop.f32.mrb[0].mxu0
    %868 = vmatprep.mubr.f32.mxu0 0.0
    %869 = vmatmul.mubr.f32.gmra.mrb[0].mxu0 %v755
    %v870 = vpop.f32.mrb[0].mxu0
    %v871 = vadd.f32 0.0, %v870
    %v872 = vpop.f32.mrb[0].mxu0
    %873 = vmatprep.mubr.f32.mxu0 0.0
    %874 = vmatmul.mubr.f32.gmra.mrb[0].mxu0 %v756
    %v875 = vpop.f32.mrb[0].mxu0
    %v876 = vadd.f32 0.0, %v875
    %v877 = vpop.f32.mrb[0].mxu0
    %878 = vmatprep.mubr.f32.mxu0 0.0
    %879 = vmatmul.mubr.f32.gmra.mrb[0].mxu0 %v757
    %v880 = vpop.f32.mrb[0].mxu0
    %v881 = vadd.f32 0.0, %v880
    %v882 = vpop.f32.mrb[0].mxu0
    %883 = vmatprep.mubr.f32.mxu0 0.0
    %884 = vmatmul.mubr.f32.gmra.mrb[0].mxu0 %v758
    %v885 = vpop.f32.mrb[0].mxu0
    %v886 = vadd.f32 0.0, %v885
    %v887 = vpop.f32.mrb[0].mxu0
    %888 = vmatprep.mubr.f32.mxu0 0.0
    %889 = vmatmul.mubr.f32.gmra.mrb[0].mxu0 %v759
    %v890 = vpop.f32.mrb[0].mxu0
    %v891 = vadd.f32 0.0, %v890
    %v892 = vpop.f32.mrb[0].mxu0
    %893 = vmatprep.mubr.f32.mxu0 0.0
    %894 = vmatmul.mubr.f32.gmra.mrb[0].mxu0 %v760
    %v895 = vpop.f32.mrb[0].mxu0
    %v896 = vadd.f32 0.0, %v895
    %v897 = vpop.f32.mrb[0].mxu0
    %898 = vmatprep.mubr.f32.mxu0 0.0
    %899 = vmatmul.mubr.f32.gmra.mrb[0].mxu0 %v761
    %v900 = vpop.f32.mrb[0].mxu0
    %v901 = vadd.f32 0.0, %v900
    %v902 = vpop.f32.mrb[0].mxu0
    %903 = vmatprep.mubr.f32.mxu0 0.0
    %904 = vmatmul.mubr.f32.gmra.mrb[0].mxu0 %v762
    %v905 = vpop.f32.mrb[0].mxu0
    %v906 = vadd.f32 0.0, %v905
    %v907 = vpop.f32.mrb[0].mxu0
    %908 = vmatprep.mubr.f32.mxu0 0.0
    %909 = vmatmul.mubr.f32.gmra.mrb[0].mxu0 %v763
    %v910 = vpop.f32.mrb[0].mxu0
    %v911 = vadd.f32 0.0, %v910
    %v912 = vpop.f32.mrb[0].mxu0
    %913 = vmatprep.mubr.f32.mxu0 0.0
    %914 = vmatmul.mubr.f32.gmra.mrb[0].mxu0 %v764
    %v915 = vpop.f32.mrb[0].mxu0
    %v916 = vadd.f32 0.0, %v915
    %v917 = vpop.f32.mrb[0].mxu0
    %918 = vmatprep.mubr.f32.mxu0 0.0
    %919 = vmatmul.mubr.f32.gmra.mrb[0].mxu0 %v765
    %v920 = vpop.f32.mrb[0].mxu0
    %v921 = vadd.f32 0.0, %v920
    %v922 = vpop.f32.mrb[0].mxu0
    %923 = vmatprep.mubr.f32.mxu0 0.0
    %924 = vmatmul.mubr.f32.gmra.mrb[0].mxu0 %v766
    %v925 = vpop.f32.mrb[0].mxu0
    %v926 = vadd.f32 0.0, %v925
    %v927 = vpop.f32.mrb[0].mxu0
    %928 = vdwg.mxu0
    %v929 = vpack.c.bf16 %v856, %v851
    %v930 = vpack.c.bf16 %v866, %v861
    %v931 = vpack.c.bf16 %v876, %v871
    %v932 = vpack.c.bf16 %v886, %v881
    %v933 = vpack.c.bf16 %v896, %v891
    %v934 = vpack.c.bf16 %v906, %v901
    %v935 = vpack.c.bf16 %v916, %v911
    %v936 = vpack.c.bf16 %v926, %v921
    %s937 = scalar_lea.vmem %s3, 1
    %v938 = vld [vmem:[%s937] sm:$0x1]
    %v940 = vlaneseq
    %v941 = vshrl.u32 %v940, 7
    %v942 = vsub.s32 0, %v941
    %v943 = vrot.slane %v938, %v942
    %945 = vmatprep.subr.bf16.mxu0 0
    %946 = vmatpush1.bf16.msra.mxu0 %v929
    %947 = vmatprep.subr.bf16.mxu0 0
    %948 = vmatpush1.bf16.msra.mxu0 %v930
    %949 = vmatprep.subr.bf16.mxu0 0
    %950 = vmatpush1.bf16.msra.mxu0 %v931
    %951 = vmatprep.subr.bf16.mxu0 0
    %952 = vmatpush1.bf16.msra.mxu0 %v932
    %953 = vmatprep.subr.bf16.mxu0 0
    %954 = vmatpush1.bf16.msra.mxu0 %v933
    %955 = vmatprep.subr.bf16.mxu0 0
    %956 = vmatpush1.bf16.msra.mxu0 %v934
    %957 = vmatprep.subr.bf16.mxu0 0
    %958 = vmatpush1.bf16.msra.mxu0 %v935
    %959 = vmatprep.subr.bf16.mxu0 0
    %960 = vmatpush1.bf16.msra.mxu0 %v936
    %961 = vmatprep.subr.bf16.mxu0 0
    %962 = vmatpush1.bf16.msra.mxu0 0
    %963 = vmatprep.subr.bf16.mxu0 0
    %964 = vmatpush1.bf16.msra.mxu0 0
    %965 = vmatprep.subr.bf16.mxu0 0
    %966 = vmatpush1.bf16.msra.mxu0 0
    %967 = vmatprep.subr.bf16.mxu0 0
    %968 = vmatpush1.bf16.msra.mxu0 0
    %969 = vmatprep.subr.bf16.mxu0 0
    %970 = vmatpush1.bf16.msra.mxu0 0
    %971 = vmatprep.subr.bf16.mxu0 0
    %972 = vmatpush1.bf16.msra.mxu0 0
    %973 = vmatprep.subr.bf16.mxu0 0
    %974 = vmatpush1.bf16.msra.mxu0 0
    %975 = vmatprep.subr.bf16.mxu0 0
    %976 = vmatpush1.bf16.msra.mxu0 0
    %977 = vmatprep.mubr.bf16.mxu0 0
    %978 = vmatmul.mubr.bf16.gmra.mrb[0].mxu0 %v400
    %v979 = vpop.f32.mrb[0].mxu0
    %v980 = vadd.f32 %v943, %v979
    %v981 = vpop.f32.mrb[0].mxu0
    %v982 = vpop.f32.mrb[0].mxu0
    %v983 = vadd.f32 %v943, %v982
    %v984 = vpop.f32.mrb[0].mxu0
    %985 = vmatprep.mubr.bf16.mxu0 0
    %986 = vmatmul.mubr.bf16.gmra.mrb[0].mxu0 %v401
    %v987 = vpop.f32.mrb[0].mxu0
    %v988 = vadd.f32 %v943, %v987
    %v989 = vpop.f32.mrb[0].mxu0
    %v990 = vpop.f32.mrb[0].mxu0
    %v991 = vadd.f32 %v943, %v990
    %v992 = vpop.f32.mrb[0].mxu0
    %993 = vmatprep.mubr.bf16.mxu0 0
    %994 = vmatmul.mubr.bf16.gmra.mrb[0].mxu0 %v402
    %v995 = vpop.f32.mrb[0].mxu0
    %v996 = vadd.f32 %v943, %v995
    %v997 = vpop.f32.mrb[0].mxu0
    %v998 = vpop.f32.mrb[0].mxu0
    %v999 = vadd.f32 %v943, %v998
    %v1000 = vpop.f32.mrb[0].mxu0
    %1001 = vmatprep.mubr.bf16.mxu0 0
    %1002 = vmatmul.mubr.bf16.gmra.mrb[0].mxu0 %v403
    %v1003 = vpop.f32.mrb[0].mxu0
    %v1004 = vadd.f32 %v943, %v1003
    %v1005 = vpop.f32.mrb[0].mxu0
    %v1006 = vpop.f32.mrb[0].mxu0
    %v1007 = vadd.f32 %v943, %v1006
    %v1008 = vpop.f32.mrb[0].mxu0
    %1009 = vmatprep.mubr.bf16.mxu0 0
    %1010 = vmatmul.mubr.bf16.gmra.mrb[0].mxu0 %v404
    %v1011 = vpop.f32.mrb[0].mxu0
    %v1012 = vadd.f32 %v943, %v1011
    %v1013 = vpop.f32.mrb[0].mxu0
    %v1014 = vpop.f32.mrb[0].mxu0
    %v1015 = vadd.f32 %v943, %v1014
    %v1016 = vpop.f32.mrb[0].mxu0
    %1017 = vmatprep.mubr.bf16.mxu0 0
    %1018 = vmatmul.mubr.bf16.gmra.mrb[0].mxu0 %v405
    %v1019 = vpop.f32.mrb[0].mxu0
    %v1020 = vadd.f32 %v943, %v1019
    %v1021 = vpop.f32.mrb[0].mxu0
    %v1022 = vpop.f32.mrb[0].mxu0
    %v1023 = vadd.f32 %v943, %v1022
    %v1024 = vpop.f32.mrb[0].mxu0
    %1025 = vmatprep.mubr.bf16.mxu0 0
    %1026 = vmatmul.mubr.bf16.gmra.mrb[0].mxu0 %v406
    %v1027 = vpop.f32.mrb[0].mxu0
    %v1028 = vadd.f32 %v943, %v1027
    %v1029 = vpop.f32.mrb[0].mxu0
    %v1030 = vpop.f32.mrb[0].mxu0
    %v1031 = vadd.f32 %v943, %v1030
    %v1032 = vpop.f32.mrb[0].mxu0
    %1033 = vmatprep.mubr.bf16.mxu0 0
    %1034 = vmatmul.mubr.bf16.gmra.mrb[0].mxu0 %v407
    %v1035 = vpop.f32.mrb[0].mxu0
    %v1036 = vadd.f32 %v943, %v1035
    %v1037 = vpop.f32.mrb[0].mxu0
    %v1038 = vpop.f32.mrb[0].mxu0
    %v1039 = vadd.f32 %v943, %v1038
    %v1040 = vpop.f32.mrb[0].mxu0
    %1041 = vdwg.mxu0
    %v1042 = vmax.f32 %v980, 0.0
    %v1043 = vmax.f32 %v983, 0.0
    %v1044 = vmax.f32 %v988, 0.0
    %v1045 = vmax.f32 %v991, 0.0
    %v1046 = vmax.f32 %v996, 0.0
    %v1047 = vmax.f32 %v999, 0.0
    %v1048 = vmax.f32 %v1004, 0.0
    %v1049 = vmax.f32 %v1007, 0.0
    %v1050 = vmax.f32 %v1012, 0.0
    %v1051 = vmax.f32 %v1015, 0.0
    %v1052 = vmax.f32 %v1020, 0.0
    %v1053 = vmax.f32 %v1023, 0.0
    %v1054 = vmax.f32 %v1028, 0.0
    %v1055 = vmax.f32 %v1031, 0.0
    %v1056 = vmax.f32 %v1036, 0.0
    %v1057 = vmax.f32 %v1039, 0.0
    %1058 = vadd.xlane.f32.xlu0 %v1042
    %v1059 = vpop.xlane.xlu0 %1058
    %1060 = vadd.xlane.f32.xlu0 %v1043
    %v1061 = vpop.xlane.xlu0 %1060
    %1062 = vadd.xlane.f32.xlu0 %v1044
    %v1063 = vpop.xlane.xlu0 %1062
    %1064 = vadd.xlane.f32.xlu0 %v1045
    %v1065 = vpop.xlane.xlu0 %1064
    %1066 = vadd.xlane.f32.xlu0 %v1046
    %v1067 = vpop.xlane.xlu0 %1066
    %1068 = vadd.xlane.f32.xlu0 %v1047
    %v1069 = vpop.xlane.xlu0 %1068
    %1070 = vadd.xlane.f32.xlu0 %v1048
    %v1071 = vpop.xlane.xlu0 %1070
    %1072 = vadd.xlane.f32.xlu0 %v1049
    %v1073 = vpop.xlane.xlu0 %1072
    %1074 = vadd.xlane.f32.xlu0 %v1050
    %v1075 = vpop.xlane.xlu0 %1074
    %1076 = vadd.xlane.f32.xlu0 %v1051
    %v1077 = vpop.xlane.xlu0 %1076
    %1078 = vadd.xlane.f32.xlu0 %v1052
    %v1079 = vpop.xlane.xlu0 %1078
    %1080 = vadd.xlane.f32.xlu0 %v1053
    %v1081 = vpop.xlane.xlu0 %1080
    %1082 = vadd.xlane.f32.xlu0 %v1054
    %v1083 = vpop.xlane.xlu0 %1082
    %1084 = vadd.xlane.f32.xlu0 %v1055
    %v1085 = vpop.xlane.xlu0 %1084
    %1086 = vadd.xlane.f32.xlu0 %v1056
    %v1087 = vpop.xlane.xlu0 %1086
    %1088 = vadd.xlane.f32.xlu0 %v1057
    %v1089 = vpop.xlane.xlu0 %1088
    %v1090 = vmul.f32 %v1059, 0.03125
    %v1091 = vmul.f32 %v1061, 0.03125
    %v1092 = vmul.f32 %v1063, 0.03125
    %v1093 = vmul.f32 %v1065, 0.03125
    %v1094 = vmul.f32 %v1067, 0.03125
    %v1095 = vmul.f32 %v1069, 0.03125
    %v1096 = vmul.f32 %v1071, 0.03125
    %v1097 = vmul.f32 %v1073, 0.03125
    %v1098 = vmul.f32 %v1075, 0.03125
    %v1099 = vmul.f32 %v1077, 0.03125
    %v1100 = vmul.f32 %v1079, 0.03125
    %v1101 = vmul.f32 %v1081, 0.03125
    %v1102 = vmul.f32 %v1083, 0.03125
    %v1103 = vmul.f32 %v1085, 0.03125
    %v1104 = vmul.f32 %v1087, 0.03125
    %v1105 = vmul.f32 %v1089, 0.03125
    %v1106 = vsub.f32 %v1042, %v1090
    %v1107 = vsub.f32 %v1043, %v1091
    %v1108 = vsub.f32 %v1044, %v1092
    %v1109 = vsub.f32 %v1045, %v1093
    %v1110 = vsub.f32 %v1046, %v1094
    %v1111 = vsub.f32 %v1047, %v1095
    %v1112 = vsub.f32 %v1048, %v1096
    %v1113 = vsub.f32 %v1049, %v1097
    %v1114 = vsub.f32 %v1050, %v1098
    %v1115 = vsub.f32 %v1051, %v1099
    %v1116 = vsub.f32 %v1052, %v1100
    %v1117 = vsub.f32 %v1053, %v1101
    %v1118 = vsub.f32 %v1054, %v1102
    %v1119 = vsub.f32 %v1055, %v1103
    %v1120 = vsub.f32 %v1056, %v1104
    %v1121 = vsub.f32 %v1057, %v1105
    %v1122 = vmul.f32 %v1106, %v191
    %v1123 = vmul.f32 %v1107, %v191
    %v1124 = vmul.f32 %v1108, %v191
    %v1125 = vmul.f32 %v1109, %v191
    %v1126 = vmul.f32 %v1110, %v191
    %v1127 = vmul.f32 %v1111, %v191
    %v1128 = vmul.f32 %v1112, %v191
    %v1129 = vmul.f32 %v1113, %v191
    %v1130 = vmul.f32 %v1114, %v191
    %v1131 = vmul.f32 %v1115, %v191
    %v1132 = vmul.f32 %v1116, %v191
    %v1133 = vmul.f32 %v1117, %v191
    %v1134 = vmul.f32 %v1118, %v191
    %v1135 = vmul.f32 %v1119, %v191
    %v1136 = vmul.f32 %v1120, %v191
    %v1137 = vmul.f32 %v1121, %v191
    %v1138 = vmul.f32 %v1122, %v1122
    %v1139 = vmul.f32 %v1123, %v1123
    %v1140 = vmul.f32 %v1124, %v1124
    %v1141 = vmul.f32 %v1125, %v1125
    %v1142 = vmul.f32 %v1126, %v1126
    %v1143 = vmul.f32 %v1127, %v1127
    %v1144 = vmul.f32 %v1128, %v1128
    %v1145 = vmul.f32 %v1129, %v1129
    %v1146 = vmul.f32 %v1130, %v1130
    %v1147 = vmul.f32 %v1131, %v1131
    %v1148 = vmul.f32 %v1132, %v1132
    %v1149 = vmul.f32 %v1133, %v1133
    %v1150 = vmul.f32 %v1134, %v1134
    %v1151 = vmul.f32 %v1135, %v1135
    %v1152 = vmul.f32 %v1136, %v1136
    %v1153 = vmul.f32 %v1137, %v1137
    %1154 = vadd.xlane.f32.xlu0 %v1138
    %v1155 = vpop.xlane.xlu0 %1154
    %1156 = vadd.xlane.f32.xlu0 %v1139
    %v1157 = vpop.xlane.xlu0 %1156
    %1158 = vadd.xlane.f32.xlu0 %v1140
    %v1159 = vpop.xlane.xlu0 %1158
    %1160 = vadd.xlane.f32.xlu0 %v1141
    %v1161 = vpop.xlane.xlu0 %1160
    %1162 = vadd.xlane.f32.xlu0 %v1142
    %v1163 = vpop.xlane.xlu0 %1162
    %1164 = vadd.xlane.f32.xlu0 %v1143
    %v1165 = vpop.xlane.xlu0 %1164
    %1166 = vadd.xlane.f32.xlu0 %v1144
    %v1167 = vpop.xlane.xlu0 %1166
    %1168 = vadd.xlane.f32.xlu0 %v1145
    %v1169 = vpop.xlane.xlu0 %1168
    %1170 = vadd.xlane.f32.xlu0 %v1146
    %v1171 = vpop.xlane.xlu0 %1170
    %1172 = vadd.xlane.f32.xlu0 %v1147
    %v1173 = vpop.xlane.xlu0 %1172
    %1174 = vadd.xlane.f32.xlu0 %v1148
    %v1175 = vpop.xlane.xlu0 %1174
    %1176 = vadd.xlane.f32.xlu0 %v1149
    %v1177 = vpop.xlane.xlu0 %1176
    %1178 = vadd.xlane.f32.xlu0 %v1150
    %v1179 = vpop.xlane.xlu0 %1178
    %1180 = vadd.xlane.f32.xlu0 %v1151
    %v1181 = vpop.xlane.xlu0 %1180
    %1182 = vadd.xlane.f32.xlu0 %v1152
    %v1183 = vpop.xlane.xlu0 %1182
    %1184 = vadd.xlane.f32.xlu0 %v1153
    %v1185 = vpop.xlane.xlu0 %1184
    %v1186 = vmul.f32 %v1155, 0.03125
    %v1187 = vmul.f32 %v1157, 0.03125
    %v1188 = vmul.f32 %v1159, 0.03125
    %v1189 = vmul.f32 %v1161, 0.03125
    %v1190 = vmul.f32 %v1163, 0.03125
    %v1191 = vmul.f32 %v1165, 0.03125
    %v1192 = vmul.f32 %v1167, 0.03125
    %v1193 = vmul.f32 %v1169, 0.03125
    %v1194 = vmul.f32 %v1171, 0.03125
    %v1195 = vmul.f32 %v1173, 0.03125
    %v1196 = vmul.f32 %v1175, 0.03125
    %v1197 = vmul.f32 %v1177, 0.03125
    %v1198 = vmul.f32 %v1179, 0.03125
    %v1199 = vmul.f32 %v1181, 0.03125
    %v1200 = vmul.f32 %v1183, 0.03125
    %v1201 = vmul.f32 %v1185, 0.03125
    %v1202 = vadd.f32 %v1186, 1e-05
    %v1203 = vadd.f32 %v1187, 1e-05
    %v1204 = vadd.f32 %v1188, 1e-05
    %v1205 = vadd.f32 %v1189, 1e-05
    %v1206 = vadd.f32 %v1190, 1e-05
    %v1207 = vadd.f32 %v1191, 1e-05
    %v1208 = vadd.f32 %v1192, 1e-05
    %v1209 = vadd.f32 %v1193, 1e-05
    %v1210 = vadd.f32 %v1194, 1e-05
    %v1211 = vadd.f32 %v1195, 1e-05
    %v1212 = vadd.f32 %v1196, 1e-05
    %v1213 = vadd.f32 %v1197, 1e-05
    %v1214 = vadd.f32 %v1198, 1e-05
    %v1215 = vadd.f32 %v1199, 1e-05
    %v1216 = vadd.f32 %v1200, 1e-05
    %v1217 = vadd.f32 %v1201, 1e-05
    %v1218 = vrsqrt.pop %v1202
    %v1219 = vrsqrt.pop %v1203
    %v1220 = vrsqrt.pop %v1204
    %v1221 = vrsqrt.pop %v1205
    %v1222 = vrsqrt.pop %v1206
    %v1223 = vrsqrt.pop %v1207
    %v1224 = vrsqrt.pop %v1208
    %v1225 = vrsqrt.pop %v1209
    %v1226 = vrsqrt.pop %v1210
    %v1227 = vrsqrt.pop %v1211
    %v1228 = vrsqrt.pop %v1212
    %v1229 = vrsqrt.pop %v1213
    %v1230 = vrsqrt.pop %v1214
    %v1231 = vrsqrt.pop %v1215
    %v1232 = vrsqrt.pop %v1216
    %v1233 = vrsqrt.pop %v1217
    %v1234 = vmul.f32 %v1122, %v1218
    %v1235 = vmul.f32 %v1123, %v1219
    %v1236 = vmul.f32 %v1124, %v1220
    %v1237 = vmul.f32 %v1125, %v1221
    %v1238 = vmul.f32 %v1126, %v1222
    %v1239 = vmul.f32 %v1127, %v1223
    %v1240 = vmul.f32 %v1128, %v1224
    %v1241 = vmul.f32 %v1129, %v1225
    %v1242 = vmul.f32 %v1130, %v1226
    %v1243 = vmul.f32 %v1131, %v1227
    %v1244 = vmul.f32 %v1132, %v1228
    %v1245 = vmul.f32 %v1133, %v1229
    %v1246 = vmul.f32 %v1134, %v1230
    %v1247 = vmul.f32 %v1135, %v1231
    %v1248 = vmul.f32 %v1136, %v1232
    %v1249 = vmul.f32 %v1137, %v1233
    %s1250 = scalar_lea.vmem %s4, 1
    %v1251 = vld [vmem:[%s1250] sm:$0x1]
    %v1253 = vlaneseq
    %v1254 = vshrl.u32 %v1253, 7
    %v1255 = vsub.s32 0, %v1254
    %v1256 = vrot.slane %v1251, %v1255
    %v1258 = vmul.f32 %v1234, %v1256
    %v1259 = vmul.f32 %v1235, %v1256
    %v1260 = vmul.f32 %v1236, %v1256
    %v1261 = vmul.f32 %v1237, %v1256
    %v1262 = vmul.f32 %v1238, %v1256
    %v1263 = vmul.f32 %v1239, %v1256
    %v1264 = vmul.f32 %v1240, %v1256
    %v1265 = vmul.f32 %v1241, %v1256
    %v1266 = vmul.f32 %v1242, %v1256
    %v1267 = vmul.f32 %v1243, %v1256
    %v1268 = vmul.f32 %v1244, %v1256
    %v1269 = vmul.f32 %v1245, %v1256
    %v1270 = vmul.f32 %v1246, %v1256
    %v1271 = vmul.f32 %v1247, %v1256
    %v1272 = vmul.f32 %v1248, %v1256
    %v1273 = vmul.f32 %v1249, %v1256
    %s1274 = scalar_lea.vmem %s5, 1
    %v1275 = vld [vmem:[%s1274] sm:$0x1]
    %v1277 = vlaneseq
    %v1278 = vshrl.u32 %v1277, 7
    %v1279 = vsub.s32 0, %v1278
    %v1280 = vrot.slane %v1275, %v1279
    %v1282 = vadd.f32 %v1258, %v1280
    %v1283 = vadd.f32 %v1259, %v1280
    %v1284 = vadd.f32 %v1260, %v1280
    %v1285 = vadd.f32 %v1261, %v1280
    %v1286 = vadd.f32 %v1262, %v1280
    %v1287 = vadd.f32 %v1263, %v1280
    %v1288 = vadd.f32 %v1264, %v1280
    %v1289 = vadd.f32 %v1265, %v1280
    %v1290 = vadd.f32 %v1266, %v1280
    %v1291 = vadd.f32 %v1267, %v1280
    %v1292 = vadd.f32 %v1268, %v1280
    %v1293 = vadd.f32 %v1269, %v1280
    %v1294 = vadd.f32 %v1270, %v1280
    %v1295 = vadd.f32 %v1271, %v1280
    %v1296 = vadd.f32 %v1272, %v1280
    %v1297 = vadd.f32 %v1273, %v1280
    %s1298 = scalar_lea.vmem [#allocation7], 256
    %v1299 = vld [vmem:[%s1298] sm:$0xff]
    %v1300 = vld [vmem:[%s1298 + $0x8] sm:$0xff]
    %v1301 = vld [vmem:[%s1298 + $0x10] sm:$0xff]
    %v1302 = vld [vmem:[%s1298 + $0x18] sm:$0xff]
    %v1303 = vld [vmem:[%s1298 + $0x20] sm:$0xff]
    %v1304 = vld [vmem:[%s1298 + $0x28] sm:$0xff]
    %v1305 = vld [vmem:[%s1298 + $0x30] sm:$0xff]
    %v1306 = vld [vmem:[%s1298 + $0x38] sm:$0xff]
    %v1307 = vld [vmem:[%s1298 + $0x40] sm:$0xff]
    %v1308 = vld [vmem:[%s1298 + $0x48] sm:$0xff]
    %v1309 = vld [vmem:[%s1298 + $0x50] sm:$0xff]
    %v1310 = vld [vmem:[%s1298 + $0x58] sm:$0xff]
    %v1311 = vld [vmem:[%s1298 + $0x60] sm:$0xff]
    %v1312 = vld [vmem:[%s1298 + $0x68] sm:$0xff]
    %v1313 = vld [vmem:[%s1298 + $0x70] sm:$0xff]
    %v1314 = vld [vmem:[%s1298 + $0x78] sm:$0xff]
    %1315 = vmatprep.subr.mxu0 0.0
    %1316 = vmatpush1.msra.mxu0 %v1299
    %1317 = vmatprep.subr.mxu0 0.0
    %1318 = vmatpush1.msra.mxu0 %v1300
    %1319 = vmatprep.subr.mxu0 0.0
    %1320 = vmatpush1.msra.mxu0 %v1301
    %1321 = vmatprep.subr.mxu0 0.0
    %1322 = vmatpush1.msra.mxu0 %v1302
    %1323 = vmatprep.subr.mxu0 0.0
    %1324 = vmatpush1.msra.mxu0 %v1303
    %1325 = vmatprep.subr.mxu0 0.0
    %1326 = vmatpush1.msra.mxu0 %v1304
    %1327 = vmatprep.subr.mxu0 0.0
    %1328 = vmatpush1.msra.mxu0 %v1305
    %1329 = vmatprep.subr.mxu0 0.0
    %1330 = vmatpush1.msra.mxu0 %v1306
    %1331 = vmatprep.subr.mxu0 0.0
    %1332 = vmatpush1.msra.mxu0 %v1307
    %1333 = vmatprep.subr.mxu0 0.0
    %1334 = vmatpush1.msra.mxu0 %v1308
    %1335 = vmatprep.subr.mxu0 0.0
    %1336 = vmatpush1.msra.mxu0 %v1309
    %1337 = vmatprep.subr.mxu0 0.0
    %1338 = vmatpush1.msra.mxu0 %v1310
    %1339 = vmatprep.subr.mxu0 0.0
    %1340 = vmatpush1.msra.mxu0 %v1311
    %1341 = vmatprep.subr.mxu0 0.0
    %1342 = vmatpush1.msra.mxu0 %v1312
    %1343 = vmatprep.subr.mxu0 0.0
    %1344 = vmatpush1.msra.mxu0 %v1313
    %1345 = vmatprep.subr.mxu0 0.0
    %1346 = vmatpush1.msra.mxu0 %v1314
    %1347 = vmatprep.subr.mxu0 0.0
    %1348 = vmatpush1.msra.mxu0 0.0
    %1349 = vmatprep.subr.mxu0 0.0
    %1350 = vmatpush1.msra.mxu0 0.0
    %1351 = vmatprep.subr.mxu0 0.0
    %1352 = vmatpush1.msra.mxu0 0.0
    %1353 = vmatprep.subr.mxu0 0.0
    %1354 = vmatpush1.msra.mxu0 0.0
    %1355 = vmatprep.subr.mxu0 0.0
    %1356 = vmatpush1.msra.mxu0 0.0
    %1357 = vmatprep.subr.mxu0 0.0
    %1358 = vmatpush1.msra.mxu0 0.0
    %1359 = vmatprep.subr.mxu0 0.0
    %1360 = vmatpush1.msra.mxu0 0.0
    %1361 = vmatprep.subr.mxu0 0.0
    %1362 = vmatpush1.msra.mxu0 0.0
    %1363 = vmatprep.subr.mxu0 0.0
    %1364 = vmatpush1.msra.mxu0 0.0
    %1365 = vmatprep.subr.mxu0 0.0
    %1366 = vmatpush1.msra.mxu0 0.0
    %1367 = vmatprep.subr.mxu0 0.0
    %1368 = vmatpush1.msra.mxu0 0.0
    %1369 = vmatprep.subr.mxu0 0.0
    %1370 = vmatpush1.msra.mxu0 0.0
    %1371 = vmatprep.subr.mxu0 0.0
    %1372 = vmatpush1.msra.mxu0 0.0
    %1373 = vmatprep.subr.mxu0 0.0
    %1374 = vmatpush1.msra.mxu0 0.0
    %1375 = vmatprep.subr.mxu0 0.0
    %1376 = vmatpush1.msra.mxu0 0.0
    %1377 = vmatprep.subr.mxu0 0.0
    %1378 = vmatpush1.msra.mxu0 0.0
    %1379 = vmatprep.mubr.f32.mxu0 0.0
    %1380 = vmatmul.mubr.f32.gmra.mrb[0].mxu0 %v1282
    %v1381 = vpop.f32.mrb[0].mxu0
    %v1382 = vadd.f32 0.0, %v1381
    %v1383 = vpop.f32.mrb[0].mxu0
    %1384 = vmatprep.mubr.f32.mxu0 0.0
    %1385 = vmatmul.mubr.f32.gmra.mrb[0].mxu0 %v1283
    %v1386 = vpop.f32.mrb[0].mxu0
    %v1387 = vadd.f32 0.0, %v1386
    %v1388 = vpop.f32.mrb[0].mxu0
    %1389 = vmatprep.mubr.f32.mxu0 0.0
    %1390 = vmatmul.mubr.f32.gmra.mrb[0].mxu0 %v1284
    %v1391 = vpop.f32.mrb[0].mxu0
    %v1392 = vadd.f32 0.0, %v1391
    %v1393 = vpop.f32.mrb[0].mxu0
    %1394 = vmatprep.mubr.f32.mxu0 0.0
    %1395 = vmatmul.mubr.f32.gmra.mrb[0].mxu0 %v1285
    %v1396 = vpop.f32.mrb[0].mxu0
    %v1397 = vadd.f32 0.0, %v1396
    %v1398 = vpop.f32.mrb[0].mxu0
    %1399 = vmatprep.mubr.f32.mxu0 0.0
    %1400 = vmatmul.mubr.f32.gmra.mrb[0].mxu0 %v1286
    %v1401 = vpop.f32.mrb[0].mxu0
    %v1402 = vadd.f32 0.0, %v1401
    %v1403 = vpop.f32.mrb[0].mxu0
    %1404 = vmatprep.mubr.f32.mxu0 0.0
    %1405 = vmatmul.mubr.f32.gmra.mrb[0].mxu0 %v1287
    %v1406 = vpop.f32.mrb[0].mxu0
    %v1407 = vadd.f32 0.0, %v1406
    %v1408 = vpop.f32.mrb[0].mxu0
    %1409 = vmatprep.mubr.f32.mxu0 0.0
    %1410 = vmatmul.mubr.f32.gmra.mrb[0].mxu0 %v1288
    %v1411 = vpop.f32.mrb[0].mxu0
    %v1412 = vadd.f32 0.0, %v1411
    %v1413 = vpop.f32.mrb[0].mxu0
    %1414 = vmatprep.mubr.f32.mxu0 0.0
    %1415 = vmatmul.mubr.f32.gmra.mrb[0].mxu0 %v1289
    %v1416 = vpop.f32.mrb[0].mxu0
    %v1417 = vadd.f32 0.0, %v1416
    %v1418 = vpop.f32.mrb[0].mxu0
    %1419 = vmatprep.mubr.f32.mxu0 0.0
    %1420 = vmatmul.mubr.f32.gmra.mrb[0].mxu0 %v1290
    %v1421 = vpop.f32.mrb[0].mxu0
    %v1422 = vadd.f32 0.0, %v1421
    %v1423 = vpop.f32.mrb[0].mxu0
    %1424 = vmatprep.mubr.f32.mxu0 0.0
    %1425 = vmatmul.mubr.f32.gmra.mrb[0].mxu0 %v1291
    %v1426 = vpop.f32.mrb[0].mxu0
    %v1427 = vadd.f32 0.0, %v1426
    %v1428 = vpop.f32.mrb[0].mxu0
    %1429 = vmatprep.mubr.f32.mxu0 0.0
    %1430 = vmatmul.mubr.f32.gmra.mrb[0].mxu0 %v1292
    %v1431 = vpop.f32.mrb[0].mxu0
    %v1432 = vadd.f32 0.0, %v1431
    %v1433 = vpop.f32.mrb[0].mxu0
    %1434 = vmatprep.mubr.f32.mxu0 0.0
    %1435 = vmatmul.mubr.f32.gmra.mrb[0].mxu0 %v1293
    %v1436 = vpop.f32.mrb[0].mxu0
    %v1437 = vadd.f32 0.0, %v1436
    %v1438 = vpop.f32.mrb[0].mxu0
    %1439 = vmatprep.mubr.f32.mxu0 0.0
    %1440 = vmatmul.mubr.f32.gmra.mrb[0].mxu0 %v1294
    %v1441 = vpop.f32.mrb[0].mxu0
    %v1442 = vadd.f32 0.0, %v1441
    %v1443 = vpop.f32.mrb[0].mxu0
    %1444 = vmatprep.mubr.f32.mxu0 0.0
    %1445 = vmatmul.mubr.f32.gmra.mrb[0].mxu0 %v1295
    %v1446 = vpop.f32.mrb[0].mxu0
    %v1447 = vadd.f32 0.0, %v1446
    %v1448 = vpop.f32.mrb[0].mxu0
    %1449 = vmatprep.mubr.f32.mxu0 0.0
    %1450 = vmatmul.mubr.f32.gmra.mrb[0].mxu0 %v1296
    %v1451 = vpop.f32.mrb[0].mxu0
    %v1452 = vadd.f32 0.0, %v1451
    %v1453 = vpop.f32.mrb[0].mxu0
    %1454 = vmatprep.mubr.f32.mxu0 0.0
    %1455 = vmatmul.mubr.f32.gmra.mrb[0].mxu0 %v1297
    %v1456 = vpop.f32.mrb[0].mxu0
    %v1457 = vadd.f32 0.0, %v1456
    %v1458 = vpop.f32.mrb[0].mxu0
    %1459 = vdwg.mxu0
    %v1460 = vpack.c.bf16 %v1387, %v1382
    %v1461 = vpack.c.bf16 %v1397, %v1392
    %v1462 = vpack.c.bf16 %v1407, %v1402
    %v1463 = vpack.c.bf16 %v1417, %v1412
    %v1464 = vpack.c.bf16 %v1427, %v1422
    %v1465 = vpack.c.bf16 %v1437, %v1432
    %v1466 = vpack.c.bf16 %v1447, %v1442
    %v1467 = vpack.c.bf16 %v1457, %v1452
    %s1468 = scalar_lea.vmem %s3, 2
    %v1469 = vld [vmem:[%s1468] sm:$0x1]
    %v1471 = vlaneseq
    %v1472 = vshrl.u32 %v1471, 7
    %v1473 = vsub.s32 0, %v1472
    %v1474 = vrot.slane %v1469, %v1473
    %1476 = vmatprep.subr.bf16.mxu0 0
    %1477 = vmatpush1.bf16.msra.mxu0 %v1460
    %1478 = vmatprep.subr.bf16.mxu0 0
    %1479 = vmatpush1.bf16.msra.mxu0 %v1461
    %1480 = vmatprep.subr.bf16.mxu0 0
    %1481 = vmatpush1.bf16.msra.mxu0 %v1462
    %1482 = vmatprep.subr.bf16.mxu0 0
    %1483 = vmatpush1.bf16.msra.mxu0 %v1463
    %1484 = vmatprep.subr.bf16.mxu0 0
    %1485 = vmatpush1.bf16.msra.mxu0 %v1464
    %1486 = vmatprep.subr.bf16.mxu0 0
    %1487 = vmatpush1.bf16.msra.mxu0 %v1465
    %1488 = vmatprep.subr.bf16.mxu0 0
    %1489 = vmatpush1.bf16.msra.mxu0 %v1466
    %1490 = vmatprep.subr.bf16.mxu0 0
    %1491 = vmatpush1.bf16.msra.mxu0 %v1467
    %1492 = vmatprep.subr.bf16.mxu0 0
    %1493 = vmatpush1.bf16.msra.mxu0 0
    %1494 = vmatprep.subr.bf16.mxu0 0
    %1495 = vmatpush1.bf16.msra.mxu0 0
    %1496 = vmatprep.subr.bf16.mxu0 0
    %1497 = vmatpush1.bf16.msra.mxu0 0
    %1498 = vmatprep.subr.bf16.mxu0 0
    %1499 = vmatpush1.bf16.msra.mxu0 0
    %1500 = vmatprep.subr.bf16.mxu0 0
    %1501 = vmatpush1.bf16.msra.mxu0 0
    %1502 = vmatprep.subr.bf16.mxu0 0
    %1503 = vmatpush1.bf16.msra.mxu0 0
    %1504 = vmatprep.subr.bf16.mxu0 0
    %1505 = vmatpush1.bf16.msra.mxu0 0
    %1506 = vmatprep.subr.bf16.mxu0 0
    %1507 = vmatpush1.bf16.msra.mxu0 0
    %1508 = vmatprep.mubr.bf16.mxu0 0
    %1509 = vmatmul.mubr.bf16.gmra.mrb[0].mxu0 %v400
    %v1510 = vpop.f32.mrb[0].mxu0
    %v1511 = vadd.f32 %v1474, %v1510
    %v1512 = vpop.f32.mrb[0].mxu0
    %v1513 = vpop.f32.mrb[0].mxu0
    %v1514 = vadd.f32 %v1474, %v1513
    %v1515 = vpop.f32.mrb[0].mxu0
    %1516 = vmatprep.mubr.bf16.mxu0 0
    %1517 = vmatmul.mubr.bf16.gmra.mrb[0].mxu0 %v401
    %v1518 = vpop.f32.mrb[0].mxu0
    %v1519 = vadd.f32 %v1474, %v1518
    %v1520 = vpop.f32.mrb[0].mxu0
    %v1521 = vpop.f32.mrb[0].mxu0
    %v1522 = vadd.f32 %v1474, %v1521
    %v1523 = vpop.f32.mrb[0].mxu0
    %1524 = vmatprep.mubr.bf16.mxu0 0
    %1525 = vmatmul.mubr.bf16.gmra.mrb[0].mxu0 %v402
    %v1526 = vpop.f32.mrb[0].mxu0
    %v1527 = vadd.f32 %v1474, %v1526
    %v1528 = vpop.f32.mrb[0].mxu0
    %v1529 = vpop.f32.mrb[0].mxu0
    %v1530 = vadd.f32 %v1474, %v1529
    %v1531 = vpop.f32.mrb[0].mxu0
    %1532 = vmatprep.mubr.bf16.mxu0 0
    %1533 = vmatmul.mubr.bf16.gmra.mrb[0].mxu0 %v403
    %v1534 = vpop.f32.mrb[0].mxu0
    %v1535 = vadd.f32 %v1474, %v1534
    %v1536 = vpop.f32.mrb[0].mxu0
    %v1537 = vpop.f32.mrb[0].mxu0
    %v1538 = vadd.f32 %v1474, %v1537
    %v1539 = vpop.f32.mrb[0].mxu0
    %1540 = vmatprep.mubr.bf16.mxu0 0
    %1541 = vmatmul.mubr.bf16.gmra.mrb[0].mxu0 %v404
    %v1542 = vpop.f32.mrb[0].mxu0
    %v1543 = vadd.f32 %v1474, %v1542
    %v1544 = vpop.f32.mrb[0].mxu0
    %v1545 = vpop.f32.mrb[0].mxu0
    %v1546 = vadd.f32 %v1474, %v1545
    %v1547 = vpop.f32.mrb[0].mxu0
    %1548 = vmatprep.mubr.bf16.mxu0 0
    %1549 = vmatmul.mubr.bf16.gmra.mrb[0].mxu0 %v405
    %v1550 = vpop.f32.mrb[0].mxu0
    %v1551 = vadd.f32 %v1474, %v1550
    %v1552 = vpop.f32.mrb[0].mxu0
    %v1553 = vpop.f32.mrb[0].mxu0
    %v1554 = vadd.f32 %v1474, %v1553
    %v1555 = vpop.f32.mrb[0].mxu0
    %1556 = vmatprep.mubr.bf16.mxu0 0
    %1557 = vmatmul.mubr.bf16.gmra.mrb[0].mxu0 %v406
    %v1558 = vpop.f32.mrb[0].mxu0
    %v1559 = vadd.f32 %v1474, %v1558
    %v1560 = vpop.f32.mrb[0].mxu0
    %v1561 = vpop.f32.mrb[0].mxu0
    %v1562 = vadd.f32 %v1474, %v1561
    %v1563 = vpop.f32.mrb[0].mxu0
    %1564 = vmatprep.mubr.bf16.mxu0 0
    %1565 = vmatmul.mubr.bf16.gmra.mrb[0].mxu0 %v407
    %v1566 = vpop.f32.mrb[0].mxu0
    %v1567 = vadd.f32 %v1474, %v1566
    %v1568 = vpop.f32.mrb[0].mxu0
    %v1569 = vpop.f32.mrb[0].mxu0
    %v1570 = vadd.f32 %v1474, %v1569
    %v1571 = vpop.f32.mrb[0].mxu0
    %1572 = vdwg.mxu0
    %v1573 = vmax.f32 %v1511, 0.0
    %v1574 = vmax.f32 %v1514, 0.0
    %v1575 = vmax.f32 %v1519, 0.0
    %v1576 = vmax.f32 %v1522, 0.0
    %v1577 = vmax.f32 %v1527, 0.0
    %v1578 = vmax.f32 %v1530, 0.0
    %v1579 = vmax.f32 %v1535, 0.0
    %v1580 = vmax.f32 %v1538, 0.0
    %v1581 = vmax.f32 %v1543, 0.0
    %v1582 = vmax.f32 %v1546, 0.0
    %v1583 = vmax.f32 %v1551, 0.0
    %v1584 = vmax.f32 %v1554, 0.0
    %v1585 = vmax.f32 %v1559, 0.0
    %v1586 = vmax.f32 %v1562, 0.0
    %v1587 = vmax.f32 %v1567, 0.0
    %v1588 = vmax.f32 %v1570, 0.0
    %v1589 = vld [vmem:[#allocation11] sm:$0xff]
    %v1590 = vld [vmem:[#allocation11 + $0x8] sm:$0xff]
    %v1591 = vld [vmem:[#allocation11 + $0x10] sm:$0xff]
    %v1592 = vld [vmem:[#allocation11 + $0x18] sm:$0xff]
    %v1593 = vld [vmem:[#allocation11 + $0x20] sm:$0xff]
    %v1594 = vld [vmem:[#allocation11 + $0x28] sm:$0xff]
    %v1595 = vld [vmem:[#allocation11 + $0x30] sm:$0xff]
    %v1596 = vld [vmem:[#allocation11 + $0x38] sm:$0xff]
    %v1597 = vld [vmem:[#allocation11 + $0x40] sm:$0xff]
    %v1598 = vld [vmem:[#allocation11 + $0x48] sm:$0xff]
    %v1599 = vld [vmem:[#allocation11 + $0x50] sm:$0xff]
    %v1600 = vld [vmem:[#allocation11 + $0x58] sm:$0xff]
    %v1601 = vld [vmem:[#allocation11 + $0x60] sm:$0xff]
    %v1602 = vld [vmem:[#allocation11 + $0x68] sm:$0xff]
    %v1603 = vld [vmem:[#allocation11 + $0x70] sm:$0xff]
    %v1604 = vld [vmem:[#allocation11 + $0x78] sm:$0xff]
    %1605 = vmatprep.subr.mxu0 0.0
    %1606 = vmatpush1.msra.mxu0 %v1589
    %1607 = vmatprep.subr.mxu0 0.0
    %1608 = vmatpush1.msra.mxu0 %v1590
    %1609 = vmatprep.subr.mxu0 0.0
    %1610 = vmatpush1.msra.mxu0 %v1591
    %1611 = vmatprep.subr.mxu0 0.0
    %1612 = vmatpush1.msra.mxu0 %v1592
    %1613 = vmatprep.subr.mxu0 0.0
    %1614 = vmatpush1.msra.mxu0 %v1593
    %1615 = vmatprep.subr.mxu0 0.0
    %1616 = vmatpush1.msra.mxu0 %v1594
    %1617 = vmatprep.subr.mxu0 0.0
    %1618 = vmatpush1.msra.mxu0 %v1595
    %1619 = vmatprep.subr.mxu0 0.0
    %1620 = vmatpush1.msra.mxu0 %v1596
    %1621 = vmatprep.subr.mxu0 0.0
    %1622 = vmatpush1.msra.mxu0 %v1597
    %1623 = vmatprep.subr.mxu0 0.0
    %1624 = vmatpush1.msra.mxu0 %v1598
    %1625 = vmatprep.subr.mxu0 0.0
    %1626 = vmatpush1.msra.mxu0 %v1599
    %1627 = vmatprep.subr.mxu0 0.0
    %1628 = vmatpush1.msra.mxu0 %v1600
    %1629 = vmatprep.subr.mxu0 0.0
    %1630 = vmatpush1.msra.mxu0 %v1601
    %1631 = vmatprep.subr.mxu0 0.0
    %1632 = vmatpush1.msra.mxu0 %v1602
    %1633 = vmatprep.subr.mxu0 0.0
    %1634 = vmatpush1.msra.mxu0 %v1603
    %1635 = vmatprep.subr.mxu0 0.0
    %1636 = vmatpush1.msra.mxu0 %v1604
    %1637 = vmatprep.subr.mxu0 0.0
    %1638 = vmatpush1.msra.mxu0 0.0
    %1639 = vmatprep.subr.mxu0 0.0
    %1640 = vmatpush1.msra.mxu0 0.0
    %1641 = vmatprep.subr.mxu0 0.0
    %1642 = vmatpush1.msra.mxu0 0.0
    %1643 = vmatprep.subr.mxu0 0.0
    %1644 = vmatpush1.msra.mxu0 0.0
    %1645 = vmatprep.subr.mxu0 0.0
    %1646 = vmatpush1.msra.mxu0 0.0
    %1647 = vmatprep.subr.mxu0 0.0
    %1648 = vmatpush1.msra.mxu0 0.0
    %1649 = vmatprep.subr.mxu0 0.0
    %1650 = vmatpush1.msra.mxu0 0.0
    %1651 = vmatprep.subr.mxu0 0.0
    %1652 = vmatpush1.msra.mxu0 0.0
    %1653 = vmatprep.subr.mxu0 0.0
    %1654 = vmatpush1.msra.mxu0 0.0
    %1655 = vmatprep.subr.mxu0 0.0
    %1656 = vmatpush1.msra.mxu0 0.0
    %1657 = vmatprep.subr.mxu0 0.0
    %1658 = vmatpush1.msra.mxu0 0.0
    %1659 = vmatprep.subr.mxu0 0.0
    %1660 = vmatpush1.msra.mxu0 0.0
    %1661 = vmatprep.subr.mxu0 0.0
    %1662 = vmatpush1.msra.mxu0 0.0
    %1663 = vmatprep.subr.mxu0 0.0
    %1664 = vmatpush1.msra.mxu0 0.0
    %1665 = vmatprep.subr.mxu0 0.0
    %1666 = vmatpush1.msra.mxu0 0.0
    %1667 = vmatprep.subr.mxu0 0.0
    %1668 = vmatpush1.msra.mxu0 0.0
    %1669 = vmatprep.mubr.f32.mxu0 0.0
    %1670 = vmatmul.mubr.f32.gmra.mrb[0].mxu0 %v1573
    %v1671 = vpop.f32.mrb[0].mxu0
    %v1672 = vadd.f32 0.0, %v1671
    %v1673 = vpop.f32.mrb[0].mxu0
    %1674 = vmatprep.mubr.f32.mxu0 0.0
    %1675 = vmatmul.mubr.f32.gmra.mrb[0].mxu0 %v1574
    %v1676 = vpop.f32.mrb[0].mxu0
    %v1677 = vadd.f32 0.0, %v1676
    %v1678 = vpop.f32.mrb[0].mxu0
    %1679 = vmatprep.mubr.f32.mxu0 0.0
    %1680 = vmatmul.mubr.f32.gmra.mrb[0].mxu0 %v1575
    %v1681 = vpop.f32.mrb[0].mxu0
    %v1682 = vadd.f32 0.0, %v1681
    %v1683 = vpop.f32.mrb[0].mxu0
    %1684 = vmatprep.mubr.f32.mxu0 0.0
    %1685 = vmatmul.mubr.f32.gmra.mrb[0].mxu0 %v1576
    %v1686 = vpop.f32.mrb[0].mxu0
    %v1687 = vadd.f32 0.0, %v1686
    %v1688 = vpop.f32.mrb[0].mxu0
    %1689 = vmatprep.mubr.f32.mxu0 0.0
    %1690 = vmatmul.mubr.f32.gmra.mrb[0].mxu0 %v1577
    %v1691 = vpop.f32.mrb[0].mxu0
    %v1692 = vadd.f32 0.0, %v1691
    %v1693 = vpop.f32.mrb[0].mxu0
    %1694 = vmatprep.mubr.f32.mxu0 0.0
    %1695 = vmatmul.mubr.f32.gmra.mrb[0].mxu0 %v1578
    %v1696 = vpop.f32.mrb[0].mxu0
    %v1697 = vadd.f32 0.0, %v1696
    %v1698 = vpop.f32.mrb[0].mxu0
    %1699 = vmatprep.mubr.f32.mxu0 0.0
    %1700 = vmatmul.mubr.f32.gmra.mrb[0].mxu0 %v1579
    %v1701 = vpop.f32.mrb[0].mxu0
    %v1702 = vadd.f32 0.0, %v1701
    %v1703 = vpop.f32.mrb[0].mxu0
    %1704 = vmatprep.mubr.f32.mxu0 0.0
    %1705 = vmatmul.mubr.f32.gmra.mrb[0].mxu0 %v1580
    %v1706 = vpop.f32.mrb[0].mxu0
    %v1707 = vadd.f32 0.0, %v1706
    %v1708 = vpop.f32.mrb[0].mxu0
    %1709 = vmatprep.mubr.f32.mxu0 0.0
    %1710 = vmatmul.mubr.f32.gmra.mrb[0].mxu0 %v1581
    %v1711 = vpop.f32.mrb[0].mxu0
    %v1712 = vadd.f32 0.0, %v1711
    %v1713 = vpop.f32.mrb[0].mxu0
    %1714 = vmatprep.mubr.f32.mxu0 0.0
    %1715 = vmatmul.mubr.f32.gmra.mrb[0].mxu0 %v1582
    %v1716 = vpop.f32.mrb[0].mxu0
    %v1717 = vadd.f32 0.0, %v1716
    %v1718 = vpop.f32.mrb[0].mxu0
    %1719 = vmatprep.mubr.f32.mxu0 0.0
    %1720 = vmatmul.mubr.f32.gmra.mrb[0].mxu0 %v1583
    %v1721 = vpop.f32.mrb[0].mxu0
    %v1722 = vadd.f32 0.0, %v1721
    %v1723 = vpop.f32.mrb[0].mxu0
    %1724 = vmatprep.mubr.f32.mxu0 0.0
    %1725 = vmatmul.mubr.f32.gmra.mrb[0].mxu0 %v1584
    %v1726 = vpop.f32.mrb[0].mxu0
    %v1727 = vadd.f32 0.0, %v1726
    %v1728 = vpop.f32.mrb[0].mxu0
    %1729 = vmatprep.mubr.f32.mxu0 0.0
    %1730 = vmatmul.mubr.f32.gmra.mrb[0].mxu0 %v1585
    %v1731 = vpop.f32.mrb[0].mxu0
    %v1732 = vadd.f32 0.0, %v1731
    %v1733 = vpop.f32.mrb[0].mxu0
    %1734 = vmatprep.mubr.f32.mxu0 0.0
    %1735 = vmatmul.mubr.f32.gmra.mrb[0].mxu0 %v1586
    %v1736 = vpop.f32.mrb[0].mxu0
    %v1737 = vadd.f32 0.0, %v1736
    %v1738 = vpop.f32.mrb[0].mxu0
    %1739 = vmatprep.mubr.f32.mxu0 0.0
    %1740 = vmatmul.mubr.f32.gmra.mrb[0].mxu0 %v1587
    %v1741 = vpop.f32.mrb[0].mxu0
    %v1742 = vadd.f32 0.0, %v1741
    %v1743 = vpop.f32.mrb[0].mxu0
    %1744 = vmatprep.mubr.f32.mxu0 0.0
    %1745 = vmatmul.mubr.f32.gmra.mrb[0].mxu0 %v1588
    %v1746 = vpop.f32.mrb[0].mxu0
    %v1747 = vadd.f32 0.0, %v1746
    %v1748 = vpop.f32.mrb[0].mxu0
    %1749 = vdwg.mxu0
    %v1750 = vld [vmem:[#allocation13] sm:$0xff]
    %v1751 = vld [vmem:[#allocation13 + $0x8] sm:$0xff]
    %v1752 = vld [vmem:[#allocation13 + $0x10] sm:$0xff]
    %v1753 = vld [vmem:[#allocation13 + $0x18] sm:$0xff]
    %v1754 = vld [vmem:[#allocation13 + $0x20] sm:$0xff]
    %v1755 = vld [vmem:[#allocation13 + $0x28] sm:$0xff]
    %v1756 = vld [vmem:[#allocation13 + $0x30] sm:$0xff]
    %v1757 = vld [vmem:[#allocation13 + $0x38] sm:$0xff]
    %v1758 = vld [vmem:[#allocation13 + $0x40] sm:$0xff]
    %v1759 = vld [vmem:[#allocation13 + $0x48] sm:$0xff]
    %v1760 = vld [vmem:[#allocation13 + $0x50] sm:$0xff]
    %v1761 = vld [vmem:[#allocation13 + $0x58] sm:$0xff]
    %v1762 = vld [vmem:[#allocation13 + $0x60] sm:$0xff]
    %v1763 = vld [vmem:[#allocation13 + $0x68] sm:$0xff]
    %v1764 = vld [vmem:[#allocation13 + $0x70] sm:$0xff]
    %v1765 = vld [vmem:[#allocation13 + $0x78] sm:$0xff]
    %1766 = vmatprep.subr.mxu0 0.0
    %1767 = vmatpush1.msra.mxu0 %v1750
    %1768 = vmatprep.subr.mxu0 0.0
    %1769 = vmatpush1.msra.mxu0 %v1751
    %1770 = vmatprep.subr.mxu0 0.0
    %1771 = vmatpush1.msra.mxu0 %v1752
    %1772 = vmatprep.subr.mxu0 0.0
    %1773 = vmatpush1.msra.mxu0 %v1753
    %1774 = vmatprep.subr.mxu0 0.0
    %1775 = vmatpush1.msra.mxu0 %v1754
    %1776 = vmatprep.subr.mxu0 0.0
    %1777 = vmatpush1.msra.mxu0 %v1755
    %1778 = vmatprep.subr.mxu0 0.0
    %1779 = vmatpush1.msra.mxu0 %v1756
    %1780 = vmatprep.subr.mxu0 0.0
    %1781 = vmatpush1.msra.mxu0 %v1757
    %1782 = vmatprep.subr.mxu0 0.0
    %1783 = vmatpush1.msra.mxu0 %v1758
    %1784 = vmatprep.subr.mxu0 0.0
    %1785 = vmatpush1.msra.mxu0 %v1759
    %1786 = vmatprep.subr.mxu0 0.0
    %1787 = vmatpush1.msra.mxu0 %v1760
    %1788 = vmatprep.subr.mxu0 0.0
    %1789 = vmatpush1.msra.mxu0 %v1761
    %1790 = vmatprep.subr.mxu0 0.0
    %1791 = vmatpush1.msra.mxu0 %v1762
    %1792 = vmatprep.subr.mxu0 0.0
    %1793 = vmatpush1.msra.mxu0 %v1763
    %1794 = vmatprep.subr.mxu0 0.0
    %1795 = vmatpush1.msra.mxu0 %v1764
    %1796 = vmatprep.subr.mxu0 0.0
    %1797 = vmatpush1.msra.mxu0 %v1765
    %1798 = vmatprep.subr.mxu0 0.0
    %1799 = vmatpush1.msra.mxu0 0.0
    %1800 = vmatprep.subr.mxu0 0.0
    %1801 = vmatpush1.msra.mxu0 0.0
    %1802 = vmatprep.subr.mxu0 0.0
    %1803 = vmatpush1.msra.mxu0 0.0
    %1804 = vmatprep.subr.mxu0 0.0
    %1805 = vmatpush1.msra.mxu0 0.0
    %1806 = vmatprep.subr.mxu0 0.0
    %1807 = vmatpush1.msra.mxu0 0.0
    %1808 = vmatprep.subr.mxu0 0.0
    %1809 = vmatpush1.msra.mxu0 0.0
    %1810 = vmatprep.subr.mxu0 0.0
    %1811 = vmatpush1.msra.mxu0 0.0
    %1812 = vmatprep.subr.mxu0 0.0
    %1813 = vmatpush1.msra.mxu0 0.0
    %1814 = vmatprep.subr.mxu0 0.0
    %1815 = vmatpush1.msra.mxu0 0.0
    %1816 = vmatprep.subr.mxu0 0.0
    %1817 = vmatpush1.msra.mxu0 0.0
    %1818 = vmatprep.subr.mxu0 0.0
    %1819 = vmatpush1.msra.mxu0 0.0
    %1820 = vmatprep.subr.mxu0 0.0
    %1821 = vmatpush1.msra.mxu0 0.0
    %1822 = vmatprep.subr.mxu0 0.0
    %1823 = vmatpush1.msra.mxu0 0.0
    %1824 = vmatprep.subr.mxu0 0.0
    %1825 = vmatpush1.msra.mxu0 0.0
    %1826 = vmatprep.subr.mxu0 0.0
    %1827 = vmatpush1.msra.mxu0 0.0
    %1828 = vmatprep.subr.mxu0 0.0
    %1829 = vmatpush1.msra.mxu0 0.0
    %1830 = vmatprep.mubr.f32.mxu0 0.0
    %1831 = vmatmul.mubr.f32.gmra.mrb[0].mxu0 %v1573
    %v1832 = vpop.f32.mrb[0].mxu0
    %v1833 = vadd.f32 0.0, %v1832
    %v1834 = vpop.f32.mrb[0].mxu0
    %1835 = vmatprep.mubr.f32.mxu0 0.0
    %1836 = vmatmul.mubr.f32.gmra.mrb[0].mxu0 %v1574
    %v1837 = vpop.f32.mrb[0].mxu0
    %v1838 = vadd.f32 0.0, %v1837
    %v1839 = vpop.f32.mrb[0].mxu0
    %1840 = vmatprep.mubr.f32.mxu0 0.0
    %1841 = vmatmul.mubr.f32.gmra.mrb[0].mxu0 %v1575
    %v1842 = vpop.f32.mrb[0].mxu0
    %v1843 = vadd.f32 0.0, %v1842
    %v1844 = vpop.f32.mrb[0].mxu0
    %1845 = vmatprep.mubr.f32.mxu0 0.0
    %1846 = vmatmul.mubr.f32.gmra.mrb[0].mxu0 %v1576
    %v1847 = vpop.f32.mrb[0].mxu0
    %v1848 = vadd.f32 0.0, %v1847
    %v1849 = vpop.f32.mrb[0].mxu0
    %1850 = vmatprep.mubr.f32.mxu0 0.0
    %1851 = vmatmul.mubr.f32.gmra.mrb[0].mxu0 %v1577
    %v1852 = vpop.f32.mrb[0].mxu0
    %v1853 = vadd.f32 0.0, %v1852
    %v1854 = vpop.f32.mrb[0].mxu0
    %1855 = vmatprep.mubr.f32.mxu0 0.0
    %1856 = vmatmul.mubr.f32.gmra.mrb[0].mxu0 %v1578
    %v1857 = vpop.f32.mrb[0].mxu0
    %v1858 = vadd.f32 0.0, %v1857
    %v1859 = vpop.f32.mrb[0].mxu0
    %1860 = vmatprep.mubr.f32.mxu0 0.0
    %1861 = vmatmul.mubr.f32.gmra.mrb[0].mxu0 %v1579
    %v1862 = vpop.f32.mrb[0].mxu0
    %v1863 = vadd.f32 0.0, %v1862
    %v1864 = vpop.f32.mrb[0].mxu0
    %1865 = vmatprep.mubr.f32.mxu0 0.0
    %1866 = vmatmul.mubr.f32.gmra.mrb[0].mxu0 %v1580
    %v1867 = vpop.f32.mrb[0].mxu0
    %v1868 = vadd.f32 0.0, %v1867
    %v1869 = vpop.f32.mrb[0].mxu0
    %1870 = vmatprep.mubr.f32.mxu0 0.0
    %1871 = vmatmul.mubr.f32.gmra.mrb[0].mxu0 %v1581
    %v1872 = vpop.f32.mrb[0].mxu0
    %v1873 = vadd.f32 0.0, %v1872
    %v1874 = vpop.f32.mrb[0].mxu0
    %1875 = vmatprep.mubr.f32.mxu0 0.0
    %1876 = vmatmul.mubr.f32.gmra.mrb[0].mxu0 %v1582
    %v1877 = vpop.f32.mrb[0].mxu0
    %v1878 = vadd.f32 0.0, %v1877
    %v1879 = vpop.f32.mrb[0].mxu0
    %1880 = vmatprep.mubr.f32.mxu0 0.0
    %1881 = vmatmul.mubr.f32.gmra.mrb[0].mxu0 %v1583
    %v1882 = vpop.f32.mrb[0].mxu0
    %v1883 = vadd.f32 0.0, %v1882
    %v1884 = vpop.f32.mrb[0].mxu0
    %1885 = vmatprep.mubr.f32.mxu0 0.0
    %1886 = vmatmul.mubr.f32.gmra.mrb[0].mxu0 %v1584
    %v1887 = vpop.f32.mrb[0].mxu0
    %v1888 = vadd.f32 0.0, %v1887
    %v1889 = vpop.f32.mrb[0].mxu0
    %1890 = vmatprep.mubr.f32.mxu0 0.0
    %1891 = vmatmul.mubr.f32.gmra.mrb[0].mxu0 %v1585
    %v1892 = vpop.f32.mrb[0].mxu0
    %v1893 = vadd.f32 0.0, %v1892
    %v1894 = vpop.f32.mrb[0].mxu0
    %1895 = vmatprep.mubr.f32.mxu0 0.0
    %1896 = vmatmul.mubr.f32.gmra.mrb[0].mxu0 %v1586
    %v1897 = vpop.f32.mrb[0].mxu0
    %v1898 = vadd.f32 0.0, %v1897
    %v1899 = vpop.f32.mrb[0].mxu0
    %1900 = vmatprep.mubr.f32.mxu0 0.0
    %1901 = vmatmul.mubr.f32.gmra.mrb[0].mxu0 %v1587
    %v1902 = vpop.f32.mrb[0].mxu0
    %v1903 = vadd.f32 0.0, %v1902
    %v1904 = vpop.f32.mrb[0].mxu0
    %1905 = vmatprep.mubr.f32.mxu0 0.0
    %1906 = vmatmul.mubr.f32.gmra.mrb[0].mxu0 %v1588
    %v1907 = vpop.f32.mrb[0].mxu0
    %v1908 = vadd.f32 0.0, %v1907
    %v1909 = vpop.f32.mrb[0].mxu0
    %1910 = vdwg.mxu0
    %v1911 = vld [vmem:[#allocation8] sm:$0xff]
    %v1912 = vld [vmem:[#allocation8 + $0x8] sm:$0xff]
    %v1913 = vld [vmem:[#allocation8 + $0x10] sm:$0xff]
    %v1914 = vld [vmem:[#allocation8 + $0x18] sm:$0xff]
    %v1915 = vld [vmem:[#allocation8 + $0x20] sm:$0xff]
    %v1916 = vld [vmem:[#allocation8 + $0x28] sm:$0xff]
    %v1917 = vld [vmem:[#allocation8 + $0x30] sm:$0xff]
    %v1918 = vld [vmem:[#allocation8 + $0x38] sm:$0xff]
    %v1919 = vld [vmem:[#allocation8 + $0x40] sm:$0xff]
    %v1920 = vld [vmem:[#allocation8 + $0x48] sm:$0xff]
    %v1921 = vld [vmem:[#allocation8 + $0x50] sm:$0xff]
    %v1922 = vld [vmem:[#allocation8 + $0x58] sm:$0xff]
    %v1923 = vld [vmem:[#allocation8 + $0x60] sm:$0xff]
    %v1924 = vld [vmem:[#allocation8 + $0x68] sm:$0xff]
    %v1925 = vld [vmem:[#allocation8 + $0x70] sm:$0xff]
    %v1926 = vld [vmem:[#allocation8 + $0x78] sm:$0xff]
    %v1927 = vld [vmem:[#allocation10] sm:$0xff]
    %v1928 = vld [vmem:[#allocation10 + $0x8] sm:$0xff]
    %v1929 = vld [vmem:[#allocation10 + $0x10] sm:$0xff]
    %v1930 = vld [vmem:[#allocation10 + $0x18] sm:$0xff]
    %v1931 = vld [vmem:[#allocation10 + $0x20] sm:$0xff]
    %v1932 = vld [vmem:[#allocation10 + $0x28] sm:$0xff]
    %v1933 = vld [vmem:[#allocation10 + $0x30] sm:$0xff]
    %v1934 = vld [vmem:[#allocation10 + $0x38] sm:$0xff]
    %v1935 = vld [vmem:[#allocation10 + $0x40] sm:$0xff]
    %v1936 = vld [vmem:[#allocation10 + $0x48] sm:$0xff]
    %v1937 = vld [vmem:[#allocation10 + $0x50] sm:$0xff]
    %v1938 = vld [vmem:[#allocation10 + $0x58] sm:$0xff]
    %v1939 = vld [vmem:[#allocation10 + $0x60] sm:$0xff]
    %v1940 = vld [vmem:[#allocation10 + $0x68] sm:$0xff]
    %v1941 = vld [vmem:[#allocation10 + $0x70] sm:$0xff]
    %v1942 = vld [vmem:[#allocation10 + $0x78] sm:$0xff]
    %1943 = vmatprep.subr.mxu0 0.0
    %1944 = vmatpush1.msra.mxu0 %v1833
    %1945 = vmatprep.subr.mxu0 0.0
    %1946 = vmatpush1.msra.mxu0 %v1838
    %1947 = vmatprep.subr.mxu0 0.0
    %1948 = vmatpush1.msra.mxu0 %v1843
    %1949 = vmatprep.subr.mxu0 0.0
    %1950 = vmatpush1.msra.mxu0 %v1848
    %1951 = vmatprep.subr.mxu0 0.0
    %1952 = vmatpush1.msra.mxu0 %v1853
    %1953 = vmatprep.subr.mxu0 0.0
    %1954 = vmatpush1.msra.mxu0 %v1858
    %1955 = vmatprep.subr.mxu0 0.0
    %1956 = vmatpush1.msra.mxu0 %v1863
    %1957 = vmatprep.subr.mxu0 0.0
    %1958 = vmatpush1.msra.mxu0 %v1868
    %1959 = vmatprep.subr.mxu0 0.0
    %1960 = vmatpush1.msra.mxu0 %v1873
    %1961 = vmatprep.subr.mxu0 0.0
    %1962 = vmatpush1.msra.mxu0 %v1878
    %1963 = vmatprep.subr.mxu0 0.0
    %1964 = vmatpush1.msra.mxu0 %v1883
    %1965 = vmatprep.subr.mxu0 0.0
    %1966 = vmatpush1.msra.mxu0 %v1888
    %1967 = vmatprep.subr.mxu0 0.0
    %1968 = vmatpush1.msra.mxu0 %v1893
    %1969 = vmatprep.subr.mxu0 0.0
    %1970 = vmatpush1.msra.mxu0 %v1898
    %1971 = vmatprep.subr.mxu0 0.0
    %1972 = vmatpush1.msra.mxu0 %v1903
    %1973 = vmatprep.subr.mxu0 0.0
    %1974 = vmatpush1.msra.mxu0 %v1908
    %1975 = vmatprep.subr.mxu0 0.0
    %1976 = vmatpush1.msra.mxu0 0.0
    %1977 = vmatprep.subr.mxu0 0.0
    %1978 = vmatpush1.msra.mxu0 0.0
    %1979 = vmatprep.subr.mxu0 0.0
    %1980 = vmatpush1.msra.mxu0 0.0
    %1981 = vmatprep.subr.mxu0 0.0
    %1982 = vmatpush1.msra.mxu0 0.0
    %1983 = vmatprep.subr.mxu0 0.0
    %1984 = vmatpush1.msra.mxu0 0.0
    %1985 = vmatprep.subr.mxu0 0.0
    %1986 = vmatpush1.msra.mxu0 0.0
    %1987 = vmatprep.subr.mxu0 0.0
    %1988 = vmatpush1.msra.mxu0 0.0
    %1989 = vmatprep.subr.mxu0 0.0
    %1990 = vmatpush1.msra.mxu0 0.0
    %1991 = vmatprep.subr.mxu0 0.0
    %1992 = vmatpush1.msra.mxu0 0.0
    %1993 = vmatprep.subr.mxu0 0.0
    %1994 = vmatpush1.msra.mxu0 0.0
    %1995 = vmatprep.subr.mxu0 0.0
    %1996 = vmatpush1.msra.mxu0 0.0
    %1997 = vmatprep.subr.mxu0 0.0
    %1998 = vmatpush1.msra.mxu0 0.0
    %1999 = vmatprep.subr.mxu0 0.0
    %2000 = vmatpush1.msra.mxu0 0.0
    %2001 = vmatprep.subr.mxu0 0.0
    %2002 = vmatpush1.msra.mxu0 0.0
    %2003 = vmatprep.subr.mxu0 0.0
    %2004 = vmatpush1.msra.mxu0 0.0
    %2005 = vmatprep.subr.mxu0 0.0
    %2006 = vmatpush1.msra.mxu0 0.0
    %2007 = vmatprep.mubr.f32.mxu0 0.0
    %2008 = vmatmul.mubr.f32.gmra.mrb[0].mxu0 %v1927
    %v2009 = vpop.f32.mrb[0].mxu0
    %v2010 = vadd.f32 0.0, %v2009
    %v2011 = vpop.f32.mrb[0].mxu0
    %2012 = vmatprep.mubr.f32.mxu0 0.0
    %2013 = vmatmul.mubr.f32.gmra.mrb[0].mxu0 %v1928
    %v2014 = vpop.f32.mrb[0].mxu0
    %v2015 = vadd.f32 0.0, %v2014
    %v2016 = vpop.f32.mrb[0].mxu0
    %2017 = vmatprep.mubr.f32.mxu0 0.0
    %2018 = vmatmul.mubr.f32.gmra.mrb[0].mxu0 %v1929
    %v2019 = vpop.f32.mrb[0].mxu0
    %v2020 = vadd.f32 0.0, %v2019
    %v2021 = vpop.f32.mrb[0].mxu0
    %2022 = vmatprep.mubr.f32.mxu0 0.0
    %2023 = vmatmul.mubr.f32.gmra.mrb[0].mxu0 %v1930
    %v2024 = vpop.f32.mrb[0].mxu0
    %v2025 = vadd.f32 0.0, %v2024
    %v2026 = vpop.f32.mrb[0].mxu0
    %2027 = vmatprep.mubr.f32.mxu0 0.0
    %2028 = vmatmul.mubr.f32.gmra.mrb[0].mxu0 %v1931
    %v2029 = vpop.f32.mrb[0].mxu0
    %v2030 = vadd.f32 0.0, %v2029
    %v2031 = vpop.f32.mrb[0].mxu0
    %2032 = vmatprep.mubr.f32.mxu0 0.0
    %2033 = vmatmul.mubr.f32.gmra.mrb[0].mxu0 %v1932
    %v2034 = vpop.f32.mrb[0].mxu0
    %v2035 = vadd.f32 0.0, %v2034
    %v2036 = vpop.f32.mrb[0].mxu0
    %2037 = vmatprep.mubr.f32.mxu0 0.0
    %2038 = vmatmul.mubr.f32.gmra.mrb[0].mxu0 %v1933
    %v2039 = vpop.f32.mrb[0].mxu0
    %v2040 = vadd.f32 0.0, %v2039
    %v2041 = vpop.f32.mrb[0].mxu0
    %2042 = vmatprep.mubr.f32.mxu0 0.0
    %2043 = vmatmul.mubr.f32.gmra.mrb[0].mxu0 %v1934
    %v2044 = vpop.f32.mrb[0].mxu0
    %v2045 = vadd.f32 0.0, %v2044
    %v2046 = vpop.f32.mrb[0].mxu0
    %2047 = vmatprep.mubr.f32.mxu0 0.0
    %2048 = vmatmul.mubr.f32.gmra.mrb[0].mxu0 %v1935
    %v2049 = vpop.f32.mrb[0].mxu0
    %v2050 = vadd.f32 0.0, %v2049
    %v2051 = vpop.f32.mrb[0].mxu0
    %2052 = vmatprep.mubr.f32.mxu0 0.0
    %2053 = vmatmul.mubr.f32.gmra.mrb[0].mxu0 %v1936
    %v2054 = vpop.f32.mrb[0].mxu0
    %v2055 = vadd.f32 0.0, %v2054
    %v2056 = vpop.f32.mrb[0].mxu0
    %2057 = vmatprep.mubr.f32.mxu0 0.0
    %2058 = vmatmul.mubr.f32.gmra.mrb[0].mxu0 %v1937
    %v2059 = vpop.f32.mrb[0].mxu0
    %v2060 = vadd.f32 0.0, %v2059
    %v2061 = vpop.f32.mrb[0].mxu0
    %2062 = vmatprep.mubr.f32.mxu0 0.0
    %2063 = vmatmul.mubr.f32.gmra.mrb[0].mxu0 %v1938
    %v2064 = vpop.f32.mrb[0].mxu0
    %v2065 = vadd.f32 0.0, %v2064
    %v2066 = vpop.f32.mrb[0].mxu0
    %2067 = vmatprep.mubr.f32.mxu0 0.0
    %2068 = vmatmul.mubr.f32.gmra.mrb[0].mxu0 %v1939
    %v2069 = vpop.f32.mrb[0].mxu0
    %v2070 = vadd.f32 0.0, %v2069
    %v2071 = vpop.f32.mrb[0].mxu0
    %2072 = vmatprep.mubr.f32.mxu0 0.0
    %2073 = vmatmul.mubr.f32.gmra.mrb[0].mxu0 %v1940
    %v2074 = vpop.f32.mrb[0].mxu0
    %v2075 = vadd.f32 0.0, %v2074
    %v2076 = vpop.f32.mrb[0].mxu0
    %2077 = vmatprep.mubr.f32.mxu0 0.0
    %2078 = vmatmul.mubr.f32.gmra.mrb[0].mxu0 %v1941
    %v2079 = vpop.f32.mrb[0].mxu0
    %v2080 = vadd.f32 0.0, %v2079
    %v2081 = vpop.f32.mrb[0].mxu0
    %2082 = vmatprep.mubr.f32.mxu0 0.0
    %2083 = vmatmul.mubr.f32.gmra.mrb[0].mxu0 %v1942
    %v2084 = vpop.f32.mrb[0].mxu0
    %v2085 = vadd.f32 0.0, %v2084
    %v2086 = vpop.f32.mrb[0].mxu0
    %2087 = vdwg.mxu0
    %2088 = vmatprep.subr.mxu0 0.0
    %2089 = vmatpush1.msra.mxu0 %v1672
    %2090 = vmatprep.subr.mxu0 0.0
    %2091 = vmatpush1.msra.mxu0 %v1677
    %2092 = vmatprep.subr.mxu0 0.0
    %2093 = vmatpush1.msra.mxu0 %v1682
    %2094 = vmatprep.subr.mxu0 0.0
    %2095 = vmatpush1.msra.mxu0 %v1687
    %2096 = vmatprep.subr.mxu0 0.0
    %2097 = vmatpush1.msra.mxu0 %v1692
    %2098 = vmatprep.subr.mxu0 0.0
    %2099 = vmatpush1.msra.mxu0 %v1697
    %2100 = vmatprep.subr.mxu0 0.0
    %2101 = vmatpush1.msra.mxu0 %v1702
    %2102 = vmatprep.subr.mxu0 0.0
    %2103 = vmatpush1.msra.mxu0 %v1707
    %2104 = vmatprep.subr.mxu0 0.0
    %2105 = vmatpush1.msra.mxu0 %v1712
    %2106 = vmatprep.subr.mxu0 0.0
    %2107 = vmatpush1.msra.mxu0 %v1717
    %2108 = vmatprep.subr.mxu0 0.0
    %2109 = vmatpush1.msra.mxu0 %v1722
    %2110 = vmatprep.subr.mxu0 0.0
    %2111 = vmatpush1.msra.mxu0 %v1727
    %2112 = vmatprep.subr.mxu0 0.0
    %2113 = vmatpush1.msra.mxu0 %v1732
    %2114 = vmatprep.subr.mxu0 0.0
    %2115 = vmatpush1.msra.mxu0 %v1737
    %2116 = vmatprep.subr.mxu0 0.0
    %2117 = vmatpush1.msra.mxu0 %v1742
    %2118 = vmatprep.subr.mxu0 0.0
    %2119 = vmatpush1.msra.mxu0 %v1747
    %2120 = vmatprep.subr.mxu0 0.0
    %2121 = vmatpush1.msra.mxu0 0.0
    %2122 = vmatprep.subr.mxu0 0.0
    %2123 = vmatpush1.msra.mxu0 0.0
    %2124 = vmatprep.subr.mxu0 0.0
    %2125 = vmatpush1.msra.mxu0 0.0
    %2126 = vmatprep.subr.mxu0 0.0
    %2127 = vmatpush1.msra.mxu0 0.0
    %2128 = vmatprep.subr.mxu0 0.0
    %2129 = vmatpush1.msra.mxu0 0.0
    %2130 = vmatprep.subr.mxu0 0.0
    %2131 = vmatpush1.msra.mxu0 0.0
    %2132 = vmatprep.subr.mxu0 0.0
    %2133 = vmatpush1.msra.mxu0 0.0
    %2134 = vmatprep.subr.mxu0 0.0
    %2135 = vmatpush1.msra.mxu0 0.0
    %2136 = vmatprep.subr.mxu0 0.0
    %2137 = vmatpush1.msra.mxu0 0.0
    %2138 = vmatprep.subr.mxu0 0.0
    %2139 = vmatpush1.msra.mxu0 0.0
    %2140 = vmatprep.subr.mxu0 0.0
    %2141 = vmatpush1.msra.mxu0 0.0
    %2142 = vmatprep.subr.mxu0 0.0
    %2143 = vmatpush1.msra.mxu0 0.0
    %2144 = vmatprep.subr.mxu0 0.0
    %2145 = vmatpush1.msra.mxu0 0.0
    %2146 = vmatprep.subr.mxu0 0.0
    %2147 = vmatpush1.msra.mxu0 0.0
    %2148 = vmatprep.subr.mxu0 0.0
    %2149 = vmatpush1.msra.mxu0 0.0
    %2150 = vmatprep.subr.mxu0 0.0
    %2151 = vmatpush1.msra.mxu0 0.0
    %2152 = vmatprep.mubr.f32.mxu0 0.0
    %2153 = vmatmul.mubr.f32.gmra.mrb[0].mxu0 %v1911
    %v2154 = vpop.f32.mrb[0].mxu0
    %v2155 = vadd.f32 %v2010, %v2154
    %v2156 = vpop.f32.mrb[0].mxu0
    %2157 = vmatprep.mubr.f32.mxu0 0.0
    %2158 = vmatmul.mubr.f32.gmra.mrb[0].mxu0 %v1912
    %v2159 = vpop.f32.mrb[0].mxu0
    %v2160 = vadd.f32 %v2015, %v2159
    %v2161 = vpop.f32.mrb[0].mxu0
    %2162 = vmatprep.mubr.f32.mxu0 0.0
    %2163 = vmatmul.mubr.f32.gmra.mrb[0].mxu0 %v1913
    %v2164 = vpop.f32.mrb[0].mxu0
    %v2165 = vadd.f32 %v2020, %v2164
    %v2166 = vpop.f32.mrb[0].mxu0
    %2167 = vmatprep.mubr.f32.mxu0 0.0
    %2168 = vmatmul.mubr.f32.gmra.mrb[0].mxu0 %v1914
    %v2169 = vpop.f32.mrb[0].mxu0
    %v2170 = vadd.f32 %v2025, %v2169
    %v2171 = vpop.f32.mrb[0].mxu0
    %2172 = vmatprep.mubr.f32.mxu0 0.0
    %2173 = vmatmul.mubr.f32.gmra.mrb[0].mxu0 %v1915
    %v2174 = vpop.f32.mrb[0].mxu0
    %v2175 = vadd.f32 %v2030, %v2174
    %v2176 = vpop.f32.mrb[0].mxu0
    %2177 = vmatprep.mubr.f32.mxu0 0.0
    %2178 = vmatmul.mubr.f32.gmra.mrb[0].mxu0 %v1916
    %v2179 = vpop.f32.mrb[0].mxu0
    %v2180 = vadd.f32 %v2035, %v2179
    %v2181 = vpop.f32.mrb[0].mxu0
    %2182 = vmatprep.mubr.f32.mxu0 0.0
    %2183 = vmatmul.mubr.f32.gmra.mrb[0].mxu0 %v1917
    %v2184 = vpop.f32.mrb[0].mxu0
    %v2185 = vadd.f32 %v2040, %v2184
    %v2186 = vpop.f32.mrb[0].mxu0
    %2187 = vmatprep.mubr.f32.mxu0 0.0
    %2188 = vmatmul.mubr.f32.gmra.mrb[0].mxu0 %v1918
    %v2189 = vpop.f32.mrb[0].mxu0
    %v2190 = vadd.f32 %v2045, %v2189
    %v2191 = vpop.f32.mrb[0].mxu0
    %2192 = vmatprep.mubr.f32.mxu0 0.0
    %2193 = vmatmul.mubr.f32.gmra.mrb[0].mxu0 %v1919
    %v2194 = vpop.f32.mrb[0].mxu0
    %v2195 = vadd.f32 %v2050, %v2194
    %v2196 = vpop.f32.mrb[0].mxu0
    %2197 = vmatprep.mubr.f32.mxu0 0.0
    %2198 = vmatmul.mubr.f32.gmra.mrb[0].mxu0 %v1920
    %v2199 = vpop.f32.mrb[0].mxu0
    %v2200 = vadd.f32 %v2055, %v2199
    %v2201 = vpop.f32.mrb[0].mxu0
    %2202 = vmatprep.mubr.f32.mxu0 0.0
    %2203 = vmatmul.mubr.f32.gmra.mrb[0].mxu0 %v1921
    %v2204 = vpop.f32.mrb[0].mxu0
    %v2205 = vadd.f32 %v2060, %v2204
    %v2206 = vpop.f32.mrb[0].mxu0
    %2207 = vmatprep.mubr.f32.mxu0 0.0
    %2208 = vmatmul.mubr.f32.gmra.mrb[0].mxu0 %v1922
    %v2209 = vpop.f32.mrb[0].mxu0
    %v2210 = vadd.f32 %v2065, %v2209
    %v2211 = vpop.f32.mrb[0].mxu0
    %2212 = vmatprep.mubr.f32.mxu0 0.0
    %2213 = vmatmul.mubr.f32.gmra.mrb[0].mxu0 %v1923
    %v2214 = vpop.f32.mrb[0].mxu0
    %v2215 = vadd.f32 %v2070, %v2214
    %v2216 = vpop.f32.mrb[0].mxu0
    %2217 = vmatprep.mubr.f32.mxu0 0.0
    %2218 = vmatmul.mubr.f32.gmra.mrb[0].mxu0 %v1924
    %v2219 = vpop.f32.mrb[0].mxu0
    %v2220 = vadd.f32 %v2075, %v2219
    %v2221 = vpop.f32.mrb[0].mxu0
    %2222 = vmatprep.mubr.f32.mxu0 0.0
    %2223 = vmatmul.mubr.f32.gmra.mrb[0].mxu0 %v1925
    %v2224 = vpop.f32.mrb[0].mxu0
    %v2225 = vadd.f32 %v2080, %v2224
    %v2226 = vpop.f32.mrb[0].mxu0
    %2227 = vmatprep.mubr.f32.mxu0 0.0
    %2228 = vmatmul.mubr.f32.gmra.mrb[0].mxu0 %v1926
    %v2229 = vpop.f32.mrb[0].mxu0
    %v2230 = vadd.f32 %v2085, %v2229
    %v2231 = vpop.f32.mrb[0].mxu0
    %2232 = vdwg.mxu0
    %v2233 = vld [vmem:[%s10] sm:$0x1]
    %v2235 = vlaneseq
    %v2236 = vshrl.u32 %v2235, 7
    %v2237 = vsub.s32 0, %v2236
    %v2238 = vrot.slane %v2233, %v2237
    %v2240 = vadd.f32 %v2155, %v2238
    %v2241 = vadd.f32 %v2160, %v2238
    %v2242 = vadd.f32 %v2165, %v2238
    %v2243 = vadd.f32 %v2170, %v2238
    %v2244 = vadd.f32 %v2175, %v2238
    %v2245 = vadd.f32 %v2180, %v2238
    %v2246 = vadd.f32 %v2185, %v2238
    %v2247 = vadd.f32 %v2190, %v2238
    %v2248 = vadd.f32 %v2195, %v2238
    %v2249 = vadd.f32 %v2200, %v2238
    %v2250 = vadd.f32 %v2205, %v2238
    %v2251 = vadd.f32 %v2210, %v2238
    %v2252 = vadd.f32 %v2215, %v2238
    %v2253 = vadd.f32 %v2220, %v2238
    %v2254 = vadd.f32 %v2225, %v2238
    %v2255 = vadd.f32 %v2230, %v2238
    %v2256 = vmax.f32 %v2240, 0.0
    %v2257 = vmax.f32 %v2241, 0.0
    %v2258 = vmax.f32 %v2242, 0.0
    %v2259 = vmax.f32 %v2243, 0.0
    %v2260 = vmax.f32 %v2244, 0.0
    %v2261 = vmax.f32 %v2245, 0.0
    %v2262 = vmax.f32 %v2246, 0.0
    %v2263 = vmax.f32 %v2247, 0.0
    %v2264 = vmax.f32 %v2248, 0.0
    %v2265 = vmax.f32 %v2249, 0.0
    %v2266 = vmax.f32 %v2250, 0.0
    %v2267 = vmax.f32 %v2251, 0.0
    %v2268 = vmax.f32 %v2252, 0.0
    %v2269 = vmax.f32 %v2253, 0.0
    %v2270 = vmax.f32 %v2254, 0.0
    %v2271 = vmax.f32 %v2255, 0.0
    %v2272 = vld [vmem:[#allocation14] sm:$0xff]
    %v2273 = vld [vmem:[#allocation14 + $0x8] sm:$0xff]
    %v2274 = vld [vmem:[#allocation14 + $0x10] sm:$0xff]
    %v2275 = vld [vmem:[#allocation14 + $0x18] sm:$0xff]
    %v2276 = vld [vmem:[#allocation14 + $0x20] sm:$0xff]
    %v2277 = vld [vmem:[#allocation14 + $0x28] sm:$0xff]
    %v2278 = vld [vmem:[#allocation14 + $0x30] sm:$0xff]
    %v2279 = vld [vmem:[#allocation14 + $0x38] sm:$0xff]
    %v2280 = vld [vmem:[#allocation14 + $0x40] sm:$0xff]
    %v2281 = vld [vmem:[#allocation14 + $0x48] sm:$0xff]
    %v2282 = vld [vmem:[#allocation14 + $0x50] sm:$0xff]
    %v2283 = vld [vmem:[#allocation14 + $0x58] sm:$0xff]
    %v2284 = vld [vmem:[#allocation14 + $0x60] sm:$0xff]
    %v2285 = vld [vmem:[#allocation14 + $0x68] sm:$0xff]
    %v2286 = vld [vmem:[#allocation14 + $0x70] sm:$0xff]
    %v2287 = vld [vmem:[#allocation14 + $0x78] sm:$0xff]
    %v2288 = vld [vmem:[%s12] sm:$0x1]
    %v2290 = vlaneseq
    %v2291 = vshrl.u32 %v2290, 7
    %v2292 = vsub.s32 0, %v2291
    %v2293 = vrot.slane %v2288, %v2292
    %2295 = vmatprep.subr.mxu0 0.0
    %2296 = vmatpush1.msra.mxu0 %v2272
    %2297 = vmatprep.subr.mxu0 0.0
    %2298 = vmatpush1.msra.mxu0 %v2273
    %2299 = vmatprep.subr.mxu0 0.0
    %2300 = vmatpush1.msra.mxu0 %v2274
    %2301 = vmatprep.subr.mxu0 0.0
    %2302 = vmatpush1.msra.mxu0 %v2275
    %2303 = vmatprep.subr.mxu0 0.0
    %2304 = vmatpush1.msra.mxu0 %v2276
    %2305 = vmatprep.subr.mxu0 0.0
    %2306 = vmatpush1.msra.mxu0 %v2277
    %2307 = vmatprep.subr.mxu0 0.0
    %2308 = vmatpush1.msra.mxu0 %v2278
    %2309 = vmatprep.subr.mxu0 0.0
    %2310 = vmatpush1.msra.mxu0 %v2279
    %2311 = vmatprep.subr.mxu0 0.0
    %2312 = vmatpush1.msra.mxu0 %v2280
    %2313 = vmatprep.subr.mxu0 0.0
    %2314 = vmatpush1.msra.mxu0 %v2281
    %2315 = vmatprep.subr.mxu0 0.0
    %2316 = vmatpush1.msra.mxu0 %v2282
    %2317 = vmatprep.subr.mxu0 0.0
    %2318 = vmatpush1.msra.mxu0 %v2283
    %2319 = vmatprep.subr.mxu0 0.0
    %2320 = vmatpush1.msra.mxu0 %v2284
    %2321 = vmatprep.subr.mxu0 0.0
    %2322 = vmatpush1.msra.mxu0 %v2285
    %2323 = vmatprep.subr.mxu0 0.0
    %2324 = vmatpush1.msra.mxu0 %v2286
    %2325 = vmatprep.subr.mxu0 0.0
    %2326 = vmatpush1.msra.mxu0 %v2287
    %2327 = vmatprep.subr.mxu0 0.0
    %2328 = vmatpush1.msra.mxu0 0.0
    %2329 = vmatprep.subr.mxu0 0.0
    %2330 = vmatpush1.msra.mxu0 0.0
    %2331 = vmatprep.subr.mxu0 0.0
    %2332 = vmatpush1.msra.mxu0 0.0
    %2333 = vmatprep.subr.mxu0 0.0
    %2334 = vmatpush1.msra.mxu0 0.0
    %2335 = vmatprep.subr.mxu0 0.0
    %2336 = vmatpush1.msra.mxu0 0.0
    %2337 = vmatprep.subr.mxu0 0.0
    %2338 = vmatpush1.msra.mxu0 0.0
    %2339 = vmatprep.subr.mxu0 0.0
    %2340 = vmatpush1.msra.mxu0 0.0
    %2341 = vmatprep.subr.mxu0 0.0
    %2342 = vmatpush1.msra.mxu0 0.0
    %2343 = vmatprep.subr.mxu0 0.0
    %2344 = vmatpush1.msra.mxu0 0.0
    %2345 = vmatprep.subr.mxu0 0.0
    %2346 = vmatpush1.msra.mxu0 0.0
    %2347 = vmatprep.subr.mxu0 0.0
    %2348 = vmatpush1.msra.mxu0 0.0
    %2349 = vmatprep.subr.mxu0 0.0
    %2350 = vmatpush1.msra.mxu0 0.0
    %2351 = vmatprep.subr.mxu0 0.0
    %2352 = vmatpush1.msra.mxu0 0.0
    %2353 = vmatprep.subr.mxu0 0.0
    %2354 = vmatpush1.msra.mxu0 0.0
    %2355 = vmatprep.subr.mxu0 0.0
    %2356 = vmatpush1.msra.mxu0 0.0
    %2357 = vmatprep.subr.mxu0 0.0
    %2358 = vmatpush1.msra.mxu0 0.0
    %2359 = vmatprep.mubr.f32.mxu0 0.0
    %2360 = vmatmul.mubr.f32.gmra.mrb[0].mxu0 %v2256
    %v2361 = vpop.f32.mrb[0].mxu0
    %v2362 = vadd.f32 %v2293, %v2361
    %v2363 = vpop.f32.mrb[0].mxu0
    %2364 = vmatprep.mubr.f32.mxu0 0.0
    %2365 = vmatmul.mubr.f32.gmra.mrb[0].mxu0 %v2257
    %v2366 = vpop.f32.mrb[0].mxu0
    %v2367 = vadd.f32 %v2293, %v2366
    %v2368 = vpop.f32.mrb[0].mxu0
    %2369 = vmatprep.mubr.f32.mxu0 0.0
    %2370 = vmatmul.mubr.f32.gmra.mrb[0].mxu0 %v2258
    %v2371 = vpop.f32.mrb[0].mxu0
    %v2372 = vadd.f32 %v2293, %v2371
    %v2373 = vpop.f32.mrb[0].mxu0
    %2374 = vmatprep.mubr.f32.mxu0 0.0
    %2375 = vmatmul.mubr.f32.gmra.mrb[0].mxu0 %v2259
    %v2376 = vpop.f32.mrb[0].mxu0
    %v2377 = vadd.f32 %v2293, %v2376
    %v2378 = vpop.f32.mrb[0].mxu0
    %2379 = vmatprep.mubr.f32.mxu0 0.0
    %2380 = vmatmul.mubr.f32.gmra.mrb[0].mxu0 %v2260
    %v2381 = vpop.f32.mrb[0].mxu0
    %v2382 = vadd.f32 %v2293, %v2381
    %v2383 = vpop.f32.mrb[0].mxu0
    %2384 = vmatprep.mubr.f32.mxu0 0.0
    %2385 = vmatmul.mubr.f32.gmra.mrb[0].mxu0 %v2261
    %v2386 = vpop.f32.mrb[0].mxu0
    %v2387 = vadd.f32 %v2293, %v2386
    %v2388 = vpop.f32.mrb[0].mxu0
    %2389 = vmatprep.mubr.f32.mxu0 0.0
    %2390 = vmatmul.mubr.f32.gmra.mrb[0].mxu0 %v2262
    %v2391 = vpop.f32.mrb[0].mxu0
    %v2392 = vadd.f32 %v2293, %v2391
    %v2393 = vpop.f32.mrb[0].mxu0
    %2394 = vmatprep.mubr.f32.mxu0 0.0
    %2395 = vmatmul.mubr.f32.gmra.mrb[0].mxu0 %v2263
    %v2396 = vpop.f32.mrb[0].mxu0
    %v2397 = vadd.f32 %v2293, %v2396
    %v2398 = vpop.f32.mrb[0].mxu0
    %2399 = vmatprep.mubr.f32.mxu0 0.0
    %2400 = vmatmul.mubr.f32.gmra.mrb[0].mxu0 %v2264
    %v2401 = vpop.f32.mrb[0].mxu0
    %v2402 = vadd.f32 %v2293, %v2401
    %v2403 = vpop.f32.mrb[0].mxu0
    %2404 = vmatprep.mubr.f32.mxu0 0.0
    %2405 = vmatmul.mubr.f32.gmra.mrb[0].mxu0 %v2265
    %v2406 = vpop.f32.mrb[0].mxu0
    %v2407 = vadd.f32 %v2293, %v2406
    %v2408 = vpop.f32.mrb[0].mxu0
    %2409 = vmatprep.mubr.f32.mxu0 0.0
    %2410 = vmatmul.mubr.f32.gmra.mrb[0].mxu0 %v2266
    %v2411 = vpop.f32.mrb[0].mxu0
    %v2412 = vadd.f32 %v2293, %v2411
    %v2413 = vpop.f32.mrb[0].mxu0
    %2414 = vmatprep.mubr.f32.mxu0 0.0
    %2415 = vmatmul.mubr.f32.gmra.mrb[0].mxu0 %v2267
    %v2416 = vpop.f32.mrb[0].mxu0
    %v2417 = vadd.f32 %v2293, %v2416
    %v2418 = vpop.f32.mrb[0].mxu0
    %2419 = vmatprep.mubr.f32.mxu0 0.0
    %2420 = vmatmul.mubr.f32.gmra.mrb[0].mxu0 %v2268
    %v2421 = vpop.f32.mrb[0].mxu0
    %v2422 = vadd.f32 %v2293, %v2421
    %v2423 = vpop.f32.mrb[0].mxu0
    %2424 = vmatprep.mubr.f32.mxu0 0.0
    %2425 = vmatmul.mubr.f32.gmra.mrb[0].mxu0 %v2269
    %v2426 = vpop.f32.mrb[0].mxu0
    %v2427 = vadd.f32 %v2293, %v2426
    %v2428 = vpop.f32.mrb[0].mxu0
    %2429 = vmatprep.mubr.f32.mxu0 0.0
    %2430 = vmatmul.mubr.f32.gmra.mrb[0].mxu0 %v2270
    %v2431 = vpop.f32.mrb[0].mxu0
    %v2432 = vadd.f32 %v2293, %v2431
    %v2433 = vpop.f32.mrb[0].mxu0
    %2434 = vmatprep.mubr.f32.mxu0 0.0
    %2435 = vmatmul.mubr.f32.gmra.mrb[0].mxu0 %v2271
    %v2436 = vpop.f32.mrb[0].mxu0
    %v2437 = vadd.f32 %v2293, %v2436
    %v2438 = vpop.f32.mrb[0].mxu0
    %2439 = vdwg.mxu0
    %v2440 = vand.u32 2147483647, %v2362
    %v2441 = vand.u32 2147483647, %v2367
    %v2442 = vand.u32 2147483647, %v2372
    %v2443 = vand.u32 2147483647, %v2377
    %v2444 = vand.u32 2147483647, %v2382
    %v2445 = vand.u32 2147483647, %v2387
    %v2446 = vand.u32 2147483647, %v2392
    %v2447 = vand.u32 2147483647, %v2397
    %v2448 = vand.u32 2147483647, %v2402
    %v2449 = vand.u32 2147483647, %v2407
    %v2450 = vand.u32 2147483647, %v2412
    %v2451 = vand.u32 2147483647, %v2417
    %v2452 = vand.u32 2147483647, %v2422
    %v2453 = vand.u32 2147483647, %v2427
    %v2454 = vand.u32 2147483647, %v2432
    %v2455 = vand.u32 2147483647, %v2437
    %v2456 = vsub.f32 0.0, %v2440
    %v2457 = vsub.f32 0.0, %v2441
    %v2458 = vsub.f32 0.0, %v2442
    %v2459 = vsub.f32 0.0, %v2443
    %v2460 = vsub.f32 0.0, %v2444
    %v2461 = vsub.f32 0.0, %v2445
    %v2462 = vsub.f32 0.0, %v2446
    %v2463 = vsub.f32 0.0, %v2447
    %v2464 = vsub.f32 0.0, %v2448
    %v2465 = vsub.f32 0.0, %v2449
    %v2466 = vsub.f32 0.0, %v2450
    %v2467 = vsub.f32 0.0, %v2451
    %v2468 = vsub.f32 0.0, %v2452
    %v2469 = vsub.f32 0.0, %v2453
    %v2470 = vsub.f32 0.0, %v2454
    %v2471 = vsub.f32 0.0, %v2455
    %v2472 = vmul.f32 %v2456, 1.442695
    %v2473 = vpow.pop %v2472
    %v2474 = vmul.f32 %v2457, 1.442695
    %v2475 = vpow.pop %v2474
    %v2476 = vmul.f32 %v2458, 1.442695
    %v2477 = vpow.pop %v2476
    %v2478 = vmul.f32 %v2459, 1.442695
    %v2479 = vpow.pop %v2478
    %v2480 = vmul.f32 %v2460, 1.442695
    %v2481 = vpow.pop %v2480
    %v2482 = vmul.f32 %v2461, 1.442695
    %v2483 = vpow.pop %v2482
    %v2484 = vmul.f32 %v2462, 1.442695
    %v2485 = vpow.pop %v2484
    %v2486 = vmul.f32 %v2463, 1.442695
    %v2487 = vpow.pop %v2486
    %v2488 = vmul.f32 %v2464, 1.442695
    %v2489 = vpow.pop %v2488
    %v2490 = vmul.f32 %v2465, 1.442695
    %v2491 = vpow.pop %v2490
    %v2492 = vmul.f32 %v2466, 1.442695
    %v2493 = vpow.pop %v2492
    %v2494 = vmul.f32 %v2467, 1.442695
    %v2495 = vpow.pop %v2494
    %v2496 = vmul.f32 %v2468, 1.442695
    %v2497 = vpow.pop %v2496
    %v2498 = vmul.f32 %v2469, 1.442695
    %v2499 = vpow.pop %v2498
    %v2500 = vmul.f32 %v2470, 1.442695
    %v2501 = vpow.pop %v2500
    %v2502 = vmul.f32 %v2471, 1.442695
    %v2503 = vpow.pop %v2502
    %vm2504 = vcmp.ge.f32.partialorder %v2362, 0.0
    %vm2505 = vcmp.ge.f32.partialorder %v2367, 0.0
    %vm2506 = vcmp.ge.f32.partialorder %v2372, 0.0
    %vm2507 = vcmp.ge.f32.partialorder %v2377, 0.0
    %vm2508 = vcmp.ge.f32.partialorder %v2382, 0.0
    %vm2509 = vcmp.ge.f32.partialorder %v2387, 0.0
    %vm2510 = vcmp.ge.f32.partialorder %v2392, 0.0
    %vm2511 = vcmp.ge.f32.partialorder %v2397, 0.0
    %vm2512 = vcmp.ge.f32.partialorder %v2402, 0.0
    %vm2513 = vcmp.ge.f32.partialorder %v2407, 0.0
    %vm2514 = vcmp.ge.f32.partialorder %v2412, 0.0
    %vm2515 = vcmp.ge.f32.partialorder %v2417, 0.0
    %vm2516 = vcmp.ge.f32.partialorder %v2422, 0.0
    %vm2517 = vcmp.ge.f32.partialorder %v2427, 0.0
    %vm2518 = vcmp.ge.f32.partialorder %v2432, 0.0
    %vm2519 = vcmp.ge.f32.partialorder %v2437, 0.0
    %v2520 = vadd.f32 %v2473, 1.0
    %v2521 = vadd.f32 %v2475, 1.0
    %v2522 = vadd.f32 %v2477, 1.0
    %v2523 = vadd.f32 %v2479, 1.0
    %v2524 = vadd.f32 %v2481, 1.0
    %v2525 = vadd.f32 %v2483, 1.0
    %v2526 = vadd.f32 %v2485, 1.0
    %v2527 = vadd.f32 %v2487, 1.0
    %v2528 = vadd.f32 %v2489, 1.0
    %v2529 = vadd.f32 %v2491, 1.0
    %v2530 = vadd.f32 %v2493, 1.0
    %v2531 = vadd.f32 %v2495, 1.0
    %v2532 = vadd.f32 %v2497, 1.0
    %v2533 = vadd.f32 %v2499, 1.0
    %v2534 = vadd.f32 %v2501, 1.0
    %v2535 = vadd.f32 %v2503, 1.0
    %v2536 = vrcp.pop %v2520
    %v2537 = vmul.f32 1.0, %v2536
    %v2538 = vrcp.pop %v2521
    %v2539 = vmul.f32 1.0, %v2538
    %v2540 = vrcp.pop %v2522
    %v2541 = vmul.f32 1.0, %v2540
    %v2542 = vrcp.pop %v2523
    %v2543 = vmul.f32 1.0, %v2542
    %v2544 = vrcp.pop %v2524
    %v2545 = vmul.f32 1.0, %v2544
    %v2546 = vrcp.pop %v2525
    %v2547 = vmul.f32 1.0, %v2546
    %v2548 = vrcp.pop %v2526
    %v2549 = vmul.f32 1.0, %v2548
    %v2550 = vrcp.pop %v2527
    %v2551 = vmul.f32 1.0, %v2550
    %v2552 = vrcp.pop %v2528
    %v2553 = vmul.f32 1.0, %v2552
    %v2554 = vrcp.pop %v2529
    %v2555 = vmul.f32 1.0, %v2554
    %v2556 = vrcp.pop %v2530
    %v2557 = vmul.f32 1.0, %v2556
    %v2558 = vrcp.pop %v2531
    %v2559 = vmul.f32 1.0, %v2558
    %v2560 = vrcp.pop %v2532
    %v2561 = vmul.f32 1.0, %v2560
    %v2562 = vrcp.pop %v2533
    %v2563 = vmul.f32 1.0, %v2562
    %v2564 = vrcp.pop %v2534
    %v2565 = vmul.f32 1.0, %v2564
    %v2566 = vrcp.pop %v2535
    %v2567 = vmul.f32 1.0, %v2566
    %v2568 = vmul.f32 %v2473, %v2536
    %v2569 = vmul.f32 %v2475, %v2538
    %v2570 = vmul.f32 %v2477, %v2540
    %v2571 = vmul.f32 %v2479, %v2542
    %v2572 = vmul.f32 %v2481, %v2544
    %v2573 = vmul.f32 %v2483, %v2546
    %v2574 = vmul.f32 %v2485, %v2548
    %v2575 = vmul.f32 %v2487, %v2550
    %v2576 = vmul.f32 %v2489, %v2552
    %v2577 = vmul.f32 %v2491, %v2554
    %v2578 = vmul.f32 %v2493, %v2556
    %v2579 = vmul.f32 %v2495, %v2558
    %v2580 = vmul.f32 %v2497, %v2560
    %v2581 = vmul.f32 %v2499, %v2562
    %v2582 = vmul.f32 %v2501, %v2564
    %v2583 = vmul.f32 %v2503, %v2566
    %v2584 = vsel %vm2504, %v2537, %v2568
    %v2585 = vsel %vm2505, %v2539, %v2569
    %v2586 = vsel %vm2506, %v2541, %v2570
    %v2587 = vsel %vm2507, %v2543, %v2571
    %v2588 = vsel %vm2508, %v2545, %v2572
    %v2589 = vsel %vm2509, %v2547, %v2573
    %v2590 = vsel %vm2510, %v2549, %v2574
    %v2591 = vsel %vm2511, %v2551, %v2575
    %v2592 = vsel %vm2512, %v2553, %v2576
    %v2593 = vsel %vm2513, %v2555, %v2577
    %v2594 = vsel %vm2514, %v2557, %v2578
    %v2595 = vsel %vm2515, %v2559, %v2579
    %v2596 = vsel %vm2516, %v2561, %v2580
    %v2597 = vsel %vm2517, %v2563, %v2581
    %v2598 = vsel %vm2518, %v2565, %v2582
    %v2599 = vsel %vm2519, %v2567, %v2583
    %2600 = vst [vmem:[#allocation16] sm:$0xff] %v2584
    %2601 = vst [vmem:[#allocation16 + $0x8] sm:$0xff] %v2585
    %2602 = vst [vmem:[#allocation16 + $0x10] sm:$0xff] %v2586
    %2603 = vst [vmem:[#allocation16 + $0x18] sm:$0xff] %v2587
    %2604 = vst [vmem:[#allocation16 + $0x20] sm:$0xff] %v2588
    %2605 = vst [vmem:[#allocation16 + $0x28] sm:$0xff] %v2589
    %2606 = vst [vmem:[#allocation16 + $0x30] sm:$0xff] %v2590
    %2607 = vst [vmem:[#allocation16 + $0x38] sm:$0xff] %v2591
    %2608 = vst [vmem:[#allocation16 + $0x40] sm:$0xff] %v2592
    %2609 = vst [vmem:[#allocation16 + $0x48] sm:$0xff] %v2593
    %2610 = vst [vmem:[#allocation16 + $0x50] sm:$0xff] %v2594
    %2611 = vst [vmem:[#allocation16 + $0x58] sm:$0xff] %v2595
    %2612 = vst [vmem:[#allocation16 + $0x60] sm:$0xff] %v2596
    %2613 = vst [vmem:[#allocation16 + $0x68] sm:$0xff] %v2597
    %2614 = vst [vmem:[#allocation16 + $0x70] sm:$0xff] %v2598
    %2615 = vst [vmem:[#allocation16 + $0x78] sm:$0xff] %v2599
    // Predicated region
    $region86: #{tpu_custom_call.1} parent=1 // pred_check
      _
    $region87: #{tpu_custom_call.1} parent=1 // pred_check_branch
      %2617 = sbr.rel (0) target = $region89
    $region88: #{tpu_custom_call.1} parent=1 // pred_region
      %s2619 = ssub.s32 2048, 2048
      %2620 = vsyncadd [#allocation4], %s2619
      %s2621 = sshll.u32 [#allocation16], 4
      %s2622 = int_to_ptr.vmem [resolvable:$true] %s2621
      %2627 = dma.vmem_to_hbm [thread:$0]  %s2622, 2048, %s13, [#allocation4], 128, 128, 8
    $region89: #{tpu_custom_call.1} parent=1 // pred_fallthru
      _
    // Predicated region
    $region90: #{tpu_custom_call.1} parent=1 // pred_check
      _
    $region91: #{tpu_custom_call.1} parent=1 // pred_check_branch
      %2629 = sbr.rel (0) target = $region93
    $region92: #{tpu_custom_call.1} parent=1 // pred_region
      %2630 = dma.done [#allocation4], 2048
    $region93: #{tpu_custom_call.1} parent=1 // pred_fallthru
      _
    %2631 = vsyncpa [#allocation3], 1
    %2632 = vsyncpa [#allocation6], 1
    %2633 = vsyncpa [#allocation9], 1
    %2634 = vsyncpa [#allocation12], 1
    %2635 = vsyncpa [#allocation15], 1
    %2636 = vsyncpa [#allocation4], 1

</llo_original>
